<compile_context>
chip_gen: v7x
topology: tpu7x:2x2x1
jax: 0.10.0
libtpu: 0.0.40
codegen_flags: <defaults>
</compile_context>

<pallas_src>
import functools

import jax
import jax.numpy as jnp
import numpy as np
from jax import lax
from jax.experimental import pallas as pl
from jax.experimental.pallas import tpu as pltpu


def _round_up(x, m):
    return ((x + m - 1) // m) * m


# --------------------------------------------------------------------------
# Pallas kernel 1: fused conv head (im2col matmul -> bias -> ReLU -> 1x1 conv)
# Per (image, row-tile) grid step; output written as (1, n_cls, tm) so the big
# spatial axis sits on lanes (lane-dense stores).
# --------------------------------------------------------------------------
def _head_kernel(p_ref, w1_ref, b1_ref, w2t_ref, b2t_ref, o_ref):
    # p: (1, tm, K) bf16 ; w1: (K, hidden) bf16 ; b1: (1, hidden) f32
    # w2t: (n_cls, hidden) bf16 ; b2t: (n_cls, 1) f32 ; o: (1, n_cls, tm) f32
    p = p_ref[0]                                                     # (tm, K)
    h = jnp.dot(p, w1_ref[...], preferred_element_type=jnp.float32)  # (tm, hidden)
    h = jnp.maximum(h + b1_ref[...], 0.0).astype(jnp.bfloat16)
    # (n_cls, hidden) x (tm, hidden), contracted on hidden -> (n_cls, tm)
    o_t = lax.dot_general(
        w2t_ref[...], h,
        dimension_numbers=(((1,), (1,)), ((), ())),
        preferred_element_type=jnp.float32)
    o_ref[0] = (o_t + b2t_ref[...]).astype(o_ref.dtype)


def conv_head_pallas(patches, w1, b1, w2t, b2t, *, tm_cap=512):
    """patches: (N, P, K) f32; w1: (K, hidden); b1: (1, hidden);
    w2t: (n_cls, hidden); b2t: (n_cls, 1)  ->  logits (N, n_cls, P) f32."""
    N, P, K = patches.shape
    hidden = w1.shape[1]
    n_cls = w2t.shape[0]

    P_pad = _round_up(P, 8)
    tm = min(tm_cap, P_pad)           # either == P_pad (single tile) or 512 (mult of 128)
    P_pad = _round_up(P_pad, tm)
    if P_pad != P:
        patches = jnp.pad(patches, ((0, 0), (0, P_pad - P), (0, 0)))
    n_tiles = P_pad // tm

    flops = 2 * N * P_pad * hidden * (K + n_cls)
    bytes_accessed = (N * P_pad * K * 2 + N * n_cls * P_pad * 4
                      + K * hidden * 2 + hidden * 4
                      + hidden * n_cls * 2 + n_cls * 4)
    tile_bytes = tm * K * 2 + n_cls * tm * 4 + tm * hidden * 4
    # headroom for double-buffered tiles + resident weights; safe on v5e/v6e/v7x
    vmem_limit = int(min(max(8 * tile_bytes, 8 * 1024 * 1024), 48 * 1024 * 1024))

    out = pl.pallas_call(
        _head_kernel,
        out_shape=jax.ShapeDtypeStruct((N, n_cls, P_pad), jnp.float32),
        grid=(N, n_tiles),
        in_specs=[
            pl.BlockSpec((1, tm, K), lambda n, i: (n, i, 0)),
            pl.BlockSpec((K, hidden), lambda n, i: (0, 0)),
            pl.BlockSpec((1, hidden), lambda n, i: (0, 0)),
            pl.BlockSpec((n_cls, hidden), lambda n, i: (0, 0)),
            pl.BlockSpec((n_cls, 1), lambda n, i: (0, 0)),
        ],
        out_specs=pl.BlockSpec((1, n_cls, tm), lambda n, i: (n, 0, i)),
        compiler_params=pltpu.CompilerParams(
            dimension_semantics=("parallel", "parallel"),
            vmem_limit_bytes=vmem_limit),
        cost_estimate=pl.CostEstimate(flops=flops, transcendentals=0,
                                      bytes_accessed=bytes_accessed),
    )(patches.astype(jnp.bfloat16), w1.astype(jnp.bfloat16), b1,
      w2t.astype(jnp.bfloat16), b2t)
    if P_pad != P:
        out = out[:, :, :P]
    return out


# --------------------------------------------------------------------------
# Pallas kernel 2: bilinear upsample (align_corners=True) as A_h @ x @ A_w^T
# One image (all n_cls slices) per grid step; two dot_generals, no per-class loop.
# --------------------------------------------------------------------------
def _upsample_kernel(x_ref, ah_ref, awt_ref, o_ref):
    # x: (1, C, h, w) f32 ; ah: (H, h) f32 ; awt: (w, W) f32 ; o: (1, C, H, W) f32
    x = x_ref[0]                                                     # (C, h, w)
    ah = ah_ref[...]
    awt = awt_ref[...]
    # width pass: (C, h, w) x (w, W) -> (C, h, W)
    t = lax.dot_general(x, awt,
                        dimension_numbers=(((2,), (0,)), ((), ())),
                        preferred_element_type=jnp.float32)
    # height pass, batched over classes: (C, H, h) x (C, h, W) -> (C, H, W)
    ah_b = jnp.broadcast_to(ah, (x.shape[0], ah.shape[0], ah.shape[1]))
    o = lax.dot_general(ah_b, t,
                        dimension_numbers=(((2,), (1,)), ((0,), (0,))),
                        preferred_element_type=jnp.float32)
    o_ref[0] = o.astype(o_ref.dtype)


def bilinear_upsample_pallas(x, a_h, a_w_t):
    """x: (N, C, h, w) f32; a_h: (H, h); a_w_t: (w, W) -> (N, C, H, W) f32."""
    N, C, h, w = x.shape
    H = a_h.shape[0]
    W = a_w_t.shape[1]

    flops = 2 * N * C * (h * w * W + H * h * W)
    bytes_accessed = N * C * (h * w + H * W) * 4 + (H * h + w * W) * 4

    return pl.pallas_call(
        _upsample_kernel,
        out_shape=jax.ShapeDtypeStruct((N, C, H, W), jnp.float32),
        grid=(N,),
        in_specs=[
            pl.BlockSpec((1, C, h, w), lambda n: (n, 0, 0, 0)),
            pl.BlockSpec((H, h), lambda n: (0, 0)),
            pl.BlockSpec((w, W), lambda n: (0, 0)),
        ],
        out_specs=pl.BlockSpec((1, C, H, W), lambda n: (n, 0, 0, 0)),
        compiler_params=pltpu.CompilerParams(
            dimension_semantics=("parallel",),
            vmem_limit_bytes=16 * 1024 * 1024),
        cost_estimate=pl.CostEstimate(flops=flops, transcendentals=0,
                                      bytes_accessed=bytes_accessed),
    )(x, a_h, a_w_t)


# --------------------------------------------------------------------------
# Plain-JAX glue: im2col, bilinear interpolation matrices, parameter init
# --------------------------------------------------------------------------
def im2col(x, ksize=3, stride=1, pad=1):
    """x: (N, C, H, W) -> patches (N, Ho*Wo, C*ksize*ksize), row order (c, kh, kw)."""
    N, C, H, W = x.shape
    xp = jnp.pad(x, ((0, 0), (0, 0), (pad, pad), (pad, pad)))
    Ho = (H + 2 * pad - ksize) // stride + 1
    Wo = (W + 2 * pad - ksize) // stride + 1
    cols = []
    for kh in range(ksize):
        for kw in range(ksize):
            cols.append(
                xp[:, :, kh:kh + stride * Ho:stride, kw:kw + stride * Wo:stride])
    cols = jnp.stack(cols, axis=0)                       # (k*k, N, C, Ho, Wo)
    cols = cols.reshape(ksize, ksize, N, C, Ho, Wo)
    cols = cols.transpose(2, 4, 5, 3, 0, 1)              # (N, Ho, Wo, C, kh, kw)
    cols = cols.reshape(N, Ho * Wo, C * ksize * ksize)
    return cols, Ho, Wo


def bilinear_matrix(out_size, in_size):
    """Interpolation matrix A (out_size, in_size), align_corners=True semantics."""
    A = np.zeros((out_size, in_size), dtype=np.float32)
    for i in range(out_size):
        if out_size == 1 or in_size == 1:
            coord = 0.0
        else:
            coord = i * (in_size - 1) / (out_size - 1)
        i0 = int(np.floor(coord))
        i1 = min(i0 + 1, in_size - 1)
        frac = coord - i0
        A[i, i0] += 1.0 - frac
        A[i, i1] += frac
    return jnp.asarray(A)


def init_submodel(key, c_in, hidden, n_cls, ksize=3):
    k1, k2, k3, k4 = jax.random.split(key, 4)
    w1 = jax.random.normal(k1, (c_in * ksize * ksize, hidden), jnp.float32) * 0.1
    b1 = jax.random.normal(k2, (1, hidden), jnp.float32) * 0.1
    w2 = jax.random.normal(k3, (hidden, n_cls), jnp.float32) * 0.1
    b2 = jax.random.normal(k4, (1, n_cls), jnp.float32) * 0.1
    return dict(w1=w1, b1=b1, w2=w2, b2=b2)


def run_submodel(x, params, stride):
    """x: (N, C, H, W) -> logits (N, n_cls, Ho, Wo) via the Pallas head kernel."""
    N = x.shape[0]
    n_cls = params["w2"].shape[1]
    patches, Ho, Wo = im2col(x, ksize=3, stride=stride, pad=1)
    logits = conv_head_pallas(patches, params["w1"], params["b1"],
                              params["w2"].T,
                              params["b2"].reshape(n_cls, 1))   # (N, n_cls, Ho*Wo)
    # contiguous split of the last dim -> no copy / no transpose needed
    return logits.reshape(N, n_cls, Ho, Wo)


def upsample_to(x_nchw, H, W):
    """Bilinear (align_corners=True) upsample NCHW -> N,C,H,W via Pallas kernel."""
    N, C, h, w = x_nchw.shape
    if (h, w) == (H, W):
        # F.interpolate with align_corners=True at the same size is exactly identity.
        return x_nchw
    a_h = bilinear_matrix(H, h)          # (H, h)
    a_w = bilinear_matrix(W, w)          # (W, w)
    return bilinear_upsample_pallas(x_nchw, a_h, a_w.T)


def ensemble_forward(x, params_small, params_medium, params_big):
    H, W = x.shape[-2], x.shape[-1]
    out_small = run_submodel(x, params_small, stride=4)
    out_medium = run_submodel(x, params_medium, stride=2)
    out_big = run_submodel(x, params_big, stride=1)
    return (upsample_to(out_small, H, W),
            upsample_to(out_medium, H, W),
            upsample_to(out_big, H, W))


# --------------------------------------------------------------------------
# Pure-JAX reference (same math in f32, no Pallas) for a sanity check
# --------------------------------------------------------------------------
def ref_submodel(x, params, stride):
    N = x.shape[0]
    n_cls = params["w2"].shape[1]
    patches, Ho, Wo = im2col(x, ksize=3, stride=stride, pad=1)   # (N, P, K)
    h = jnp.maximum(patches @ params["w1"] + params["b1"], 0.0)
    out = h @ params["w2"] + params["b2"]                        # (N, P, n_cls)
    return out.reshape(N, Ho, Wo, n_cls).transpose(0, 3, 1, 2)


def ref_upsample(x_nchw, H, W):
    a_h = bilinear_matrix(H, x_nchw.shape[2])
    a_w = bilinear_matrix(W, x_nchw.shape[3])
    return jnp.einsum("Hh,nchw,Ww->ncHW", a_h, x_nchw, a_w)


if __name__ == "__main__":
    key = jax.random.PRNGKey(0)
    kx, ks, km, kb = jax.random.split(key, 4)

    N, C_in, H, W = 2, 4, 16, 16
    n_cls = 8
    x = jax.random.normal(kx, (N, C_in, H, W), jnp.float32)

    params_small = init_submodel(ks, C_in, hidden=8, n_cls=n_cls)
    params_medium = init_submodel(km, C_in, hidden=16, n_cls=n_cls)
    params_big = init_submodel(kb, C_in, hidden=32, n_cls=n_cls)

    outs = jax.jit(functools.partial(
        ensemble_forward,
        params_small=params_small,
        params_medium=params_medium,
        params_big=params_big))(x)
    outs = jax.block_until_ready(outs)

    # sanity check against pure-f32 reference (Pallas path uses bf16 MXU operands,
    # so tolerance is relaxed accordingly)
    refs = []
    for p, s in ((params_small, 4), (params_medium, 2), (params_big, 1)):
        refs.append(ref_upsample(ref_submodel(x, p, s), H, W))
    for o, r in zip(outs, refs):
        assert o.shape == (N, n_cls, H, W)
        np.testing.assert_allclose(np.asarray(o), np.asarray(r),
                                   rtol=5e-2, atol=5e-2)

    print("KERNEL_OK")
</pallas_src>

<mosaic_0001>
module attributes {stable_mosaic.version = 11 : i64} {
  func.func @_head_kernel(%arg0: i32, %arg1: i32, %arg2: memref<1x256x36xbf16, #tpu.memory_space<vmem>>, %arg3: memref<36x32xbf16, #tpu.memory_space<vmem>>, %arg4: memref<1x32xf32, #tpu.memory_space<vmem>>, %arg5: memref<8x32xbf16, #tpu.memory_space<vmem>>, %arg6: memref<8x1xf32, #tpu.memory_space<vmem>>, %arg7: memref<1x8x256xf32, #tpu.memory_space<vmem>>) attributes {dimension_semantics = [#tpu.dimension_semantics<parallel>, #tpu.dimension_semantics<parallel>], iteration_bounds = array<i64: 2, 1>, scalar_prefetch = 0 : i64, scratch_operands = 0 : i64, tpu.core_type = #tpu.core_type<tc>, window_params = [{transform_indices = @transform_0, window_bounds = array<i64: 1, 256, 36>}, {pipeline_mode = #tpu.pipeline_mode<synchronous>, transform_indices = @transform_1, window_bounds = array<i64: 36, 32>}, {pipeline_mode = #tpu.pipeline_mode<synchronous>, transform_indices = @transform_2, window_bounds = array<i64: 1, 32>}, {pipeline_mode = #tpu.pipeline_mode<synchronous>, transform_indices = @transform_3, window_bounds = array<i64: 8, 32>}, {pipeline_mode = #tpu.pipeline_mode<synchronous>, transform_indices = @transform_4, window_bounds = array<i64: 8, 1>}, {transform_indices = @transform_5, window_bounds = array<i64: 1, 8, 256>}]} {
    %c0 = arith.constant 0 : index
    %c0_0 = arith.constant 0 : index
    %c0_1 = arith.constant 0 : index
    %0 = vector.load %arg2[%c0, %c0_0, %c0_1] : memref<1x256x36xbf16, #tpu.memory_space<vmem>>, vector<1x256x36xbf16>
    %1 = vector.shape_cast %0 : vector<1x256x36xbf16> to vector<256x36xbf16>
    %c0_2 = arith.constant 0 : index
    %c0_3 = arith.constant 0 : index
    %2 = vector.load %arg3[%c0_2, %c0_3] : memref<36x32xbf16, #tpu.memory_space<vmem>>, vector<36x32xbf16>
    %cst = arith.constant dense<0.000000e+00> : vector<256x32xf32>
    %3 = tpu.matmul %1, %2, %cst {dimension_numbers = #tpu.dot_dimension_numbers<[1], [0], [0], [1], [0, 0, 1, 1], [], []>} : vector<256x36xbf16>, vector<36x32xbf16>, vector<256x32xf32> -> vector<256x32xf32>
    %c0_4 = arith.constant 0 : index
    %c0_5 = arith.constant 0 : index
    %4 = vector.load %arg4[%c0_4, %c0_5] : memref<1x32xf32, #tpu.memory_space<vmem>>, vector<1x32xf32>
    %5 = vector.broadcast %4 : vector<1x32xf32> to vector<256x32xf32>
    %6 = arith.addf %3, %5 : vector<256x32xf32>
    %cst_6 = arith.constant 0.000000e+00 : f32
    %7 = vector.broadcast %cst_6 : f32 to vector<256x32xf32>
    %8 = arith.maximumf %6, %7 : vector<256x32xf32>
    %9 = arith.truncf %8 : vector<256x32xf32> to vector<256x32xbf16>
    %c0_7 = arith.constant 0 : index
    %c0_8 = arith.constant 0 : index
    %10 = vector.load %arg5[%c0_7, %c0_8] : memref<8x32xbf16, #tpu.memory_space<vmem>>, vector<8x32xbf16>
    %cst_9 = arith.constant dense<0.000000e+00> : vector<8x256xf32>
    %11 = tpu.matmul %10, %9, %cst_9 {dimension_numbers = #tpu.dot_dimension_numbers<[1], [1], [0], [0], [0, 0, 1, 0], [], []>} : vector<8x32xbf16>, vector<256x32xbf16>, vector<8x256xf32> -> vector<8x256xf32>
    %c0_10 = arith.constant 0 : index
    %c0_11 = arith.constant 0 : index
    %12 = vector.load %arg6[%c0_10, %c0_11] : memref<8x1xf32, #tpu.memory_space<vmem>>, vector<8x1xf32>
    %13 = vector.broadcast %12 : vector<8x1xf32> to vector<8x256xf32>
    %14 = arith.addf %11, %13 : vector<8x256xf32>
    %c0_12 = arith.constant 0 : index
    %c0_13 = arith.constant 0 : index
    %c0_14 = arith.constant 0 : index
    %15 = vector.load %arg7[%c0_12, %c0_13, %c0_14] : memref<1x8x256xf32, #tpu.memory_space<vmem>>, vector<1x8x256xf32>
    %16 = vector.shape_cast %15 : vector<1x8x256xf32> to vector<8x256xf32>
    %17 = vector.shape_cast %14 : vector<8x256xf32> to vector<1x8x256xf32>
    tpu.vector_store %arg7[%c0_12, %c0_13, %c0_14], %17 {strides = array<i32>} : memref<1x8x256xf32, #tpu.memory_space<vmem>>, vector<1x8x256xf32>,
    return
  }
  func.func @transform_0(%arg0: i32, %arg1: i32) -> (i32, i32, i32) {
    %c0_i32 = arith.constant 0 : i32
    %c0_i32_0 = arith.constant 0 : i32
    return %arg0, %arg1, %c0_i32 : i32, i32, i32
  }
  func.func @transform_1(%arg0: i32, %arg1: i32) -> (i32, i32) {
    %c0_i32 = arith.constant 0 : i32
    %c0_i32_0 = arith.constant 0 : i32
    %c0_i32_1 = arith.constant 0 : i32
    return %c0_i32, %c0_i32_0 : i32, i32
  }
  func.func @transform_2(%arg0: i32, %arg1: i32) -> (i32, i32) {
    %c0_i32 = arith.constant 0 : i32
    %c0_i32_0 = arith.constant 0 : i32
    %c0_i32_1 = arith.constant 0 : i32
    return %c0_i32, %c0_i32_0 : i32, i32
  }
  func.func @transform_3(%arg0: i32, %arg1: i32) -> (i32, i32) {
    %c0_i32 = arith.constant 0 : i32
    %c0_i32_0 = arith.constant 0 : i32
    %c0_i32_1 = arith.constant 0 : i32
    return %c0_i32, %c0_i32_0 : i32, i32
  }
  func.func @transform_4(%arg0: i32, %arg1: i32) -> (i32, i32) {
    %c0_i32 = arith.constant 0 : i32
    %c0_i32_0 = arith.constant 0 : i32
    %c0_i32_1 = arith.constant 0 : i32
    return %c0_i32, %c0_i32_0 : i32, i32
  }
  func.func @transform_5(%arg0: i32, %arg1: i32) -> (i32, i32, i32) {
    %c0_i32 = arith.constant 0 : i32
    %c0_i32_0 = arith.constant 0 : i32
    return %arg0, %c0_i32, %arg1 : i32, i32, i32
  }
}

module attributes {stable_mosaic.version = 11 : i64} {
  func.func @_head_kernel(%arg0: i32, %arg1: i32, %arg2: memref<1x64x36xbf16, #tpu.memory_space<vmem>>, %arg3: memref<36x16xbf16, #tpu.memory_space<vmem>>, %arg4: memref<1x16xf32, #tpu.memory_space<vmem>>, %arg5: memref<8x16xbf16, #tpu.memory_space<vmem>>, %arg6: memref<8x1xf32, #tpu.memory_space<vmem>>, %arg7: memref<1x8x64xf32, #tpu.memory_space<vmem>>) attributes {dimension_semantics = [#tpu.dimension_semantics<parallel>, #tpu.dimension_semantics<parallel>], iteration_bounds = array<i64: 2, 1>, scalar_prefetch = 0 : i64, scratch_operands = 0 : i64, tpu.core_type = #tpu.core_type<tc>, window_params = [{transform_indices = @transform_0, window_bounds = array<i64: 1, 64, 36>}, {pipeline_mode = #tpu.pipeline_mode<synchronous>, transform_indices = @transform_1, window_bounds = array<i64: 36, 16>}, {pipeline_mode = #tpu.pipeline_mode<synchronous>, transform_indices = @transform_2, window_bounds = array<i64: 1, 16>}, {pipeline_mode = #tpu.pipeline_mode<synchronous>, transform_indices = @transform_3, window_bounds = array<i64: 8, 16>}, {pipeline_mode = #tpu.pipeline_mode<synchronous>, transform_indices = @transform_4, window_bounds = array<i64: 8, 1>}, {transform_indices = @transform_5, window_bounds = array<i64: 1, 8, 64>}]} {
    %c0 = arith.constant 0 : index
    %c0_0 = arith.constant 0 : index
    %c0_1 = arith.constant 0 : index
    %0 = vector.load %arg2[%c0, %c0_0, %c0_1] : memref<1x64x36xbf16, #tpu.memory_space<vmem>>, vector<1x64x36xbf16>
    %1 = vector.shape_cast %0 : vector<1x64x36xbf16> to vector<64x36xbf16>
    %c0_2 = arith.constant 0 : index
    %c0_3 = arith.constant 0 : index
    %2 = vector.load %arg3[%c0_2, %c0_3] : memref<36x16xbf16, #tpu.memory_space<vmem>>, vector<36x16xbf16>
    %cst = arith.constant dense<0.000000e+00> : vector<64x16xf32>
    %3 = tpu.matmul %1, %2, %cst {dimension_numbers = #tpu.dot_dimension_numbers<[1], [0], [0], [1], [0, 0, 1, 1], [], []>} : vector<64x36xbf16>, vector<36x16xbf16>, vector<64x16xf32> -> vector<64x16xf32>
    %c0_4 = arith.constant 0 : index
    %c0_5 = arith.constant 0 : index
    %4 = vector.load %arg4[%c0_4, %c0_5] : memref<1x16xf32, #tpu.memory_space<vmem>>, vector<1x16xf32>
    %5 = vector.broadcast %4 : vector<1x16xf32> to vector<64x16xf32>
    %6 = arith.addf %3, %5 : vector<64x16xf32>
    %cst_6 = arith.constant 0.000000e+00 : f32
    %7 = vector.broadcast %cst_6 : f32 to vector<64x16xf32>
    %8 = arith.maximumf %6, %7 : vector<64x16xf32>
    %9 = arith.truncf %8 : vector<64x16xf32> to vector<64x16xbf16>
    %c0_7 = arith.constant 0 : index
    %c0_8 = arith.constant 0 : index
    %10 = vector.load %arg5[%c0_7, %c0_8] : memref<8x16xbf16, #tpu.memory_space<vmem>>, vector<8x16xbf16>
    %cst_9 = arith.constant dense<0.000000e+00> : vector<8x64xf32>
    %11 = tpu.matmul %10, %9, %cst_9 {dimension_numbers = #tpu.dot_dimension_numbers<[1], [1], [0], [0], [0, 0, 1, 0], [], []>} : vector<8x16xbf16>, vector<64x16xbf16>, vector<8x64xf32> -> vector<8x64xf32>
    %c0_10 = arith.constant 0 : index
    %c0_11 = arith.constant 0 : index
    %12 = vector.load %arg6[%c0_10, %c0_11] : memref<8x1xf32, #tpu.memory_space<vmem>>, vector<8x1xf32>
    %13 = vector.broadcast %12 : vector<8x1xf32> to vector<8x64xf32>
    %14 = arith.addf %11, %13 : vector<8x64xf32>
    %c0_12 = arith.constant 0 : index
    %c0_13 = arith.constant 0 : index
    %c0_14 = arith.constant 0 : index
    %15 = vector.load %arg7[%c0_12, %c0_13, %c0_14] : memref<1x8x64xf32, #tpu.memory_space<vmem>>, vector<1x8x64xf32>
    %16 = vector.shape_cast %15 : vector<1x8x64xf32> to vector<8x64xf32>
    %17 = vector.shape_cast %14 : vector<8x64xf32> to vector<1x8x64xf32>
    tpu.vector_store %arg7[%c0_12, %c0_13, %c0_14], %17 {strides = array<i32>} : memref<1x8x64xf32, #tpu.memory_space<vmem>>, vector<1x8x64xf32>,
    return
  }
  func.func @transform_0(%arg0: i32, %arg1: i32) -> (i32, i32, i32) {
    %c0_i32 = arith.constant 0 : i32
    %c0_i32_0 = arith.constant 0 : i32
    return %arg0, %arg1, %c0_i32 : i32, i32, i32
  }
  func.func @transform_1(%arg0: i32, %arg1: i32) -> (i32, i32) {
    %c0_i32 = arith.constant 0 : i32
    %c0_i32_0 = arith.constant 0 : i32
    %c0_i32_1 = arith.constant 0 : i32
    return %c0_i32, %c0_i32_0 : i32, i32
  }
  func.func @transform_2(%arg0: i32, %arg1: i32) -> (i32, i32) {
    %c0_i32 = arith.constant 0 : i32
    %c0_i32_0 = arith.constant 0 : i32
    %c0_i32_1 = arith.constant 0 : i32
    return %c0_i32, %c0_i32_0 : i32, i32
  }
  func.func @transform_3(%arg0: i32, %arg1: i32) -> (i32, i32) {
    %c0_i32 = arith.constant 0 : i32
    %c0_i32_0 = arith.constant 0 : i32
    %c0_i32_1 = arith.constant 0 : i32
    return %c0_i32, %c0_i32_0 : i32, i32
  }
  func.func @transform_4(%arg0: i32, %arg1: i32) -> (i32, i32) {
    %c0_i32 = arith.constant 0 : i32
    %c0_i32_0 = arith.constant 0 : i32
    %c0_i32_1 = arith.constant 0 : i32
    return %c0_i32, %c0_i32_0 : i32, i32
  }
  func.func @transform_5(%arg0: i32, %arg1: i32) -> (i32, i32, i32) {
    %c0_i32 = arith.constant 0 : i32
    %c0_i32_0 = arith.constant 0 : i32
    return %arg0, %c0_i32, %arg1 : i32, i32, i32
  }
}

module attributes {stable_mosaic.version = 11 : i64} {
  func.func @_upsample_kernel(%arg0: i32, %arg1: memref<1x8x8x8xf32, #tpu.memory_space<vmem>>, %arg2: memref<16x8xf32, #tpu.memory_space<vmem>>, %arg3: memref<8x16xf32, #tpu.memory_space<vmem>>, %arg4: memref<1x8x16x16xf32, #tpu.memory_space<vmem>>) attributes {dimension_semantics = [#tpu.dimension_semantics<parallel>], iteration_bounds = array<i64: 2>, scalar_prefetch = 0 : i64, scratch_operands = 0 : i64, tpu.core_type = #tpu.core_type<tc>, window_params = [{transform_indices = @transform_0, window_bounds = array<i64: 1, 8, 8, 8>}, {pipeline_mode = #tpu.pipeline_mode<synchronous>, transform_indices = @transform_1, window_bounds = array<i64: 16, 8>}, {pipeline_mode = #tpu.pipeline_mode<synchronous>, transform_indices = @transform_2, window_bounds = array<i64: 8, 16>}, {transform_indices = @transform_3, window_bounds = array<i64: 1, 8, 16, 16>}]} {
    %c0 = arith.constant 0 : index
    %c0_0 = arith.constant 0 : index
    %c0_1 = arith.constant 0 : index
    %c0_2 = arith.constant 0 : index
    %0 = vector.load %arg1[%c0, %c0_0, %c0_1, %c0_2] : memref<1x8x8x8xf32, #tpu.memory_space<vmem>>, vector<1x8x8x8xf32>
    %1 = vector.shape_cast %0 : vector<1x8x8x8xf32> to vector<8x8x8xf32>
    %c0_3 = arith.constant 0 : index
    %c0_4 = arith.constant 0 : index
    %2 = vector.load %arg2[%c0_3, %c0_4] : memref<16x8xf32, #tpu.memory_space<vmem>>, vector<16x8xf32>
    %c0_5 = arith.constant 0 : index
    %c0_6 = arith.constant 0 : index
    %3 = vector.load %arg3[%c0_5, %c0_6] : memref<8x16xf32, #tpu.memory_space<vmem>>, vector<8x16xf32>
    %cst = arith.constant dense<0.000000e+00> : vector<8x8x16xf32>
    %4 = tpu.matmul %1, %3, %cst {dimension_numbers = #tpu.dot_dimension_numbers<[2], [0], [0, 1], [1], [0, 0, 0, 1, 1, 1], [], []>} : vector<8x8x8xf32>, vector<8x16xf32>, vector<8x8x16xf32> -> vector<8x8x16xf32>
    %5 = vector.shape_cast %2 : vector<16x8xf32> to vector<1x16x8xf32>
    %6 = vector.broadcast %5 : vector<1x16x8xf32> to vector<8x16x8xf32>
    %cst_7 = arith.constant dense<0.000000e+00> : vector<8x16x16xf32>
    %7 = tpu.matmul %6, %4, %cst_7 {dimension_numbers = #tpu.dot_dimension_numbers<[2], [1], [1], [2], [0, 0, 0, 1, 1, 2], [0], [0]>} : vector<8x16x8xf32>, vector<8x8x16xf32>, vector<8x16x16xf32> -> vector<8x16x16xf32>
    %c0_8 = arith.constant 0 : index
    %c0_9 = arith.constant 0 : index
    %c0_10 = arith.constant 0 : index
    %c0_11 = arith.constant 0 : index
    %8 = vector.load %arg4[%c0_8, %c0_9, %c0_10, %c0_11] : memref<1x8x16x16xf32, #tpu.memory_space<vmem>>, vector<1x8x16x16xf32>
    %9 = vector.shape_cast %8 : vector<1x8x16x16xf32> to vector<8x16x16xf32>
    %10 = vector.shape_cast %7 : vector<8x16x16xf32> to vector<1x8x16x16xf32>
    tpu.vector_store %arg4[%c0_8, %c0_9, %c0_10, %c0_11], %10 {strides = array<i32>} : memref<1x8x16x16xf32, #tpu.memory_space<vmem>>, vector<1x8x16x16xf32>,
    return
  }
  func.func @transform_0(%arg0: i32) -> (i32, i32, i32, i32) {
    %c0_i32 = arith.constant 0 : i32
    %c0_i32_0 = arith.constant 0 : i32
    %c0_i32_1 = arith.constant 0 : i32
    %c0_i32_2 = arith.constant 0 : i32
    return %arg0, %c0_i32, %c0_i32_0, %c0_i32_1 : i32, i32, i32, i32
  }
  func.func @transform_1(%arg0: i32) -> (i32, i32) {
    %c0_i32 = arith.constant 0 : i32
    %c0_i32_0 = arith.constant 0 : i32
    %c0_i32_1 = arith.constant 0 : i32
    return %c0_i32, %c0_i32_0 : i32, i32
  }
  func.func @transform_2(%arg0: i32) -> (i32, i32) {
    %c0_i32 = arith.constant 0 : i32
    %c0_i32_0 = arith.constant 0 : i32
    %c0_i32_1 = arith.constant 0 : i32
    return %c0_i32, %c0_i32_0 : i32, i32
  }
  func.func @transform_3(%arg0: i32) -> (i32, i32, i32, i32) {
    %c0_i32 = arith.constant 0 : i32
    %c0_i32_0 = arith.constant 0 : i32
    %c0_i32_1 = arith.constant 0 : i32
    %c0_i32_2 = arith.constant 0 : i32
    return %arg0, %c0_i32, %c0_i32_0, %c0_i32_1 : i32, i32, i32, i32
  }
}

module attributes {stable_mosaic.version = 11 : i64} {
  func.func @_head_kernel(%arg0: i32, %arg1: i32, %arg2: memref<1x16x36xbf16, #tpu.memory_space<vmem>>, %arg3: memref<36x8xbf16, #tpu.memory_space<vmem>>, %arg4: memref<1x8xf32, #tpu.memory_space<vmem>>, %arg5: memref<8x8xbf16, #tpu.memory_space<vmem>>, %arg6: memref<8x1xf32, #tpu.memory_space<vmem>>, %arg7: memref<1x8x16xf32, #tpu.memory_space<vmem>>) attributes {dimension_semantics = [#tpu.dimension_semantics<parallel>, #tpu.dimension_semantics<parallel>], iteration_bounds = array<i64: 2, 1>, scalar_prefetch = 0 : i64, scratch_operands = 0 : i64, tpu.core_type = #tpu.core_type<tc>, window_params = [{transform_indices = @transform_0, window_bounds = array<i64: 1, 16, 36>}, {pipeline_mode = #tpu.pipeline_mode<synchronous>, transform_indices = @transform_1, window_bounds = array<i64: 36, 8>}, {pipeline_mode = #tpu.pipeline_mode<synchronous>, transform_indices = @transform_2, window_bounds = array<i64: 1, 8>}, {pipeline_mode = #tpu.pipeline_mode<synchronous>, transform_indices = @transform_3, window_bounds = array<i64: 8, 8>}, {pipeline_mode = #tpu.pipeline_mode<synchronous>, transform_indices = @transform_4, window_bounds = array<i64: 8, 1>}, {transform_indices = @transform_5, window_bounds = array<i64: 1, 8, 16>}]} {
    %c0 = arith.constant 0 : index
    %c0_0 = arith.constant 0 : index
    %c0_1 = arith.constant 0 : index
    %0 = vector.load %arg2[%c0, %c0_0, %c0_1] : memref<1x16x36xbf16, #tpu.memory_space<vmem>>, vector<1x16x36xbf16>
    %1 = vector.shape_cast %0 : vector<1x16x36xbf16> to vector<16x36xbf16>
    %c0_2 = arith.constant 0 : index
    %c0_3 = arith.constant 0 : index
    %2 = vector.load %arg3[%c0_2, %c0_3] : memref<36x8xbf16, #tpu.memory_space<vmem>>, vector<36x8xbf16>
    %cst = arith.constant dense<0.000000e+00> : vector<16x8xf32>
    %3 = tpu.matmul %1, %2, %cst {dimension_numbers = #tpu.dot_dimension_numbers<[1], [0], [0], [1], [0, 0, 1, 1], [], []>} : vector<16x36xbf16>, vector<36x8xbf16>, vector<16x8xf32> -> vector<16x8xf32>
    %c0_4 = arith.constant 0 : index
    %c0_5 = arith.constant 0 : index
    %4 = vector.load %arg4[%c0_4, %c0_5] : memref<1x8xf32, #tpu.memory_space<vmem>>, vector<1x8xf32>
    %5 = vector.broadcast %4 : vector<1x8xf32> to vector<16x8xf32>
    %6 = arith.addf %3, %5 : vector<16x8xf32>
    %cst_6 = arith.constant 0.000000e+00 : f32
    %7 = vector.broadcast %cst_6 : f32 to vector<16x8xf32>
    %8 = arith.maximumf %6, %7 : vector<16x8xf32>
    %9 = arith.truncf %8 : vector<16x8xf32> to vector<16x8xbf16>
    %c0_7 = arith.constant 0 : index
    %c0_8 = arith.constant 0 : index
    %10 = vector.load %arg5[%c0_7, %c0_8] : memref<8x8xbf16, #tpu.memory_space<vmem>>, vector<8x8xbf16>
    %cst_9 = arith.constant dense<0.000000e+00> : vector<8x16xf32>
    %11 = tpu.matmul %10, %9, %cst_9 {dimension_numbers = #tpu.dot_dimension_numbers<[1], [1], [0], [0], [0, 0, 1, 0], [], []>} : vector<8x8xbf16>, vector<16x8xbf16>, vector<8x16xf32> -> vector<8x16xf32>
    %c0_10 = arith.constant 0 : index
    %c0_11 = arith.constant 0 : index
    %12 = vector.load %arg6[%c0_10, %c0_11] : memref<8x1xf32, #tpu.memory_space<vmem>>, vector<8x1xf32>
    %13 = vector.broadcast %12 : vector<8x1xf32> to vector<8x16xf32>
    %14 = arith.addf %11, %13 : vector<8x16xf32>
    %c0_12 = arith.constant 0 : index
    %c0_13 = arith.constant 0 : index
    %c0_14 = arith.constant 0 : index
    %15 = vector.load %arg7[%c0_12, %c0_13, %c0_14] : memref<1x8x16xf32, #tpu.memory_space<vmem>>, vector<1x8x16xf32>
    %16 = vector.shape_cast %15 : vector<1x8x16xf32> to vector<8x16xf32>
    %17 = vector.shape_cast %14 : vector<8x16xf32> to vector<1x8x16xf32>
    tpu.vector_store %arg7[%c0_12, %c0_13, %c0_14], %17 {strides = array<i32>} : memref<1x8x16xf32, #tpu.memory_space<vmem>>, vector<1x8x16xf32>,
    return
  }
  func.func @transform_0(%arg0: i32, %arg1: i32) -> (i32, i32, i32) {
    %c0_i32 = arith.constant 0 : i32
    %c0_i32_0 = arith.constant 0 : i32
    return %arg0, %arg1, %c0_i32 : i32, i32, i32
  }
  func.func @transform_1(%arg0: i32, %arg1: i32) -> (i32, i32) {
    %c0_i32 = arith.constant 0 : i32
    %c0_i32_0 = arith.constant 0 : i32
    %c0_i32_1 = arith.constant 0 : i32
    return %c0_i32, %c0_i32_0 : i32, i32
  }
  func.func @transform_2(%arg0: i32, %arg1: i32) -> (i32, i32) {
    %c0_i32 = arith.constant 0 : i32
    %c0_i32_0 = arith.constant 0 : i32
    %c0_i32_1 = arith.constant 0 : i32
    return %c0_i32, %c0_i32_0 : i32, i32
  }
  func.func @transform_3(%arg0: i32, %arg1: i32) -> (i32, i32) {
    %c0_i32 = arith.constant 0 : i32
    %c0_i32_0 = arith.constant 0 : i32
    %c0_i32_1 = arith.constant 0 : i32
    return %c0_i32, %c0_i32_0 : i32, i32
  }
  func.func @transform_4(%arg0: i32, %arg1: i32) -> (i32, i32) {
    %c0_i32 = arith.constant 0 : i32
    %c0_i32_0 = arith.constant 0 : i32
    %c0_i32_1 = arith.constant 0 : i32
    return %c0_i32, %c0_i32_0 : i32, i32
  }
  func.func @transform_5(%arg0: i32, %arg1: i32) -> (i32, i32, i32) {
    %c0_i32 = arith.constant 0 : i32
    %c0_i32_0 = arith.constant 0 : i32
    return %arg0, %c0_i32, %arg1 : i32, i32, i32
  }
}

module attributes {stable_mosaic.version = 11 : i64} {
  func.func @_upsample_kernel(%arg0: i32, %arg1: memref<1x8x4x4xf32, #tpu.memory_space<vmem>>, %arg2: memref<16x4xf32, #tpu.memory_space<vmem>>, %arg3: memref<4x16xf32, #tpu.memory_space<vmem>>, %arg4: memref<1x8x16x16xf32, #tpu.memory_space<vmem>>) attributes {dimension_semantics = [#tpu.dimension_semantics<parallel>], iteration_bounds = array<i64: 2>, scalar_prefetch = 0 : i64, scratch_operands = 0 : i64, tpu.core_type = #tpu.core_type<tc>, window_params = [{transform_indices = @transform_0, window_bounds = array<i64: 1, 8, 4, 4>}, {pipeline_mode = #tpu.pipeline_mode<synchronous>, transform_indices = @transform_1, window_bounds = array<i64: 16, 4>}, {pipeline_mode = #tpu.pipeline_mode<synchronous>, transform_indices = @transform_2, window_bounds = array<i64: 4, 16>}, {transform_indices = @transform_3, window_bounds = array<i64: 1, 8, 16, 16>}]} {
    %c0 = arith.constant 0 : index
    %c0_0 = arith.constant 0 : index
    %c0_1 = arith.constant 0 : index
    %c0_2 = arith.constant 0 : index
    %0 = vector.load %arg1[%c0, %c0_0, %c0_1, %c0_2] : memref<1x8x4x4xf32, #tpu.memory_space<vmem>>, vector<1x8x4x4xf32>
    %1 = vector.shape_cast %0 : vector<1x8x4x4xf32> to vector<8x4x4xf32>
    %c0_3 = arith.constant 0 : index
    %c0_4 = arith.constant 0 : index
    %2 = vector.load %arg2[%c0_3, %c0_4] : memref<16x4xf32, #tpu.memory_space<vmem>>, vector<16x4xf32>
    %c0_5 = arith.constant 0 : index
    %c0_6 = arith.constant 0 : index
    %3 = vector.load %arg3[%c0_5, %c0_6] : memref<4x16xf32, #tpu.memory_space<vmem>>, vector<4x16xf32>
    %cst = arith.constant dense<0.000000e+00> : vector<8x4x16xf32>
    %4 = tpu.matmul %1, %3, %cst {dimension_numbers = #tpu.dot_dimension_numbers<[2], [0], [0, 1], [1], [0, 0, 0, 1, 1, 1], [], []>} : vector<8x4x4xf32>, vector<4x16xf32>, vector<8x4x16xf32> -> vector<8x4x16xf32>
    %5 = vector.shape_cast %2 : vector<16x4xf32> to vector<1x16x4xf32>
    %6 = vector.broadcast %5 : vector<1x16x4xf32> to vector<8x16x4xf32>
    %cst_7 = arith.constant dense<0.000000e+00> : vector<8x16x16xf32>
    %7 = tpu.matmul %6, %4, %cst_7 {dimension_numbers = #tpu.dot_dimension_numbers<[2], [1], [1], [2], [0, 0, 0, 1, 1, 2], [0], [0]>} : vector<8x16x4xf32>, vector<8x4x16xf32>, vector<8x16x16xf32> -> vector<8x16x16xf32>
    %c0_8 = arith.constant 0 : index
    %c0_9 = arith.constant 0 : index
    %c0_10 = arith.constant 0 : index
    %c0_11 = arith.constant 0 : index
    %8 = vector.load %arg4[%c0_8, %c0_9, %c0_10, %c0_11] : memref<1x8x16x16xf32, #tpu.memory_space<vmem>>, vector<1x8x16x16xf32>
    %9 = vector.shape_cast %8 : vector<1x8x16x16xf32> to vector<8x16x16xf32>
    %10 = vector.shape_cast %7 : vector<8x16x16xf32> to vector<1x8x16x16xf32>
    tpu.vector_store %arg4[%c0_8, %c0_9, %c0_10, %c0_11], %10 {strides = array<i32>} : memref<1x8x16x16xf32, #tpu.memory_space<vmem>>, vector<1x8x16x16xf32>,
    return
  }
  func.func @transform_0(%arg0: i32) -> (i32, i32, i32, i32) {
    %c0_i32 = arith.constant 0 : i32
    %c0_i32_0 = arith.constant 0 : i32
    %c0_i32_1 = arith.constant 0 : i32
    %c0_i32_2 = arith.constant 0 : i32
    return %arg0, %c0_i32, %c0_i32_0, %c0_i32_1 : i32, i32, i32, i32
  }
  func.func @transform_1(%arg0: i32) -> (i32, i32) {
    %c0_i32 = arith.constant 0 : i32
    %c0_i32_0 = arith.constant 0 : i32
    %c0_i32_1 = arith.constant 0 : i32
    return %c0_i32, %c0_i32_0 : i32, i32
  }
  func.func @transform_2(%arg0: i32) -> (i32, i32) {
    %c0_i32 = arith.constant 0 : i32
    %c0_i32_0 = arith.constant 0 : i32
    %c0_i32_1 = arith.constant 0 : i32
    return %c0_i32, %c0_i32_0 : i32, i32
  }
  func.func @transform_3(%arg0: i32) -> (i32, i32, i32, i32) {
    %c0_i32 = arith.constant 0 : i32
    %c0_i32_0 = arith.constant 0 : i32
    %c0_i32_1 = arith.constant 0 : i32
    %c0_i32_2 = arith.constant 0 : i32
    return %arg0, %c0_i32, %c0_i32_0, %c0_i32_1 : i32, i32, i32, i32
  }
}

</mosaic_0001>

<llo_original>
// kernel: ensemble_forward.7
$region0: #{ensemble_forward.7}
  #allocation0 [shape = 'u32[]', space=smem, size = 0x4, offset = 0x4, fixed_abs, tag = 'smem constant byte address 0x4 - core index']
  #allocation1 [shape = 'u32[144,128]{1,0:T(1,128)}', space=vmem, size = 0x12000, scoped, tag = 'internal scratch']
  %s0 = inlined_call_operand.vmem [shape: bf16[2,256,36], index: 0, kind: input, shape index: {}]
  %s1 = inlined_call_operand.vmem [shape: bf16[36,32], index: 1, kind: input, shape index: {}]
  %s2 = inlined_call_operand.vmem [shape: f32[1,32], index: 2, kind: input, shape index: {}]
  %s3 = inlined_call_operand.vmem [shape: bf16[8,32], index: 3, kind: input, shape index: {}]
  %s4 = inlined_call_operand.vmem [shape: f32[8,1], index: 4, kind: input, shape index: {}]
  %s5 = inlined_call_operand.vmem [shape: f32[2,8,256], index: 5, kind: output, shape index: {}]
  %s6 = sld [smem:[#allocation0]]
  $region53: #{ensemble_forward.7} parent=0
    _
  %s8 = ssub.s32 1, %s6
  %s9 = scalar_select 0, %s8, %s6
  loop: start=0, step=1, limit=4
  $region2: #{ensemble_forward.7} parent=0 // loop_pre_header
    _
  $region3: #{ensemble_forward.7} parent=0 // loop_header
    %s11 = sphi 0, %s15
    %p12 = scmp.ge.s32.totalorder %s11, 4
    %s18 = sphi 0, %s30
    %s19 = sphi 0, %s26
    %s20 = sphi 0, %s18
    %s21 = sphi 0, %s19
    %s22 = sphi 0, %s20
    %s23 = sphi 0, %s21
    %s35 = sphi 0, %s37
    %s38 = sphi 0, %s35
    %s39 = sphi 0, %s38
    %s55 = sphi 0, %s39
    %s59 = sphi 0, %s59
    %s61 = sphi 0, %s59
    %s62 = sphi 0, %s61
    %s76 = sphi 0, %s62
    %s80 = sphi 0, %s80
    %s82 = sphi 0, %s80
    %s83 = sphi 0, %s82
    %s97 = sphi 0, %s83
    %s101 = sphi 0, %s101
    %s103 = sphi 0, %s101
    %s104 = sphi 0, %s103
    %s118 = sphi 0, %s104
    %s122 = sphi 0, %s122
    %s124 = sphi 0, %s122
    %s125 = sphi 0, %s124
    %s139 = sphi 0, %s125
    %s147 = sphi 0, %s149
    %s150 = sphi 0, %s147
    %s151 = sphi 0, %s150
    %s167 = sphi 0, %s151
  $region4: #{ensemble_forward.7} parent=0 // loop_header_branch
    %14 = sbr.rel (%p12) target = $region8
  $region5: #{ensemble_forward.7} parent=0 // loop_body
    %s16 = ssub.s32 %s11, 1
    %s17 = ssub.s32 %s11, 2
    %s24 = sadd.s32 1, %s19
    %p25 = scmp.ge.s32.totalorder %s24, 1
    %s26 = scalar_select %p25, 0, %s24
    %s27 = sadd.s32 1, %s18
    %s28 = scalar_select %p25, %s27, %s18
    %p29 = scmp.ge.s32.totalorder %s28, 2
    %s30 = scalar_select %p29, 0, %s28
    %s31 = ssub.s32 %s18, %s30
    %s32 = ssub.s32 %s19, %s26
    %s33 = sor.u32 %s31, %s32
    %p34 = scmp.eq.s32.totalorder %s33, 0
    %s36 = sadd.s32 %s35, 1
    %s37 = scalar_select %p34, %s35, %s36
    %p40 = pneg %p34
    %p41 = scmp.eq.s32.totalorder %s11, 1
    %p42 = por %p40, %p41
    %p43 = scmp.ne.s32.totalorder %s35, %s38
    %p44 = scmp.eq.s32.totalorder %s11, 0
    %p45 = por %p43, %p44
    %p46 = scmp.ne.s32.totalorder %s35, %s38
    %p47 = scmp.eq.s32.totalorder %s16, 1
    %p48 = por %p46, %p47
    %p49 = scmp.ne.s32.totalorder %s38, %s39
    %p50 = scmp.eq.s32.totalorder %s16, 0
    %p51 = por %p49, %p50
    %p52 = scmp.ne.s32.totalorder %s38, %s39
    %p53 = scmp.eq.s32.totalorder %s17, 1
    %p54 = por %p52, %p53
    %p56 = scmp.ne.s32.totalorder %s39, %s55
    %p57 = scmp.eq.s32.totalorder %s17, 0
    %p58 = por %p56, %p57
    %s60 = sadd.s32 %s59, 1
    %p63 = scmp.eq.s32.totalorder %s11, 1
    %p64 = scmp.ne.s32.totalorder %s59, %s61
    %p65 = scmp.eq.s32.totalorder %s11, 0
    %p66 = por %p64, %p65
    %p67 = scmp.ne.s32.totalorder %s59, %s61
    %p68 = scmp.eq.s32.totalorder %s16, 1
    %p69 = por %p67, %p68
    %p70 = scmp.ne.s32.totalorder %s61, %s62
    %p71 = scmp.eq.s32.totalorder %s16, 0
    %p72 = por %p70, %p71
    %p73 = scmp.ne.s32.totalorder %s61, %s62
    %p74 = scmp.eq.s32.totalorder %s17, 1
    %p75 = por %p73, %p74
    %p77 = scmp.ne.s32.totalorder %s62, %s76
    %p78 = scmp.eq.s32.totalorder %s17, 0
    %p79 = por %p77, %p78
    %s81 = sadd.s32 %s80, 1
    %p84 = scmp.eq.s32.totalorder %s11, 1
    %p85 = scmp.ne.s32.totalorder %s80, %s82
    %p86 = scmp.eq.s32.totalorder %s11, 0
    %p87 = por %p85, %p86
    %p88 = scmp.ne.s32.totalorder %s80, %s82
    %p89 = scmp.eq.s32.totalorder %s16, 1
    %p90 = por %p88, %p89
    %p91 = scmp.ne.s32.totalorder %s82, %s83
    %p92 = scmp.eq.s32.totalorder %s16, 0
    %p93 = por %p91, %p92
    %p94 = scmp.ne.s32.totalorder %s82, %s83
    %p95 = scmp.eq.s32.totalorder %s17, 1
    %p96 = por %p94, %p95
    %p98 = scmp.ne.s32.totalorder %s83, %s97
    %p99 = scmp.eq.s32.totalorder %s17, 0
    %p100 = por %p98, %p99
    %s102 = sadd.s32 %s101, 1
    %p105 = scmp.eq.s32.totalorder %s11, 1
    %p106 = scmp.ne.s32.totalorder %s101, %s103
    %p107 = scmp.eq.s32.totalorder %s11, 0
    %p108 = por %p106, %p107
    %p109 = scmp.ne.s32.totalorder %s101, %s103
    %p110 = scmp.eq.s32.totalorder %s16, 1
    %p111 = por %p109, %p110
    %p112 = scmp.ne.s32.totalorder %s103, %s104
    %p113 = scmp.eq.s32.totalorder %s16, 0
    %p114 = por %p112, %p113
    %p115 = scmp.ne.s32.totalorder %s103, %s104
    %p116 = scmp.eq.s32.totalorder %s17, 1
    %p117 = por %p115, %p116
    %p119 = scmp.ne.s32.totalorder %s104, %s118
    %p120 = scmp.eq.s32.totalorder %s17, 0
    %p121 = por %p119, %p120
    %s123 = sadd.s32 %s122, 1
    %p126 = scmp.eq.s32.totalorder %s11, 1
    %p127 = scmp.ne.s32.totalorder %s122, %s124
    %p128 = scmp.eq.s32.totalorder %s11, 0
    %p129 = por %p127, %p128
    %p130 = scmp.ne.s32.totalorder %s122, %s124
    %p131 = scmp.eq.s32.totalorder %s16, 1
    %p132 = por %p130, %p131
    %p133 = scmp.ne.s32.totalorder %s124, %s125
    %p134 = scmp.eq.s32.totalorder %s16, 0
    %p135 = por %p133, %p134
    %p136 = scmp.ne.s32.totalorder %s124, %s125
    %p137 = scmp.eq.s32.totalorder %s17, 1
    %p138 = por %p136, %p137
    %p140 = scmp.ne.s32.totalorder %s125, %s139
    %p141 = scmp.eq.s32.totalorder %s17, 0
    %p142 = por %p140, %p141
    %s143 = ssub.s32 %s18, %s30
    %s144 = ssub.s32 %s19, %s26
    %s145 = sor.u32 %s143, %s144
    %p146 = scmp.eq.s32.totalorder %s145, 0
    %s148 = sadd.s32 %s147, 1
    %s149 = scalar_select %p146, %s147, %s148
    %p152 = pneg %p146
    %p153 = scmp.eq.s32.totalorder %s11, 1
    %p154 = por %p152, %p153
    %p155 = scmp.ne.s32.totalorder %s147, %s150
    %p156 = scmp.eq.s32.totalorder %s11, 0
    %p157 = por %p155, %p156
    %p158 = scmp.ne.s32.totalorder %s147, %s150
    %p159 = scmp.eq.s32.totalorder %s16, 1
    %p160 = por %p158, %p159
    %p161 = scmp.ne.s32.totalorder %s150, %s151
    %p162 = scmp.eq.s32.totalorder %s16, 0
    %p163 = por %p161, %p162
    %p164 = scmp.ne.s32.totalorder %s150, %s151
    %p165 = scmp.eq.s32.totalorder %s17, 1
    %p166 = por %p164, %p165
    %p168 = scmp.ne.s32.totalorder %s151, %s167
    %p169 = scmp.eq.s32.totalorder %s17, 0
    %p170 = por %p168, %p169
    %p171 = scmp.le.s32.totalorder 1, %s11
    %p172 = scmp.lt.s32.totalorder %s11, 3
    %p173 = pnand %p171, %p172
    %p174 = pneg %p173
    // Predicated region
    $region9: #{ensemble_forward.7} parent=5 // pred_check
      _
    $region10: #{ensemble_forward.7} parent=5 // pred_check_branch
      %176 = sbr.rel (%p173) target = $region12
    $region11: #{ensemble_forward.7} parent=5 // pred_region
      %s177 = ssub.s32 %s11, 1
      // Predicated region
      $region13: #{ensemble_forward.7} parent=11 // pred_check
        %p178 = pneg %p72
      $region14: #{ensemble_forward.7} parent=11 // pred_check_branch
        %180 = sbr.rel (%p178) target = $region16
      $region15: #{ensemble_forward.7} parent=11 // pred_region
        _
      $region16: #{ensemble_forward.7} parent=11 // pred_fallthru
        _
      // Predicated region
      $region17: #{ensemble_forward.7} parent=11 // pred_check
        %p181 = pneg %p93
      $region18: #{ensemble_forward.7} parent=11 // pred_check_branch
        %183 = sbr.rel (%p181) target = $region20
      $region19: #{ensemble_forward.7} parent=11 // pred_region
        _
      $region20: #{ensemble_forward.7} parent=11 // pred_fallthru
        _
      // Predicated region
      $region21: #{ensemble_forward.7} parent=11 // pred_check
        %p184 = pneg %p114
      $region22: #{ensemble_forward.7} parent=11 // pred_check_branch
        %186 = sbr.rel (%p184) target = $region24
      $region23: #{ensemble_forward.7} parent=11 // pred_region
        _
      $region24: #{ensemble_forward.7} parent=11 // pred_fallthru
        _
      // Predicated region
      $region25: #{ensemble_forward.7} parent=11 // pred_check
        %p187 = pneg %p135
      $region26: #{ensemble_forward.7} parent=11 // pred_check_branch
        %189 = sbr.rel (%p187) target = $region28
      $region27: #{ensemble_forward.7} parent=11 // pred_region
        _
      $region28: #{ensemble_forward.7} parent=11 // pred_fallthru
        _
    $region12: #{ensemble_forward.7} parent=5 // pred_fallthru
      _
    %p190 = scmp.lt.s32.totalorder %s11, 2
    // Predicated region
    $region29: #{ensemble_forward.7} parent=5 // pred_check
      %p191 = pneg %p190
    $region30: #{ensemble_forward.7} parent=5 // pred_check_branch
      %193 = sbr.rel (%p191) target = $region32
    $region31: #{ensemble_forward.7} parent=5 // pred_region
      // Predicated region
      $region33: #{ensemble_forward.7} parent=31 // pred_check
        %p194 = pneg %p45
      $region34: #{ensemble_forward.7} parent=31 // pred_check_branch
        %196 = sbr.rel (%p194) target = $region36
      $region35: #{ensemble_forward.7} parent=31 // pred_region
        %s197 = smul.u32 32, %s19
        %p198 = scmp.lt.s32.totalorder %s18, 1
        %s199 = scalar_select %p198, %s18, 1
        %p200 = scmp.lt.s32.totalorder %s197, 31
        %s201 = scalar_select %p200, %s197, 31
        %s202 = smul.addr %s199, 32
        %s203 = sadd.s32 %s201, %s202
        %s204 = smul.addr %s203, 4
        %s205 = scalar_lea.vmem %s0, %s204
        %s206 = smul.u32 32, %s19
      $region36: #{ensemble_forward.7} parent=31 // pred_fallthru
        _
    $region32: #{ensemble_forward.7} parent=5 // pred_fallthru
      _
    %p207 = scmp.le.s32.totalorder 1, %s11
    %p208 = scmp.lt.s32.totalorder %s11, 3
    %p209 = pnand %p207, %p208
    %p210 = pneg %p209
    // Predicated region
    $region37: #{ensemble_forward.7} parent=5 // pred_check
      _
    $region38: #{ensemble_forward.7} parent=5 // pred_check_branch
      %212 = sbr.rel (%p209) target = $region40
    $region39: #{ensemble_forward.7} parent=5 // pred_region
      %s213 = ssub.s32 %s11, 1
      %s214 = smul.u32 32, %s21
      %p215 = scmp.lt.s32.totalorder %s20, 1
      %s216 = scalar_select %p215, %s20, 1
      %p217 = scmp.lt.s32.totalorder %s214, 31
      %s218 = scalar_select %p217, %s214, 31
      %s219 = smul.addr %s216, 32
      %s220 = sadd.s32 %s218, %s219
      %s221 = smul.addr %s220, 4
      %s222 = scalar_lea.vmem %s0, %s221
      %p223 = pneg %p51
      %p224 = pneg %p48
      %p225 = pneg %p72
      %p226 = pneg %p69
      %p227 = pneg %p93
      %p228 = pneg %p90
      %p229 = pneg %p114
      %p230 = pneg %p111
      %p231 = pneg %p135
      %p232 = pneg %p132
      %p233 = pneg %p163
      %p234 = pneg %p160
      %s235 = smul.u32 2, %s21
      %p236 = scmp.lt.s32.totalorder %s20, 1
      %s237 = scalar_select %p236, %s20, 1
      %p238 = scmp.lt.s32.totalorder %s235, 1
      %s239 = scalar_select %p238, %s235, 1
      %s240 = smul.addr %s237, 2
      %s241 = sadd.s32 %s239, %s240
      %s242 = smul.addr %s241, 8
      %s243 = scalar_lea.vmem %s5, %s242
      %s244 = smul.u32 32, %s21
      %p245 = scmp.lt.s32.totalorder %s20, 1
      %s246 = scalar_select %p245, %s20, 1
      %p247 = scmp.lt.s32.totalorder %s244, 31
      %s248 = scalar_select %p247, %s244, 31
      %s249 = smul.addr %s246, 32
      %s250 = sadd.s32 %s248, %s249
      %s251 = smul.addr %s250, 4
      %s252 = scalar_lea.vmem %s0, %s251
      %s253 = smul.u32 32, %s21
      %s254 = smul.u32 2, %s21
      %p255 = scmp.lt.s32.totalorder %s20, 1
      %s256 = scalar_select %p255, %s20, 1
      %p257 = scmp.lt.s32.totalorder %s254, 1
      %s258 = scalar_select %p257, %s254, 1
      %s259 = smul.addr %s256, 2
      %s260 = sadd.s32 %s258, %s259
      %s261 = smul.addr %s260, 8
      %s262 = scalar_lea.vmem %s5, %s261
      %s263 = smul.u32 2, %s21
      %v265 = vld [vmem:[%s252] sm:$0xf]
      %v266 = vld [vmem:[%s252 + $0x4] sm:$0xf]
      %v267 = vld [vmem:[%s252 + $0x8] sm:$0xf]
      %v268 = vld [vmem:[%s252 + $0xc] sm:$0xf]
      %v269 = vld [vmem:[%s252 + $0x10] sm:$0xf]
      %v270 = vld [vmem:[%s252 + $0x14] sm:$0xf]
      %v271 = vld [vmem:[%s252 + $0x18] sm:$0xf]
      %v272 = vld [vmem:[%s252 + $0x1c] sm:$0xf]
      %v273 = vld [vmem:[%s252 + $0x20] sm:$0xf]
      %v274 = vld [vmem:[%s252 + $0x24] sm:$0xf]
      %v275 = vld [vmem:[%s252 + $0x28] sm:$0xf]
      %v276 = vld [vmem:[%s252 + $0x2c] sm:$0xf]
      %v277 = vld [vmem:[%s252 + $0x30] sm:$0xf]
      %v278 = vld [vmem:[%s252 + $0x34] sm:$0xf]
      %v279 = vld [vmem:[%s252 + $0x38] sm:$0xf]
      %v280 = vld [vmem:[%s252 + $0x3c] sm:$0xf]
      %v281 = vld [vmem:[%s252 + $0x40] sm:$0xf]
      %v282 = vld [vmem:[%s252 + $0x44] sm:$0xf]
      %v283 = vld [vmem:[%s252 + $0x48] sm:$0xf]
      %v284 = vld [vmem:[%s252 + $0x4c] sm:$0xf]
      %v285 = vld [vmem:[%s252 + $0x50] sm:$0xf]
      %v286 = vld [vmem:[%s252 + $0x54] sm:$0xf]
      %v287 = vld [vmem:[%s252 + $0x58] sm:$0xf]
      %v288 = vld [vmem:[%s252 + $0x5c] sm:$0xf]
      %v289 = vld [vmem:[%s252 + $0x60] sm:$0xf]
      %v290 = vld [vmem:[%s252 + $0x64] sm:$0xf]
      %v291 = vld [vmem:[%s252 + $0x68] sm:$0xf]
      %v292 = vld [vmem:[%s252 + $0x6c] sm:$0xf]
      %v293 = vld [vmem:[%s252 + $0x70] sm:$0xf]
      %v294 = vld [vmem:[%s252 + $0x74] sm:$0xf]
      %v295 = vld [vmem:[%s252 + $0x78] sm:$0xf]
      %v296 = vld [vmem:[%s252 + $0x7c] sm:$0xf]
      %v297 = vld [vmem:[%s1] sm:$0xf]
      %v298 = vld [vmem:[%s1 + $0x4] sm:$0xf]
      %v299 = vld [vmem:[%s1 + $0x8] sm:$0xf]
      %v300 = vld [vmem:[%s1 + $0xc] sm:$0xf]
      %v301 = vld [vmem:[%s1 + $0x10] sm:$0x3]
      %v302 = vld [vmem:[%s2] sm:$0x1]
      %v304 = vlaneseq
      %v305 = vshrl.u32 %v304, 7
      %v306 = vsub.s32 0, %v305
      %v307 = vrot.slane %v302, %v306
      %v341 = vunpack.c.l.b16 %v265
      %v342 = vunpack.c.l.b16 %v266
      %v343 = vunpack.c.l.b16 %v267
      %v344 = vunpack.c.l.b16 %v268
      %v345 = vunpack.c.l.b16 %v269
      %v346 = vunpack.c.l.b16 %v270
      %v347 = vunpack.c.l.b16 %v271
      %v348 = vunpack.c.l.b16 %v272
      %v349 = vunpack.c.l.b16 %v273
      %v350 = vunpack.c.l.b16 %v274
      %v351 = vunpack.c.l.b16 %v275
      %v352 = vunpack.c.l.b16 %v276
      %v353 = vunpack.c.l.b16 %v277
      %v354 = vunpack.c.l.b16 %v278
      %v355 = vunpack.c.l.b16 %v279
      %v356 = vunpack.c.l.b16 %v280
      %v357 = vunpack.c.l.b16 %v281
      %v358 = vunpack.c.l.b16 %v282
      %v359 = vunpack.c.l.b16 %v283
      %v360 = vunpack.c.l.b16 %v284
      %v361 = vunpack.c.l.b16 %v285
      %v362 = vunpack.c.l.b16 %v286
      %v363 = vunpack.c.l.b16 %v287
      %v364 = vunpack.c.l.b16 %v288
      %v365 = vunpack.c.l.b16 %v289
      %v366 = vunpack.c.l.b16 %v290
      %v367 = vunpack.c.l.b16 %v291
      %v368 = vunpack.c.l.b16 %v292
      %v369 = vunpack.c.l.b16 %v293
      %v370 = vunpack.c.l.b16 %v294
      %v371 = vunpack.c.l.b16 %v295
      %v372 = vunpack.c.l.b16 %v296
      %v373 = vpack.c.b16 %v342, %v341
      %v374 = vpack.c.b16 %v344, %v343
      %v375 = vpack.c.b16 %v346, %v345
      %v376 = vpack.c.b16 %v348, %v347
      %v377 = vpack.c.b16 %v350, %v349
      %v378 = vpack.c.b16 %v352, %v351
      %v379 = vpack.c.b16 %v354, %v353
      %v380 = vpack.c.b16 %v356, %v355
      %v381 = vpack.c.b16 %v358, %v357
      %v382 = vpack.c.b16 %v360, %v359
      %v383 = vpack.c.b16 %v362, %v361
      %v384 = vpack.c.b16 %v364, %v363
      %v385 = vpack.c.b16 %v366, %v365
      %v386 = vpack.c.b16 %v368, %v367
      %v387 = vpack.c.b16 %v370, %v369
      %v388 = vpack.c.b16 %v372, %v371
      %v394 = vunpack.c.l.b16 %v297
      %v395 = vunpack.c.l.b16 %v298
      %v396 = vunpack.c.l.b16 %v299
      %v397 = vunpack.c.l.b16 %v300
      %v398 = vunpack.c.l.b16 %v301
      %v399 = vpack.c.b16 %v395, %v394
      %v400 = vpack.c.b16 %v397, %v396
      %v401 = vpack.c.b16 %v398, %v398
      %vm404 = vcmask 293888
      %v406 = vsel %vm404, %v373, 0
      %v409 = vsel %vm404, %v374, 0
      %v412 = vsel %vm404, %v375, 0
      %v415 = vsel %vm404, %v376, 0
      %v418 = vsel %vm404, %v377, 0
      %v421 = vsel %vm404, %v378, 0
      %v424 = vsel %vm404, %v379, 0
      %v427 = vsel %vm404, %v380, 0
      %v430 = vsel %vm404, %v381, 0
      %v433 = vsel %vm404, %v382, 0
      %v436 = vsel %vm404, %v383, 0
      %v439 = vsel %vm404, %v384, 0
      %v442 = vsel %vm404, %v385, 0
      %v445 = vsel %vm404, %v386, 0
      %v448 = vsel %vm404, %v387, 0
      %v451 = vsel %vm404, %v388, 0
      %vm453 = vcmask 1041408
      %v455 = vsel %vm453, %v401, 0
      %457 = vmatprep.subr.bf16.mxu0 0
      %458 = vmatpush1.bf16.msra.mxu0 %v399
      %459 = vmatprep.subr.bf16.mxu0 0
      %460 = vmatpush1.bf16.msra.mxu0 %v400
      %461 = vmatprep.subr.bf16.mxu0 0
      %462 = vmatpush1.bf16.msra.mxu0 %v455
      %463 = vmatprep.subr.bf16.mxu0 0
      %464 = vmatpush1.bf16.msra.mxu0 0
      %465 = vmatprep.subr.bf16.mxu0 0
      %466 = vmatpush1.bf16.msra.mxu0 0
      %467 = vmatprep.subr.bf16.mxu0 0
      %468 = vmatpush1.bf16.msra.mxu0 0
      %469 = vmatprep.subr.bf16.mxu0 0
      %470 = vmatpush1.bf16.msra.mxu0 0
      %471 = vmatprep.subr.bf16.mxu0 0
      %472 = vmatpush1.bf16.msra.mxu0 0
      %473 = vmatprep.subr.bf16.mxu0 0
      %474 = vmatpush1.bf16.msra.mxu0 0
      %475 = vmatprep.subr.bf16.mxu0 0
      %476 = vmatpush1.bf16.msra.mxu0 0
      %477 = vmatprep.subr.bf16.mxu0 0
      %478 = vmatpush1.bf16.msra.mxu0 0
      %479 = vmatprep.subr.bf16.mxu0 0
      %480 = vmatpush1.bf16.msra.mxu0 0
      %481 = vmatprep.subr.bf16.mxu0 0
      %482 = vmatpush1.bf16.msra.mxu0 0
      %483 = vmatprep.subr.bf16.mxu0 0
      %484 = vmatpush1.bf16.msra.mxu0 0
      %485 = vmatprep.subr.bf16.mxu0 0
      %486 = vmatpush1.bf16.msra.mxu0 0
      %487 = vmatprep.subr.bf16.mxu0 0
      %488 = vmatpush1.bf16.msra.mxu0 0
      %489 = vmatprep.mubr.bf16.mxu0 0
      %490 = vmatmul.mubr.bf16.gmra.mrb[0].mxu0 %v406
      %v491 = vpop.f32.mrb[0].mxu0
      %v492 = vadd.f32 %v307, %v491
      %v493 = vpop.f32.mrb[0].mxu0
      %v494 = vpop.f32.mrb[0].mxu0
      %v495 = vadd.f32 %v307, %v494
      %v496 = vpop.f32.mrb[0].mxu0
      %497 = vmatprep.mubr.bf16.mxu0 0
      %498 = vmatmul.mubr.bf16.gmra.mrb[0].mxu0 %v409
      %v499 = vpop.f32.mrb[0].mxu0
      %v500 = vadd.f32 %v307, %v499
      %v501 = vpop.f32.mrb[0].mxu0
      %v502 = vpop.f32.mrb[0].mxu0
      %v503 = vadd.f32 %v307, %v502
      %v504 = vpop.f32.mrb[0].mxu0
      %505 = vmatprep.mubr.bf16.mxu0 0
      %506 = vmatmul.mubr.bf16.gmra.mrb[0].mxu0 %v412
      %v507 = vpop.f32.mrb[0].mxu0
      %v508 = vadd.f32 %v307, %v507
      %v509 = vpop.f32.mrb[0].mxu0
      %v510 = vpop.f32.mrb[0].mxu0
      %v511 = vadd.f32 %v307, %v510
      %v512 = vpop.f32.mrb[0].mxu0
      %513 = vmatprep.mubr.bf16.mxu0 0
      %514 = vmatmul.mubr.bf16.gmra.mrb[0].mxu0 %v415
      %v515 = vpop.f32.mrb[0].mxu0
      %v516 = vadd.f32 %v307, %v515
      %v517 = vpop.f32.mrb[0].mxu0
      %v518 = vpop.f32.mrb[0].mxu0
      %v519 = vadd.f32 %v307, %v518
      %v520 = vpop.f32.mrb[0].mxu0
      %521 = vmatprep.mubr.bf16.mxu0 0
      %522 = vmatmul.mubr.bf16.gmra.mrb[0].mxu0 %v418
      %v523 = vpop.f32.mrb[0].mxu0
      %v524 = vadd.f32 %v307, %v523
      %v525 = vpop.f32.mrb[0].mxu0
      %v526 = vpop.f32.mrb[0].mxu0
      %v527 = vadd.f32 %v307, %v526
      %v528 = vpop.f32.mrb[0].mxu0
      %529 = vmatprep.mubr.bf16.mxu0 0
      %530 = vmatmul.mubr.bf16.gmra.mrb[0].mxu0 %v421
      %v531 = vpop.f32.mrb[0].mxu0
      %v532 = vadd.f32 %v307, %v531
      %v533 = vpop.f32.mrb[0].mxu0
      %v534 = vpop.f32.mrb[0].mxu0
      %v535 = vadd.f32 %v307, %v534
      %v536 = vpop.f32.mrb[0].mxu0
      %537 = vmatprep.mubr.bf16.mxu0 0
      %538 = vmatmul.mubr.bf16.gmra.mrb[0].mxu0 %v424
      %v539 = vpop.f32.mrb[0].mxu0
      %v540 = vadd.f32 %v307, %v539
      %v541 = vpop.f32.mrb[0].mxu0
      %v542 = vpop.f32.mrb[0].mxu0
      %v543 = vadd.f32 %v307, %v542
      %v544 = vpop.f32.mrb[0].mxu0
      %545 = vmatprep.mubr.bf16.mxu0 0
      %546 = vmatmul.mubr.bf16.gmra.mrb[0].mxu0 %v427
      %v547 = vpop.f32.mrb[0].mxu0
      %v548 = vadd.f32 %v307, %v547
      %v549 = vpop.f32.mrb[0].mxu0
      %v550 = vpop.f32.mrb[0].mxu0
      %v551 = vadd.f32 %v307, %v550
      %v552 = vpop.f32.mrb[0].mxu0
      %553 = vmatprep.mubr.bf16.mxu0 0
      %554 = vmatmul.mubr.bf16.gmra.mrb[0].mxu0 %v430
      %v555 = vpop.f32.mrb[0].mxu0
      %v556 = vadd.f32 %v307, %v555
      %v557 = vpop.f32.mrb[0].mxu0
      %v558 = vpop.f32.mrb[0].mxu0
      %v559 = vadd.f32 %v307, %v558
      %v560 = vpop.f32.mrb[0].mxu0
      %561 = vmatprep.mubr.bf16.mxu0 0
      %562 = vmatmul.mubr.bf16.gmra.mrb[0].mxu0 %v433
      %v563 = vpop.f32.mrb[0].mxu0
      %v564 = vadd.f32 %v307, %v563
      %v565 = vpop.f32.mrb[0].mxu0
      %v566 = vpop.f32.mrb[0].mxu0
      %v567 = vadd.f32 %v307, %v566
      %v568 = vpop.f32.mrb[0].mxu0
      %569 = vmatprep.mubr.bf16.mxu0 0
      %570 = vmatmul.mubr.bf16.gmra.mrb[0].mxu0 %v436
      %v571 = vpop.f32.mrb[0].mxu0
      %v572 = vadd.f32 %v307, %v571
      %v573 = vpop.f32.mrb[0].mxu0
      %v574 = vpop.f32.mrb[0].mxu0
      %v575 = vadd.f32 %v307, %v574
      %v576 = vpop.f32.mrb[0].mxu0
      %577 = vmatprep.mubr.bf16.mxu0 0
      %578 = vmatmul.mubr.bf16.gmra.mrb[0].mxu0 %v439
      %v579 = vpop.f32.mrb[0].mxu0
      %v580 = vadd.f32 %v307, %v579
      %v581 = vpop.f32.mrb[0].mxu0
      %v582 = vpop.f32.mrb[0].mxu0
      %v583 = vadd.f32 %v307, %v582
      %v584 = vpop.f32.mrb[0].mxu0
      %585 = vmatprep.mubr.bf16.mxu0 0
      %586 = vmatmul.mubr.bf16.gmra.mrb[0].mxu0 %v442
      %v587 = vpop.f32.mrb[0].mxu0
      %v588 = vadd.f32 %v307, %v587
      %v589 = vpop.f32.mrb[0].mxu0
      %v590 = vpop.f32.mrb[0].mxu0
      %v591 = vadd.f32 %v307, %v590
      %v592 = vpop.f32.mrb[0].mxu0
      %593 = vmatprep.mubr.bf16.mxu0 0
      %594 = vmatmul.mubr.bf16.gmra.mrb[0].mxu0 %v445
      %v595 = vpop.f32.mrb[0].mxu0
      %v596 = vadd.f32 %v307, %v595
      %v597 = vpop.f32.mrb[0].mxu0
      %v598 = vpop.f32.mrb[0].mxu0
      %v599 = vadd.f32 %v307, %v598
      %v600 = vpop.f32.mrb[0].mxu0
      %601 = vmatprep.mubr.bf16.mxu0 0
      %602 = vmatmul.mubr.bf16.gmra.mrb[0].mxu0 %v448
      %v603 = vpop.f32.mrb[0].mxu0
      %v604 = vadd.f32 %v307, %v603
      %v605 = vpop.f32.mrb[0].mxu0
      %v606 = vpop.f32.mrb[0].mxu0
      %v607 = vadd.f32 %v307, %v606
      %v608 = vpop.f32.mrb[0].mxu0
      %609 = vmatprep.mubr.bf16.mxu0 0
      %610 = vmatmul.mubr.bf16.gmra.mrb[0].mxu0 %v451
      %v611 = vpop.f32.mrb[0].mxu0
      %v612 = vadd.f32 %v307, %v611
      %v613 = vpop.f32.mrb[0].mxu0
      %v614 = vpop.f32.mrb[0].mxu0
      %v615 = vadd.f32 %v307, %v614
      %v616 = vpop.f32.mrb[0].mxu0
      %617 = vdwg.mxu0
      %v618 = vmax.f32 %v492, 0.0
      %v619 = vmax.f32 %v495, 0.0
      %v620 = vmax.f32 %v500, 0.0
      %v621 = vmax.f32 %v503, 0.0
      %v622 = vmax.f32 %v508, 0.0
      %v623 = vmax.f32 %v511, 0.0
      %v624 = vmax.f32 %v516, 0.0
      %v625 = vmax.f32 %v519, 0.0
      %v626 = vmax.f32 %v524, 0.0
      %v627 = vmax.f32 %v527, 0.0
      %v628 = vmax.f32 %v532, 0.0
      %v629 = vmax.f32 %v535, 0.0
      %v630 = vmax.f32 %v540, 0.0
      %v631 = vmax.f32 %v543, 0.0
      %v632 = vmax.f32 %v548, 0.0
      %v633 = vmax.f32 %v551, 0.0
      %v634 = vmax.f32 %v556, 0.0
      %v635 = vmax.f32 %v559, 0.0
      %v636 = vmax.f32 %v564, 0.0
      %v637 = vmax.f32 %v567, 0.0
      %v638 = vmax.f32 %v572, 0.0
      %v639 = vmax.f32 %v575, 0.0
      %v640 = vmax.f32 %v580, 0.0
      %v641 = vmax.f32 %v583, 0.0
      %v642 = vmax.f32 %v588, 0.0
      %v643 = vmax.f32 %v591, 0.0
      %v644 = vmax.f32 %v596, 0.0
      %v645 = vmax.f32 %v599, 0.0
      %v646 = vmax.f32 %v604, 0.0
      %v647 = vmax.f32 %v607, 0.0
      %v648 = vmax.f32 %v612, 0.0
      %v649 = vmax.f32 %v615, 0.0
      %v650 = vpack.c.bf16 %v619, %v618
      %v651 = vpack.c.bf16 %v621, %v620
      %v652 = vpack.c.bf16 %v623, %v622
      %v653 = vpack.c.bf16 %v625, %v624
      %v654 = vpack.c.bf16 %v627, %v626
      %v655 = vpack.c.bf16 %v629, %v628
      %v656 = vpack.c.bf16 %v631, %v630
      %v657 = vpack.c.bf16 %v633, %v632
      %v658 = vpack.c.bf16 %v635, %v634
      %v659 = vpack.c.bf16 %v637, %v636
      %v660 = vpack.c.bf16 %v639, %v638
      %v661 = vpack.c.bf16 %v641, %v640
      %v662 = vpack.c.bf16 %v643, %v642
      %v663 = vpack.c.bf16 %v645, %v644
      %v664 = vpack.c.bf16 %v647, %v646
      %v665 = vpack.c.bf16 %v649, %v648
      %v666 = vld [vmem:[%s3] sm:$0xf]
      %v667 = vld [vmem:[%s4] sm:$0xff]
      %669 = vset.pattern.permute.xlu0 0
      %670 = vperm.xlu0 %669, %v667
      %v671 = vpop.permute.xlu0 %670
      %vm673 = vcmask 261120
      %v675 = vsel %vm673, %v666, 0
      %v678 = vsel %vm673, %v650, 0
      %v681 = vsel %vm673, %v651, 0
      %v684 = vsel %vm673, %v652, 0
      %v687 = vsel %vm673, %v653, 0
      %v690 = vsel %vm673, %v654, 0
      %v693 = vsel %vm673, %v655, 0
      %v696 = vsel %vm673, %v656, 0
      %v699 = vsel %vm673, %v657, 0
      %v702 = vsel %vm673, %v658, 0
      %v705 = vsel %vm673, %v659, 0
      %v708 = vsel %vm673, %v660, 0
      %v711 = vsel %vm673, %v661, 0
      %v714 = vsel %vm673, %v662, 0
      %v717 = vsel %vm673, %v663, 0
      %v720 = vsel %vm673, %v664, 0
      %v723 = vsel %vm673, %v665, 0
      %725 = vmatprep.subr.bf16.mxu0 0
      %726 = vmatpush1.bf16.xpose.msra.mxu0 %v678
      %727 = vmatprep.subr.bf16.mxu0 0
      %728 = vmatpush1.bf16.xpose.msra.mxu0 %v681
      %729 = vmatprep.subr.bf16.mxu0 0
      %730 = vmatpush1.bf16.xpose.msra.mxu0 %v684
      %731 = vmatprep.subr.bf16.mxu0 0
      %732 = vmatpush1.bf16.xpose.msra.mxu0 %v687
      %733 = vmatprep.subr.bf16.mxu0 0
      %734 = vmatpush1.bf16.xpose.msra.mxu0 %v690
      %735 = vmatprep.subr.bf16.mxu0 0
      %736 = vmatpush1.bf16.xpose.msra.mxu0 %v693
      %737 = vmatprep.subr.bf16.mxu0 0
      %738 = vmatpush1.bf16.xpose.msra.mxu0 %v696
      %739 = vmatprep.subr.bf16.mxu0 0
      %740 = vmatpush1.bf16.xpose.msra.mxu0 %v699
      %741 = vmatprep.subr.bf16.mxu0 0
      %742 = vmatpush1.bf16.xpose.msra.mxu0 %v702
      %743 = vmatprep.subr.bf16.mxu0 0
      %744 = vmatpush1.bf16.xpose.msra.mxu0 %v705
      %745 = vmatprep.subr.bf16.mxu0 0
      %746 = vmatpush1.bf16.xpose.msra.mxu0 %v708
      %747 = vmatprep.subr.bf16.mxu0 0
      %748 = vmatpush1.bf16.xpose.msra.mxu0 %v711
      %749 = vmatprep.subr.bf16.mxu0 0
      %750 = vmatpush1.bf16.xpose.msra.mxu0 %v714
      %751 = vmatprep.subr.bf16.mxu0 0
      %752 = vmatpush1.bf16.xpose.msra.mxu0 %v717
      %753 = vmatprep.subr.bf16.mxu0 0
      %754 = vmatpush1.bf16.xpose.msra.mxu0 %v720
      %755 = vmatprep.subr.bf16.mxu0 0
      %756 = vmatpush1.bf16.xpose.msra.mxu0 %v723
      %757 = vmatprep.mubr.bf16.mxu0 0
      %758 = vmatmul.mubr.bf16.gmra.mrb[0].mxu0 %v675
      %v759 = vpop.f32.mrb[0].mxu0
      %v760 = vadd.f32 %v671, %v759
      %v761 = vpop.f32.mrb[0].mxu0
      %v762 = vadd.f32 %v671, %v761
      %v763 = vpop.f32.mrb[0].mxu0
      %v764 = vpop.f32.mrb[0].mxu0
      %765 = vdwg.mxu0
      %766 = vst [vmem:[%s262] sm:$0xff] %v760
      %767 = vst [vmem:[%s262 + $0x8] sm:$0xff] %v762
      %s768 = smul.u32 2, %s21
      %p769 = scmp.lt.s32.totalorder %s20, 1
      %s770 = scalar_select %p769, %s20, 1
      %p771 = scmp.lt.s32.totalorder %s768, 1
      %s772 = scalar_select %p771, %s768, 1
      %s773 = smul.addr %s770, 2
      %s774 = sadd.s32 %s772, %s773
      %s775 = smul.addr %s774, 8
      %s776 = scalar_lea.vmem %s5, %s775
      // Predicated region
      $region41: #{ensemble_forward.7} parent=39 // pred_check
        %p777 = pneg %p160
      $region42: #{ensemble_forward.7} parent=39 // pred_check_branch
        %779 = sbr.rel (%p777) target = $region44
      $region43: #{ensemble_forward.7} parent=39 // pred_region
        %s780 = smul.u32 2, %s21
      $region44: #{ensemble_forward.7} parent=39 // pred_fallthru
        _
    $region40: #{ensemble_forward.7} parent=5 // pred_fallthru
      _
    %p781 = scmp.le.s32.totalorder 2, %s11
    // Predicated region
    $region45: #{ensemble_forward.7} parent=5 // pred_check
      %p782 = pneg %p781
    $region46: #{ensemble_forward.7} parent=5 // pred_check_branch
      %784 = sbr.rel (%p782) target = $region48
    $region47: #{ensemble_forward.7} parent=5 // pred_region
      %s785 = ssub.s32 %s11, 2
      // Predicated region
      $region49: #{ensemble_forward.7} parent=47 // pred_check
        %p786 = pneg %p166
      $region50: #{ensemble_forward.7} parent=47 // pred_check_branch
        %788 = sbr.rel (%p786) target = $region52
      $region51: #{ensemble_forward.7} parent=47 // pred_region
        %s789 = smul.u32 2, %s23
        %p790 = scmp.lt.s32.totalorder %s22, 1
        %s791 = scalar_select %p790, %s22, 1
        %p792 = scmp.lt.s32.totalorder %s789, 1
        %s793 = scalar_select %p792, %s789, 1
        %s794 = smul.addr %s791, 2
        %s795 = sadd.s32 %s793, %s794
        %s796 = smul.addr %s795, 8
        %s797 = scalar_lea.vmem %s5, %s796
      $region52: #{ensemble_forward.7} parent=47 // pred_fallthru
        _
    $region48: #{ensemble_forward.7} parent=5 // pred_fallthru
      _
  $region6: #{ensemble_forward.7} parent=0 // loop_footer
    %s15 = sadd.s32 1, %s11
  $region7: #{ensemble_forward.7} parent=0 // loop_footer_branch
    %10 = sbr.rel target = $region3
  $region8: #{ensemble_forward.7} parent=0 // loop_exit
    _

// kernel: ensemble_forward.6
$region0: #{ensemble_forward.6}
  #allocation0 [shape = 'u32[]', space=smem, size = 0x4, offset = 0x4, fixed_abs, tag = 'smem constant byte address 0x4 - core index']
  #allocation1 [shape = 'u32[144,128]{1,0:T(1,128)}', space=vmem, size = 0x12000, scoped, tag = 'internal scratch']
  %s0 = inlined_call_operand.vmem [shape: bf16[2,64,36], index: 0, kind: input, shape index: {}]
  %s1 = inlined_call_operand.vmem [shape: bf16[36,16], index: 1, kind: input, shape index: {}]
  %s2 = inlined_call_operand.vmem [shape: f32[1,16], index: 2, kind: input, shape index: {}]
  %s3 = inlined_call_operand.vmem [shape: bf16[8,16], index: 3, kind: input, shape index: {}]
  %s4 = inlined_call_operand.vmem [shape: f32[8,1], index: 4, kind: input, shape index: {}]
  %s5 = inlined_call_operand.vmem [shape: f32[2,8,64], index: 5, kind: output, shape index: {}]
  %s6 = sld [smem:[#allocation0]]
  $region53: #{ensemble_forward.6} parent=0
    _
  %s8 = ssub.s32 1, %s6
  %s9 = scalar_select 0, %s8, %s6
  loop: start=0, step=1, limit=4
  $region2: #{ensemble_forward.6} parent=0 // loop_pre_header
    _
  $region3: #{ensemble_forward.6} parent=0 // loop_header
    %s11 = sphi 0, %s15
    %p12 = scmp.ge.s32.totalorder %s11, 4
    %s18 = sphi 0, %s30
    %s19 = sphi 0, %s26
    %s20 = sphi 0, %s18
    %s21 = sphi 0, %s19
    %s22 = sphi 0, %s20
    %s23 = sphi 0, %s21
    %s35 = sphi 0, %s37
    %s38 = sphi 0, %s35
    %s39 = sphi 0, %s38
    %s55 = sphi 0, %s39
    %s59 = sphi 0, %s59
    %s61 = sphi 0, %s59
    %s62 = sphi 0, %s61
    %s76 = sphi 0, %s62
    %s80 = sphi 0, %s80
    %s82 = sphi 0, %s80
    %s83 = sphi 0, %s82
    %s97 = sphi 0, %s83
    %s101 = sphi 0, %s101
    %s103 = sphi 0, %s101
    %s104 = sphi 0, %s103
    %s118 = sphi 0, %s104
    %s122 = sphi 0, %s122
    %s124 = sphi 0, %s122
    %s125 = sphi 0, %s124
    %s139 = sphi 0, %s125
    %s147 = sphi 0, %s149
    %s150 = sphi 0, %s147
    %s151 = sphi 0, %s150
    %s167 = sphi 0, %s151
  $region4: #{ensemble_forward.6} parent=0 // loop_header_branch
    %14 = sbr.rel (%p12) target = $region8
  $region5: #{ensemble_forward.6} parent=0 // loop_body
    %s16 = ssub.s32 %s11, 1
    %s17 = ssub.s32 %s11, 2
    %s24 = sadd.s32 1, %s19
    %p25 = scmp.ge.s32.totalorder %s24, 1
    %s26 = scalar_select %p25, 0, %s24
    %s27 = sadd.s32 1, %s18
    %s28 = scalar_select %p25, %s27, %s18
    %p29 = scmp.ge.s32.totalorder %s28, 2
    %s30 = scalar_select %p29, 0, %s28
    %s31 = ssub.s32 %s18, %s30
    %s32 = ssub.s32 %s19, %s26
    %s33 = sor.u32 %s31, %s32
    %p34 = scmp.eq.s32.totalorder %s33, 0
    %s36 = sadd.s32 %s35, 1
    %s37 = scalar_select %p34, %s35, %s36
    %p40 = pneg %p34
    %p41 = scmp.eq.s32.totalorder %s11, 1
    %p42 = por %p40, %p41
    %p43 = scmp.ne.s32.totalorder %s35, %s38
    %p44 = scmp.eq.s32.totalorder %s11, 0
    %p45 = por %p43, %p44
    %p46 = scmp.ne.s32.totalorder %s35, %s38
    %p47 = scmp.eq.s32.totalorder %s16, 1
    %p48 = por %p46, %p47
    %p49 = scmp.ne.s32.totalorder %s38, %s39
    %p50 = scmp.eq.s32.totalorder %s16, 0
    %p51 = por %p49, %p50
    %p52 = scmp.ne.s32.totalorder %s38, %s39
    %p53 = scmp.eq.s32.totalorder %s17, 1
    %p54 = por %p52, %p53
    %p56 = scmp.ne.s32.totalorder %s39, %s55
    %p57 = scmp.eq.s32.totalorder %s17, 0
    %p58 = por %p56, %p57
    %s60 = sadd.s32 %s59, 1
    %p63 = scmp.eq.s32.totalorder %s11, 1
    %p64 = scmp.ne.s32.totalorder %s59, %s61
    %p65 = scmp.eq.s32.totalorder %s11, 0
    %p66 = por %p64, %p65
    %p67 = scmp.ne.s32.totalorder %s59, %s61
    %p68 = scmp.eq.s32.totalorder %s16, 1
    %p69 = por %p67, %p68
    %p70 = scmp.ne.s32.totalorder %s61, %s62
    %p71 = scmp.eq.s32.totalorder %s16, 0
    %p72 = por %p70, %p71
    %p73 = scmp.ne.s32.totalorder %s61, %s62
    %p74 = scmp.eq.s32.totalorder %s17, 1
    %p75 = por %p73, %p74
    %p77 = scmp.ne.s32.totalorder %s62, %s76
    %p78 = scmp.eq.s32.totalorder %s17, 0
    %p79 = por %p77, %p78
    %s81 = sadd.s32 %s80, 1
    %p84 = scmp.eq.s32.totalorder %s11, 1
    %p85 = scmp.ne.s32.totalorder %s80, %s82
    %p86 = scmp.eq.s32.totalorder %s11, 0
    %p87 = por %p85, %p86
    %p88 = scmp.ne.s32.totalorder %s80, %s82
    %p89 = scmp.eq.s32.totalorder %s16, 1
    %p90 = por %p88, %p89
    %p91 = scmp.ne.s32.totalorder %s82, %s83
    %p92 = scmp.eq.s32.totalorder %s16, 0
    %p93 = por %p91, %p92
    %p94 = scmp.ne.s32.totalorder %s82, %s83
    %p95 = scmp.eq.s32.totalorder %s17, 1
    %p96 = por %p94, %p95
    %p98 = scmp.ne.s32.totalorder %s83, %s97
    %p99 = scmp.eq.s32.totalorder %s17, 0
    %p100 = por %p98, %p99
    %s102 = sadd.s32 %s101, 1
    %p105 = scmp.eq.s32.totalorder %s11, 1
    %p106 = scmp.ne.s32.totalorder %s101, %s103
    %p107 = scmp.eq.s32.totalorder %s11, 0
    %p108 = por %p106, %p107
    %p109 = scmp.ne.s32.totalorder %s101, %s103
    %p110 = scmp.eq.s32.totalorder %s16, 1
    %p111 = por %p109, %p110
    %p112 = scmp.ne.s32.totalorder %s103, %s104
    %p113 = scmp.eq.s32.totalorder %s16, 0
    %p114 = por %p112, %p113
    %p115 = scmp.ne.s32.totalorder %s103, %s104
    %p116 = scmp.eq.s32.totalorder %s17, 1
    %p117 = por %p115, %p116
    %p119 = scmp.ne.s32.totalorder %s104, %s118
    %p120 = scmp.eq.s32.totalorder %s17, 0
    %p121 = por %p119, %p120
    %s123 = sadd.s32 %s122, 1
    %p126 = scmp.eq.s32.totalorder %s11, 1
    %p127 = scmp.ne.s32.totalorder %s122, %s124
    %p128 = scmp.eq.s32.totalorder %s11, 0
    %p129 = por %p127, %p128
    %p130 = scmp.ne.s32.totalorder %s122, %s124
    %p131 = scmp.eq.s32.totalorder %s16, 1
    %p132 = por %p130, %p131
    %p133 = scmp.ne.s32.totalorder %s124, %s125
    %p134 = scmp.eq.s32.totalorder %s16, 0
    %p135 = por %p133, %p134
    %p136 = scmp.ne.s32.totalorder %s124, %s125
    %p137 = scmp.eq.s32.totalorder %s17, 1
    %p138 = por %p136, %p137
    %p140 = scmp.ne.s32.totalorder %s125, %s139
    %p141 = scmp.eq.s32.totalorder %s17, 0
    %p142 = por %p140, %p141
    %s143 = ssub.s32 %s18, %s30
    %s144 = ssub.s32 %s19, %s26
    %s145 = sor.u32 %s143, %s144
    %p146 = scmp.eq.s32.totalorder %s145, 0
    %s148 = sadd.s32 %s147, 1
    %s149 = scalar_select %p146, %s147, %s148
    %p152 = pneg %p146
    %p153 = scmp.eq.s32.totalorder %s11, 1
    %p154 = por %p152, %p153
    %p155 = scmp.ne.s32.totalorder %s147, %s150
    %p156 = scmp.eq.s32.totalorder %s11, 0
    %p157 = por %p155, %p156
    %p158 = scmp.ne.s32.totalorder %s147, %s150
    %p159 = scmp.eq.s32.totalorder %s16, 1
    %p160 = por %p158, %p159
    %p161 = scmp.ne.s32.totalorder %s150, %s151
    %p162 = scmp.eq.s32.totalorder %s16, 0
    %p163 = por %p161, %p162
    %p164 = scmp.ne.s32.totalorder %s150, %s151
    %p165 = scmp.eq.s32.totalorder %s17, 1
    %p166 = por %p164, %p165
    %p168 = scmp.ne.s32.totalorder %s151, %s167
    %p169 = scmp.eq.s32.totalorder %s17, 0
    %p170 = por %p168, %p169
    %p171 = scmp.le.s32.totalorder 1, %s11
    %p172 = scmp.lt.s32.totalorder %s11, 3
    %p173 = pnand %p171, %p172
    %p174 = pneg %p173
    // Predicated region
    $region9: #{ensemble_forward.6} parent=5 // pred_check
      _
    $region10: #{ensemble_forward.6} parent=5 // pred_check_branch
      %176 = sbr.rel (%p173) target = $region12
    $region11: #{ensemble_forward.6} parent=5 // pred_region
      %s177 = ssub.s32 %s11, 1
      // Predicated region
      $region13: #{ensemble_forward.6} parent=11 // pred_check
        %p178 = pneg %p72
      $region14: #{ensemble_forward.6} parent=11 // pred_check_branch
        %180 = sbr.rel (%p178) target = $region16
      $region15: #{ensemble_forward.6} parent=11 // pred_region
        _
      $region16: #{ensemble_forward.6} parent=11 // pred_fallthru
        _
      // Predicated region
      $region17: #{ensemble_forward.6} parent=11 // pred_check
        %p181 = pneg %p93
      $region18: #{ensemble_forward.6} parent=11 // pred_check_branch
        %183 = sbr.rel (%p181) target = $region20
      $region19: #{ensemble_forward.6} parent=11 // pred_region
        _
      $region20: #{ensemble_forward.6} parent=11 // pred_fallthru
        _
      // Predicated region
      $region21: #{ensemble_forward.6} parent=11 // pred_check
        %p184 = pneg %p114
      $region22: #{ensemble_forward.6} parent=11 // pred_check_branch
        %186 = sbr.rel (%p184) target = $region24
      $region23: #{ensemble_forward.6} parent=11 // pred_region
        _
      $region24: #{ensemble_forward.6} parent=11 // pred_fallthru
        _
      // Predicated region
      $region25: #{ensemble_forward.6} parent=11 // pred_check
        %p187 = pneg %p135
      $region26: #{ensemble_forward.6} parent=11 // pred_check_branch
        %189 = sbr.rel (%p187) target = $region28
      $region27: #{ensemble_forward.6} parent=11 // pred_region
        _
      $region28: #{ensemble_forward.6} parent=11 // pred_fallthru
        _
    $region12: #{ensemble_forward.6} parent=5 // pred_fallthru
      _
    %p190 = scmp.lt.s32.totalorder %s11, 2
    // Predicated region
    $region29: #{ensemble_forward.6} parent=5 // pred_check
      %p191 = pneg %p190
    $region30: #{ensemble_forward.6} parent=5 // pred_check_branch
      %193 = sbr.rel (%p191) target = $region32
    $region31: #{ensemble_forward.6} parent=5 // pred_region
      // Predicated region
      $region33: #{ensemble_forward.6} parent=31 // pred_check
        %p194 = pneg %p45
      $region34: #{ensemble_forward.6} parent=31 // pred_check_branch
        %196 = sbr.rel (%p194) target = $region36
      $region35: #{ensemble_forward.6} parent=31 // pred_region
        %s197 = smul.u32 8, %s19
        %p198 = scmp.lt.s32.totalorder %s18, 1
        %s199 = scalar_select %p198, %s18, 1
        %p200 = scmp.lt.s32.totalorder %s197, 7
        %s201 = scalar_select %p200, %s197, 7
        %s202 = smul.addr %s199, 8
        %s203 = sadd.s32 %s201, %s202
        %s204 = smul.addr %s203, 4
        %s205 = scalar_lea.vmem %s0, %s204
        %s206 = smul.u32 8, %s19
      $region36: #{ensemble_forward.6} parent=31 // pred_fallthru
        _
    $region32: #{ensemble_forward.6} parent=5 // pred_fallthru
      _
    %p207 = scmp.le.s32.totalorder 1, %s11
    %p208 = scmp.lt.s32.totalorder %s11, 3
    %p209 = pnand %p207, %p208
    %p210 = pneg %p209
    // Predicated region
    $region37: #{ensemble_forward.6} parent=5 // pred_check
      _
    $region38: #{ensemble_forward.6} parent=5 // pred_check_branch
      %212 = sbr.rel (%p209) target = $region40
    $region39: #{ensemble_forward.6} parent=5 // pred_region
      %s213 = ssub.s32 %s11, 1
      %s214 = smul.u32 8, %s21
      %p215 = scmp.lt.s32.totalorder %s20, 1
      %s216 = scalar_select %p215, %s20, 1
      %p217 = scmp.lt.s32.totalorder %s214, 7
      %s218 = scalar_select %p217, %s214, 7
      %s219 = smul.addr %s216, 8
      %s220 = sadd.s32 %s218, %s219
      %s221 = smul.addr %s220, 4
      %s222 = scalar_lea.vmem %s0, %s221
      %p223 = pneg %p51
      %p224 = pneg %p48
      %p225 = pneg %p72
      %p226 = pneg %p69
      %p227 = pneg %p93
      %p228 = pneg %p90
      %p229 = pneg %p114
      %p230 = pneg %p111
      %p231 = pneg %p135
      %p232 = pneg %p132
      %p233 = pneg %p163
      %p234 = pneg %p160
      %p235 = scmp.lt.s32.totalorder %s20, 1
      %s236 = scalar_select %p235, %s20, 1
      %p237 = scmp.lt.s32.totalorder %s21, 0
      %s238 = scalar_select %p237, %s21, 0
      %s239 = sadd.s32 %s238, %s236
      %s240 = smul.addr %s239, 8
      %s241 = scalar_lea.vmem %s5, %s240
      %s242 = smul.u32 8, %s21
      %p243 = scmp.lt.s32.totalorder %s20, 1
      %s244 = scalar_select %p243, %s20, 1
      %p245 = scmp.lt.s32.totalorder %s242, 7
      %s246 = scalar_select %p245, %s242, 7
      %s247 = smul.addr %s244, 8
      %s248 = sadd.s32 %s246, %s247
      %s249 = smul.addr %s248, 4
      %s250 = scalar_lea.vmem %s0, %s249
      %s251 = smul.u32 8, %s21
      %p252 = scmp.lt.s32.totalorder %s20, 1
      %s253 = scalar_select %p252, %s20, 1
      %p254 = scmp.lt.s32.totalorder %s21, 0
      %s255 = scalar_select %p254, %s21, 0
      %s256 = sadd.s32 %s255, %s253
      %s257 = smul.addr %s256, 8
      %s258 = scalar_lea.vmem %s5, %s257
      %v260 = vld [vmem:[%s250] sm:$0xf]
      %v261 = vld [vmem:[%s250 + $0x4] sm:$0xf]
      %v262 = vld [vmem:[%s250 + $0x8] sm:$0xf]
      %v263 = vld [vmem:[%s250 + $0xc] sm:$0xf]
      %v264 = vld [vmem:[%s250 + $0x10] sm:$0xf]
      %v265 = vld [vmem:[%s250 + $0x14] sm:$0xf]
      %v266 = vld [vmem:[%s250 + $0x18] sm:$0xf]
      %v267 = vld [vmem:[%s250 + $0x1c] sm:$0xf]
      %v268 = vld [vmem:[%s1] sm:$0xf]
      %v269 = vld [vmem:[%s1 + $0x4] sm:$0xf]
      %v270 = vld [vmem:[%s1 + $0x8] sm:$0xf]
      %v271 = vld [vmem:[%s1 + $0xc] sm:$0xf]
      %v272 = vld [vmem:[%s1 + $0x10] sm:$0x3]
      %v273 = vld [vmem:[%s2] sm:$0x1]
      %v275 = vlaneseq
      %v276 = vshrl.u32 %v275, 7
      %v277 = vsub.s32 0, %v276
      %v278 = vrot.slane %v273, %v277
      %v288 = vunpack.c.l.b16 %v260
      %v289 = vunpack.c.l.b16 %v261
      %v290 = vunpack.c.l.b16 %v262
      %v291 = vunpack.c.l.b16 %v263
      %v292 = vunpack.c.l.b16 %v264
      %v293 = vunpack.c.l.b16 %v265
      %v294 = vunpack.c.l.b16 %v266
      %v295 = vunpack.c.l.b16 %v267
      %v296 = vpack.c.b16 %v289, %v288
      %v297 = vpack.c.b16 %v291, %v290
      %v298 = vpack.c.b16 %v293, %v292
      %v299 = vpack.c.b16 %v295, %v294
      %v305 = vunpack.c.l.b16 %v268
      %v306 = vunpack.c.l.b16 %v269
      %v307 = vunpack.c.l.b16 %v270
      %v308 = vunpack.c.l.b16 %v271
      %v309 = vunpack.c.l.b16 %v272
      %v310 = vpack.c.b16 %v306, %v305
      %v311 = vpack.c.b16 %v308, %v307
      %v312 = vpack.c.b16 %v309, %v309
      %vm315 = vcmask 293888
      %v317 = vsel %vm315, %v296, 0
      %v320 = vsel %vm315, %v297, 0
      %v323 = vsel %vm315, %v298, 0
      %v326 = vsel %vm315, %v299, 0
      %vm328 = vcmask 1041408
      %v330 = vsel %vm328, %v312, 0
      %332 = vmatprep.subr.bf16.mxu0 0
      %333 = vmatpush1.bf16.msra.mxu0 %v310
      %334 = vmatprep.subr.bf16.mxu0 0
      %335 = vmatpush1.bf16.msra.mxu0 %v311
      %336 = vmatprep.subr.bf16.mxu0 0
      %337 = vmatpush1.bf16.msra.mxu0 %v330
      %338 = vmatprep.subr.bf16.mxu0 0
      %339 = vmatpush1.bf16.msra.mxu0 0
      %340 = vmatprep.subr.bf16.mxu0 0
      %341 = vmatpush1.bf16.msra.mxu0 0
      %342 = vmatprep.subr.bf16.mxu0 0
      %343 = vmatpush1.bf16.msra.mxu0 0
      %344 = vmatprep.subr.bf16.mxu0 0
      %345 = vmatpush1.bf16.msra.mxu0 0
      %346 = vmatprep.subr.bf16.mxu0 0
      %347 = vmatpush1.bf16.msra.mxu0 0
      %348 = vmatprep.subr.bf16.mxu0 0
      %349 = vmatpush1.bf16.msra.mxu0 0
      %350 = vmatprep.subr.bf16.mxu0 0
      %351 = vmatpush1.bf16.msra.mxu0 0
      %352 = vmatprep.subr.bf16.mxu0 0
      %353 = vmatpush1.bf16.msra.mxu0 0
      %354 = vmatprep.subr.bf16.mxu0 0
      %355 = vmatpush1.bf16.msra.mxu0 0
      %356 = vmatprep.subr.bf16.mxu0 0
      %357 = vmatpush1.bf16.msra.mxu0 0
      %358 = vmatprep.subr.bf16.mxu0 0
      %359 = vmatpush1.bf16.msra.mxu0 0
      %360 = vmatprep.subr.bf16.mxu0 0
      %361 = vmatpush1.bf16.msra.mxu0 0
      %362 = vmatprep.subr.bf16.mxu0 0
      %363 = vmatpush1.bf16.msra.mxu0 0
      %364 = vmatprep.mubr.bf16.mxu0 0
      %365 = vmatmul.mubr.bf16.gmra.mrb[0].mxu0 %v317
      %v366 = vpop.f32.mrb[0].mxu0
      %v367 = vadd.f32 %v278, %v366
      %v368 = vpop.f32.mrb[0].mxu0
      %v369 = vpop.f32.mrb[0].mxu0
      %v370 = vadd.f32 %v278, %v369
      %v371 = vpop.f32.mrb[0].mxu0
      %372 = vmatprep.mubr.bf16.mxu0 0
      %373 = vmatmul.mubr.bf16.gmra.mrb[0].mxu0 %v320
      %v374 = vpop.f32.mrb[0].mxu0
      %v375 = vadd.f32 %v278, %v374
      %v376 = vpop.f32.mrb[0].mxu0
      %v377 = vpop.f32.mrb[0].mxu0
      %v378 = vadd.f32 %v278, %v377
      %v379 = vpop.f32.mrb[0].mxu0
      %380 = vmatprep.mubr.bf16.mxu0 0
      %381 = vmatmul.mubr.bf16.gmra.mrb[0].mxu0 %v323
      %v382 = vpop.f32.mrb[0].mxu0
      %v383 = vadd.f32 %v278, %v382
      %v384 = vpop.f32.mrb[0].mxu0
      %v385 = vpop.f32.mrb[0].mxu0
      %v386 = vadd.f32 %v278, %v385
      %v387 = vpop.f32.mrb[0].mxu0
      %388 = vmatprep.mubr.bf16.mxu0 0
      %389 = vmatmul.mubr.bf16.gmra.mrb[0].mxu0 %v326
      %v390 = vpop.f32.mrb[0].mxu0
      %v391 = vadd.f32 %v278, %v390
      %v392 = vpop.f32.mrb[0].mxu0
      %v393 = vpop.f32.mrb[0].mxu0
      %v394 = vadd.f32 %v278, %v393
      %v395 = vpop.f32.mrb[0].mxu0
      %396 = vdwg.mxu0
      %v397 = vmax.f32 %v367, 0.0
      %v398 = vmax.f32 %v370, 0.0
      %v399 = vmax.f32 %v375, 0.0
      %v400 = vmax.f32 %v378, 0.0
      %v401 = vmax.f32 %v383, 0.0
      %v402 = vmax.f32 %v386, 0.0
      %v403 = vmax.f32 %v391, 0.0
      %v404 = vmax.f32 %v394, 0.0
      %v405 = vpack.c.bf16 %v398, %v397
      %v406 = vpack.c.bf16 %v400, %v399
      %v407 = vpack.c.bf16 %v402, %v401
      %v408 = vpack.c.bf16 %v404, %v403
      %v409 = vld [vmem:[%s3] sm:$0xf]
      %v410 = vld [vmem:[%s4] sm:$0xff]
      %412 = vset.pattern.permute.xlu0 0
      %413 = vperm.xlu0 %412, %v410
      %v414 = vpop.permute.xlu0 %413
      %vm416 = vcmask 130048
      %v418 = vsel %vm416, %v409, 0
      %v421 = vsel %vm416, %v405, 0
      %v424 = vsel %vm416, %v406, 0
      %v427 = vsel %vm416, %v407, 0
      %v430 = vsel %vm416, %v408, 0
      %432 = vmatprep.subr.bf16.mxu0 0
      %433 = vmatpush1.bf16.xpose.msra.mxu0 %v421
      %434 = vmatprep.subr.bf16.mxu0 0
      %435 = vmatpush1.bf16.xpose.msra.mxu0 %v424
      %436 = vmatprep.subr.bf16.mxu0 0
      %437 = vmatpush1.bf16.xpose.msra.mxu0 %v427
      %438 = vmatprep.subr.bf16.mxu0 0
      %439 = vmatpush1.bf16.xpose.msra.mxu0 %v430
      %440 = vmatprep.subr.bf16.mxu0 0
      %441 = vmatpush1.bf16.xpose.msra.mxu0 0
      %442 = vmatprep.subr.bf16.mxu0 0
      %443 = vmatpush1.bf16.xpose.msra.mxu0 0
      %444 = vmatprep.subr.bf16.mxu0 0
      %445 = vmatpush1.bf16.xpose.msra.mxu0 0
      %446 = vmatprep.subr.bf16.mxu0 0
      %447 = vmatpush1.bf16.xpose.msra.mxu0 0
      %448 = vmatprep.subr.bf16.mxu0 0
      %449 = vmatpush1.bf16.xpose.msra.mxu0 0
      %450 = vmatprep.subr.bf16.mxu0 0
      %451 = vmatpush1.bf16.xpose.msra.mxu0 0
      %452 = vmatprep.subr.bf16.mxu0 0
      %453 = vmatpush1.bf16.xpose.msra.mxu0 0
      %454 = vmatprep.subr.bf16.mxu0 0
      %455 = vmatpush1.bf16.xpose.msra.mxu0 0
      %456 = vmatprep.subr.bf16.mxu0 0
      %457 = vmatpush1.bf16.xpose.msra.mxu0 0
      %458 = vmatprep.subr.bf16.mxu0 0
      %459 = vmatpush1.bf16.xpose.msra.mxu0 0
      %460 = vmatprep.subr.bf16.mxu0 0
      %461 = vmatpush1.bf16.xpose.msra.mxu0 0
      %462 = vmatprep.subr.bf16.mxu0 0
      %463 = vmatpush1.bf16.xpose.msra.mxu0 0
      %464 = vmatprep.mubr.bf16.mxu0 0
      %465 = vmatmul.mubr.bf16.gmra.mrb[0].mxu0 %v418
      %v466 = vpop.f32.mrb[0].mxu0
      %v467 = vadd.f32 %v414, %v466
      %v468 = vpop.f32.mrb[0].mxu0
      %v469 = vpop.f32.mrb[0].mxu0
      %v470 = vpop.f32.mrb[0].mxu0
      %471 = vdwg.mxu0
      %vm472 = vcmask 523264
      %473 = vst.msk [vmem:[%s258] sm:$0xff] %vm472, %v467
      %p474 = scmp.lt.s32.totalorder %s20, 1
      %s475 = scalar_select %p474, %s20, 1
      %p476 = scmp.lt.s32.totalorder %s21, 0
      %s477 = scalar_select %p476, %s21, 0
      %s478 = sadd.s32 %s477, %s475
      %s479 = smul.addr %s478, 8
      %s480 = scalar_lea.vmem %s5, %s479
      // Predicated region
      $region41: #{ensemble_forward.6} parent=39 // pred_check
        %p481 = pneg %p160
      $region42: #{ensemble_forward.6} parent=39 // pred_check_branch
        %483 = sbr.rel (%p481) target = $region44
      $region43: #{ensemble_forward.6} parent=39 // pred_region
        _
      $region44: #{ensemble_forward.6} parent=39 // pred_fallthru
        _
    $region40: #{ensemble_forward.6} parent=5 // pred_fallthru
      _
    %p484 = scmp.le.s32.totalorder 2, %s11
    // Predicated region
    $region45: #{ensemble_forward.6} parent=5 // pred_check
      %p485 = pneg %p484
    $region46: #{ensemble_forward.6} parent=5 // pred_check_branch
      %487 = sbr.rel (%p485) target = $region48
    $region47: #{ensemble_forward.6} parent=5 // pred_region
      %s488 = ssub.s32 %s11, 2
      // Predicated region
      $region49: #{ensemble_forward.6} parent=47 // pred_check
        %p489 = pneg %p166
      $region50: #{ensemble_forward.6} parent=47 // pred_check_branch
        %491 = sbr.rel (%p489) target = $region52
      $region51: #{ensemble_forward.6} parent=47 // pred_region
        %p492 = scmp.lt.s32.totalorder %s22, 1
        %s493 = scalar_select %p492, %s22, 1
        %p494 = scmp.lt.s32.totalorder %s23, 0
        %s495 = scalar_select %p494, %s23, 0
        %s496 = sadd.s32 %s495, %s493
        %s497 = smul.addr %s496, 8
        %s498 = scalar_lea.vmem %s5, %s497
      $region52: #{ensemble_forward.6} parent=47 // pred_fallthru
        _
    $region48: #{ensemble_forward.6} parent=5 // pred_fallthru
      _
  $region6: #{ensemble_forward.6} parent=0 // loop_footer
    %s15 = sadd.s32 1, %s11
  $region7: #{ensemble_forward.6} parent=0 // loop_footer_branch
    %10 = sbr.rel target = $region3
  $region8: #{ensemble_forward.6} parent=0 // loop_exit
    _

// kernel: ensemble_forward.9
$region0: #{ensemble_forward.9}
  #allocation0 [shape = 'u32[]', space=smem, size = 0x4, offset = 0x4, fixed_abs, tag = 'smem constant byte address 0x4 - core index']
  #allocation1 [shape = 'u32[144,128]{1,0:T(1,128)}', space=vmem, size = 0x12000, scoped, tag = 'internal scratch']
  %s0 = inlined_call_operand.vmem [shape: f32[2,8,8,8], index: 0, kind: input, shape index: {}]
  %s1 = inlined_call_operand.vmem [shape: f32[16,8], index: 1, kind: input, shape index: {}]
  %s2 = inlined_call_operand.vmem [shape: f32[8,16], index: 2, kind: input, shape index: {}]
  %s3 = inlined_call_operand.hbm [shape: f32[2,8,16,16], index: 3, kind: output, shape index: {}]
  %s4 = sld [smem:[#allocation0]]
  $region45: #{ensemble_forward.9} parent=0
    _
  %s6 = ssub.s32 1, %s4
  %s7 = scalar_select 0, %s6, %s4
  $region1: #{ensemble_forward.9} parent=0
    #allocation2 [shape = 'u8[131072]{0}', space=vmem, size = 0x20000, scoped, tag = 'output window, operand 0']
    #allocation3 [shape = 's32[2]{0}', space=sflag, size = 0x8, scoped, tag = 'scoped memory for ensemble_forward.9']
    %8 = vsyncpa [#allocation3], 0
    %s9 = scalar_lea.sflag [#allocation3], 1
    %10 = vsyncpa %s9, 0
    loop: start=0, step=1, limit=4
    $region2: #{ensemble_forward.9} parent=1 // loop_pre_header
      _
    $region3: #{ensemble_forward.9} parent=1 // loop_header
      %s12 = sphi 0, %s16
      %p13 = scmp.ge.s32.totalorder %s12, 4
      %s22 = sphi 0, %s24
      %s25 = sphi 0, %s22
      %s26 = sphi 0, %s25
      %s42 = sphi 0, %s26
      %s46 = sphi 0, %s46
      %s48 = sphi 0, %s46
      %s49 = sphi 0, %s48
      %s63 = sphi 0, %s49
      %s67 = sphi 0, %s67
      %s69 = sphi 0, %s67
      %s70 = sphi 0, %s69
      %s84 = sphi 0, %s70
      %s90 = sphi 0, %s92
      %s93 = sphi 0, %s90
      %s94 = sphi 0, %s93
      %s110 = sphi 0, %s94
    $region4: #{ensemble_forward.9} parent=1 // loop_header_branch
      %15 = sbr.rel (%p13) target = $region8
    $region5: #{ensemble_forward.9} parent=1 // loop_body
      %s17 = ssub.s32 %s12, 1
      %s18 = ssub.s32 %s12, 2
      %s19 = sadd.s32 %s12, 1
      %s20 = ssub.s32 %s12, %s19
      %p21 = scmp.eq.s32.totalorder %s20, 0
      %s23 = sadd.s32 %s22, 1
      %s24 = scalar_select %p21, %s22, %s23
      %p27 = pneg %p21
      %p28 = scmp.eq.s32.totalorder %s12, 1
      %p29 = por %p27, %p28
      %p30 = scmp.ne.s32.totalorder %s22, %s25
      %p31 = scmp.eq.s32.totalorder %s12, 0
      %p32 = por %p30, %p31
      %p33 = scmp.ne.s32.totalorder %s22, %s25
      %p34 = scmp.eq.s32.totalorder %s17, 1
      %p35 = por %p33, %p34
      %p36 = scmp.ne.s32.totalorder %s25, %s26
      %p37 = scmp.eq.s32.totalorder %s17, 0
      %p38 = por %p36, %p37
      %p39 = scmp.ne.s32.totalorder %s25, %s26
      %p40 = scmp.eq.s32.totalorder %s18, 1
      %p41 = por %p39, %p40
      %p43 = scmp.ne.s32.totalorder %s26, %s42
      %p44 = scmp.eq.s32.totalorder %s18, 0
      %p45 = por %p43, %p44
      %s47 = sadd.s32 %s46, 1
      %p50 = scmp.eq.s32.totalorder %s12, 1
      %p51 = scmp.ne.s32.totalorder %s46, %s48
      %p52 = scmp.eq.s32.totalorder %s12, 0
      %p53 = por %p51, %p52
      %p54 = scmp.ne.s32.totalorder %s46, %s48
      %p55 = scmp.eq.s32.totalorder %s17, 1
      %p56 = por %p54, %p55
      %p57 = scmp.ne.s32.totalorder %s48, %s49
      %p58 = scmp.eq.s32.totalorder %s17, 0
      %p59 = por %p57, %p58
      %p60 = scmp.ne.s32.totalorder %s48, %s49
      %p61 = scmp.eq.s32.totalorder %s18, 1
      %p62 = por %p60, %p61
      %p64 = scmp.ne.s32.totalorder %s49, %s63
      %p65 = scmp.eq.s32.totalorder %s18, 0
      %p66 = por %p64, %p65
      %s68 = sadd.s32 %s67, 1
      %p71 = scmp.eq.s32.totalorder %s12, 1
      %p72 = scmp.ne.s32.totalorder %s67, %s69
      %p73 = scmp.eq.s32.totalorder %s12, 0
      %p74 = por %p72, %p73
      %p75 = scmp.ne.s32.totalorder %s67, %s69
      %p76 = scmp.eq.s32.totalorder %s17, 1
      %p77 = por %p75, %p76
      %p78 = scmp.ne.s32.totalorder %s69, %s70
      %p79 = scmp.eq.s32.totalorder %s17, 0
      %p80 = por %p78, %p79
      %p81 = scmp.ne.s32.totalorder %s69, %s70
      %p82 = scmp.eq.s32.totalorder %s18, 1
      %p83 = por %p81, %p82
      %p85 = scmp.ne.s32.totalorder %s70, %s84
      %p86 = scmp.eq.s32.totalorder %s18, 0
      %p87 = por %p85, %p86
      %s88 = ssub.s32 %s12, %s19
      %p89 = scmp.eq.s32.totalorder %s88, 0
      %s91 = sadd.s32 %s90, 1
      %s92 = scalar_select %p89, %s90, %s91
      %p95 = pneg %p89
      %p96 = scmp.eq.s32.totalorder %s12, 1
      %p97 = por %p95, %p96
      %p98 = scmp.ne.s32.totalorder %s90, %s93
      %p99 = scmp.eq.s32.totalorder %s12, 0
      %p100 = por %p98, %p99
      %p101 = scmp.ne.s32.totalorder %s90, %s93
      %p102 = scmp.eq.s32.totalorder %s17, 1
      %p103 = por %p101, %p102
      %p104 = scmp.ne.s32.totalorder %s93, %s94
      %p105 = scmp.eq.s32.totalorder %s17, 0
      %p106 = por %p104, %p105
      %p107 = scmp.ne.s32.totalorder %s93, %s94
      %p108 = scmp.eq.s32.totalorder %s18, 1
      %p109 = por %p107, %p108
      %p111 = scmp.ne.s32.totalorder %s94, %s110
      %p112 = scmp.eq.s32.totalorder %s18, 0
      %p113 = por %p111, %p112
      %p114 = scmp.le.s32.totalorder 1, %s12
      %p115 = scmp.lt.s32.totalorder %s12, 3
      %p116 = pnand %p114, %p115
      %p117 = pneg %p116
      // Predicated region
      $region9: #{ensemble_forward.9} parent=5 // pred_check
        _
      $region10: #{ensemble_forward.9} parent=5 // pred_check_branch
        %119 = sbr.rel (%p116) target = $region12
      $region11: #{ensemble_forward.9} parent=5 // pred_region
        %s120 = ssub.s32 %s12, 1
        // Predicated region
        $region13: #{ensemble_forward.9} parent=11 // pred_check
          %p121 = pneg %p59
        $region14: #{ensemble_forward.9} parent=11 // pred_check_branch
          %123 = sbr.rel (%p121) target = $region16
        $region15: #{ensemble_forward.9} parent=11 // pred_region
          _
        $region16: #{ensemble_forward.9} parent=11 // pred_fallthru
          _
        // Predicated region
        $region17: #{ensemble_forward.9} parent=11 // pred_check
          %p124 = pneg %p80
        $region18: #{ensemble_forward.9} parent=11 // pred_check_branch
          %126 = sbr.rel (%p124) target = $region20
        $region19: #{ensemble_forward.9} parent=11 // pred_region
          _
        $region20: #{ensemble_forward.9} parent=11 // pred_fallthru
          _
      $region12: #{ensemble_forward.9} parent=5 // pred_fallthru
        _
      %p127 = scmp.lt.s32.totalorder %s12, 2
      // Predicated region
      $region21: #{ensemble_forward.9} parent=5 // pred_check
        %p128 = pneg %p127
      $region22: #{ensemble_forward.9} parent=5 // pred_check_branch
        %130 = sbr.rel (%p128) target = $region24
      $region23: #{ensemble_forward.9} parent=5 // pred_region
        // Predicated region
        $region25: #{ensemble_forward.9} parent=23 // pred_check
          %p131 = pneg %p32
        $region26: #{ensemble_forward.9} parent=23 // pred_check_branch
          %133 = sbr.rel (%p131) target = $region28
        $region27: #{ensemble_forward.9} parent=23 // pred_region
          %p134 = scmp.lt.s32.totalorder %s12, 1
          %s135 = scalar_select %p134, %s12, 1
          %s136 = smul.addr %s135, 8
          %s137 = smul.addr %s136, 8
          %s138 = scalar_lea.vmem %s0, %s137
        $region28: #{ensemble_forward.9} parent=23 // pred_fallthru
          _
      $region24: #{ensemble_forward.9} parent=5 // pred_fallthru
        _
      %p139 = scmp.le.s32.totalorder 1, %s12
      %p140 = scmp.lt.s32.totalorder %s12, 3
      %p141 = pnand %p139, %p140
      %p142 = pneg %p141
      // Predicated region
      $region29: #{ensemble_forward.9} parent=5 // pred_check
        _
      $region30: #{ensemble_forward.9} parent=5 // pred_check_branch
        %144 = sbr.rel (%p141) target = $region32
      $region31: #{ensemble_forward.9} parent=5 // pred_region
        %s145 = ssub.s32 %s12, 1
        %p146 = scmp.lt.s32.totalorder %s17, 1
        %s147 = scalar_select %p146, %s17, 1
        %s148 = smul.addr %s147, 8
        %s149 = smul.addr %s148, 8
        %s150 = scalar_lea.vmem %s0, %s149
        %p151 = pneg %p38
        %p152 = pneg %p35
        %p153 = pneg %p59
        %p154 = pneg %p56
        %p155 = pneg %p80
        %p156 = pneg %p77
        %p157 = pneg %p106
        %p158 = pneg %p103
        %s159 = sand.u32 %s93, 1
        %s160 = scalar_lea.sflag [#allocation3], %s159
        %s161 = sand.u32 %s93, 1
        %s162 = smul.addr %s161, 128
        %s163 = scalar_lea.vmem [#allocation2], %s162
        %p164 = scmp.lt.s32.totalorder %s17, 1
        %s165 = scalar_select %p164, %s17, 1
        %s166 = smul.addr %s165, 8
        %s167 = smul.addr %s166, 8
        %s168 = scalar_lea.vmem %s0, %s167
        %v169 = vld [vmem:[%s168] sm:$0xff]
        %v170 = vld [vmem:[%s168 + $0x8] sm:$0xff]
        %v171 = vld [vmem:[%s168 + $0x10] sm:$0xff]
        %v172 = vld [vmem:[%s168 + $0x18] sm:$0xff]
        %v173 = vld [vmem:[%s168 + $0x20] sm:$0xff]
        %v174 = vld [vmem:[%s168 + $0x28] sm:$0xff]
        %v175 = vld [vmem:[%s168 + $0x30] sm:$0xff]
        %v176 = vld [vmem:[%s168 + $0x38] sm:$0xff]
        %v177 = vld [vmem:[%s1] sm:$0xff]
        %v178 = vld [vmem:[%s1 + $0x8] sm:$0xff]
        %v179 = vld [vmem:[%s2] sm:$0xff]
        %vm180 = vcmask 64512
        %v182 = vsel %vm180, %v169, 0
        %v185 = vsel %vm180, %v170, 0
        %v188 = vsel %vm180, %v171, 0
        %v191 = vsel %vm180, %v172, 0
        %v194 = vsel %vm180, %v173, 0
        %v197 = vsel %vm180, %v174, 0
        %v200 = vsel %vm180, %v175, 0
        %v203 = vsel %vm180, %v176, 0
        %205 = vmatprep.subr.mxu0 0.0
        %206 = vmatpush1.msra.mxu0 %v179
        %207 = vmatprep.subr.mxu0 0.0
        %208 = vmatpush1.msra.mxu0 0.0
        %209 = vmatprep.subr.mxu0 0.0
        %210 = vmatpush1.msra.mxu0 0.0
        %211 = vmatprep.subr.mxu0 0.0
        %212 = vmatpush1.msra.mxu0 0.0
        %213 = vmatprep.subr.mxu0 0.0
        %214 = vmatpush1.msra.mxu0 0.0
        %215 = vmatprep.subr.mxu0 0.0
        %216 = vmatpush1.msra.mxu0 0.0
        %217 = vmatprep.subr.mxu0 0.0
        %218 = vmatpush1.msra.mxu0 0.0
        %219 = vmatprep.subr.mxu0 0.0
        %220 = vmatpush1.msra.mxu0 0.0
        %221 = vmatprep.subr.mxu0 0.0
        %222 = vmatpush1.msra.mxu0 0.0
        %223 = vmatprep.subr.mxu0 0.0
        %224 = vmatpush1.msra.mxu0 0.0
        %225 = vmatprep.subr.mxu0 0.0
        %226 = vmatpush1.msra.mxu0 0.0
        %227 = vmatprep.subr.mxu0 0.0
        %228 = vmatpush1.msra.mxu0 0.0
        %229 = vmatprep.subr.mxu0 0.0
        %230 = vmatpush1.msra.mxu0 0.0
        %231 = vmatprep.subr.mxu0 0.0
        %232 = vmatpush1.msra.mxu0 0.0
        %233 = vmatprep.subr.mxu0 0.0
        %234 = vmatpush1.msra.mxu0 0.0
        %235 = vmatprep.subr.mxu0 0.0
        %236 = vmatpush1.msra.mxu0 0.0
        %237 = vmatprep.subr.mxu0 0.0
        %238 = vmatpush1.msra.mxu0 0.0
        %239 = vmatprep.subr.mxu0 0.0
        %240 = vmatpush1.msra.mxu0 0.0
        %241 = vmatprep.subr.mxu0 0.0
        %242 = vmatpush1.msra.mxu0 0.0
        %243 = vmatprep.subr.mxu0 0.0
        %244 = vmatpush1.msra.mxu0 0.0
        %245 = vmatprep.subr.mxu0 0.0
        %246 = vmatpush1.msra.mxu0 0.0
        %247 = vmatprep.subr.mxu0 0.0
        %248 = vmatpush1.msra.mxu0 0.0
        %249 = vmatprep.subr.mxu0 0.0
        %250 = vmatpush1.msra.mxu0 0.0
        %251 = vmatprep.subr.mxu0 0.0
        %252 = vmatpush1.msra.mxu0 0.0
        %253 = vmatprep.subr.mxu0 0.0
        %254 = vmatpush1.msra.mxu0 0.0
        %255 = vmatprep.subr.mxu0 0.0
        %256 = vmatpush1.msra.mxu0 0.0
        %257 = vmatprep.subr.mxu0 0.0
        %258 = vmatpush1.msra.mxu0 0.0
        %259 = vmatprep.subr.mxu0 0.0
        %260 = vmatpush1.msra.mxu0 0.0
        %261 = vmatprep.subr.mxu0 0.0
        %262 = vmatpush1.msra.mxu0 0.0
        %263 = vmatprep.subr.mxu0 0.0
        %264 = vmatpush1.msra.mxu0 0.0
        %265 = vmatprep.subr.mxu0 0.0
        %266 = vmatpush1.msra.mxu0 0.0
        %267 = vmatprep.subr.mxu0 0.0
        %268 = vmatpush1.msra.mxu0 0.0
        %269 = vmatprep.mubr.f32.mxu0 0.0
        %270 = vmatmul.mubr.f32.gmra.mrb[0].mxu0 %v182
        %v271 = vpop.f32.mrb[0].mxu0
        %v272 = vadd.f32 0.0, %v271
        %v273 = vpop.f32.mrb[0].mxu0
        %274 = vmatprep.mubr.f32.mxu0 0.0
        %275 = vmatmul.mubr.f32.gmra.mrb[0].mxu0 %v185
        %v276 = vpop.f32.mrb[0].mxu0
        %v277 = vadd.f32 0.0, %v276
        %v278 = vpop.f32.mrb[0].mxu0
        %279 = vmatprep.mubr.f32.mxu0 0.0
        %280 = vmatmul.mubr.f32.gmra.mrb[0].mxu0 %v188
        %v281 = vpop.f32.mrb[0].mxu0
        %v282 = vadd.f32 0.0, %v281
        %v283 = vpop.f32.mrb[0].mxu0
        %284 = vmatprep.mubr.f32.mxu0 0.0
        %285 = vmatmul.mubr.f32.gmra.mrb[0].mxu0 %v191
        %v286 = vpop.f32.mrb[0].mxu0
        %v287 = vadd.f32 0.0, %v286
        %v288 = vpop.f32.mrb[0].mxu0
        %289 = vmatprep.mubr.f32.mxu0 0.0
        %290 = vmatmul.mubr.f32.gmra.mrb[0].mxu0 %v194
        %v291 = vpop.f32.mrb[0].mxu0
        %v292 = vadd.f32 0.0, %v291
        %v293 = vpop.f32.mrb[0].mxu0
        %294 = vmatprep.mubr.f32.mxu0 0.0
        %295 = vmatmul.mubr.f32.gmra.mrb[0].mxu0 %v197
        %v296 = vpop.f32.mrb[0].mxu0
        %v297 = vadd.f32 0.0, %v296
        %v298 = vpop.f32.mrb[0].mxu0
        %299 = vmatprep.mubr.f32.mxu0 0.0
        %300 = vmatmul.mubr.f32.gmra.mrb[0].mxu0 %v200
        %v301 = vpop.f32.mrb[0].mxu0
        %v302 = vadd.f32 0.0, %v301
        %v303 = vpop.f32.mrb[0].mxu0
        %304 = vmatprep.mubr.f32.mxu0 0.0
        %305 = vmatmul.mubr.f32.gmra.mrb[0].mxu0 %v203
        %v306 = vpop.f32.mrb[0].mxu0
        %v307 = vadd.f32 0.0, %v306
        %v308 = vpop.f32.mrb[0].mxu0
        %309 = vdwg.mxu0
        %v311 = vsel %vm180, %v177, 0
        %v314 = vsel %vm180, %v178, 0
        %316 = vmatprep.subr.mxu0 0.0
        %317 = vmatpush1.msra.mxu0 %v272
        %318 = vmatprep.subr.mxu0 0.0
        %319 = vmatpush1.msra.mxu0 0.0
        %320 = vmatprep.subr.mxu0 0.0
        %321 = vmatpush1.msra.mxu0 0.0
        %322 = vmatprep.subr.mxu0 0.0
        %323 = vmatpush1.msra.mxu0 0.0
        %324 = vmatprep.subr.mxu0 0.0
        %325 = vmatpush1.msra.mxu0 0.0
        %326 = vmatprep.subr.mxu0 0.0
        %327 = vmatpush1.msra.mxu0 0.0
        %328 = vmatprep.subr.mxu0 0.0
        %329 = vmatpush1.msra.mxu0 0.0
        %330 = vmatprep.subr.mxu0 0.0
        %331 = vmatpush1.msra.mxu0 0.0
        %332 = vmatprep.subr.mxu0 0.0
        %333 = vmatpush1.msra.mxu0 0.0
        %334 = vmatprep.subr.mxu0 0.0
        %335 = vmatpush1.msra.mxu0 0.0
        %336 = vmatprep.subr.mxu0 0.0
        %337 = vmatpush1.msra.mxu0 0.0
        %338 = vmatprep.subr.mxu0 0.0
        %339 = vmatpush1.msra.mxu0 0.0
        %340 = vmatprep.subr.mxu0 0.0
        %341 = vmatpush1.msra.mxu0 0.0
        %342 = vmatprep.subr.mxu0 0.0
        %343 = vmatpush1.msra.mxu0 0.0
        %344 = vmatprep.subr.mxu0 0.0
        %345 = vmatpush1.msra.mxu0 0.0
        %346 = vmatprep.subr.mxu0 0.0
        %347 = vmatpush1.msra.mxu0 0.0
        %348 = vmatprep.subr.mxu0 0.0
        %349 = vmatpush1.msra.mxu0 0.0
        %350 = vmatprep.subr.mxu0 0.0
        %351 = vmatpush1.msra.mxu0 0.0
        %352 = vmatprep.subr.mxu0 0.0
        %353 = vmatpush1.msra.mxu0 0.0
        %354 = vmatprep.subr.mxu0 0.0
        %355 = vmatpush1.msra.mxu0 0.0
        %356 = vmatprep.subr.mxu0 0.0
        %357 = vmatpush1.msra.mxu0 0.0
        %358 = vmatprep.subr.mxu0 0.0
        %359 = vmatpush1.msra.mxu0 0.0
        %360 = vmatprep.subr.mxu0 0.0
        %361 = vmatpush1.msra.mxu0 0.0
        %362 = vmatprep.subr.mxu0 0.0
        %363 = vmatpush1.msra.mxu0 0.0
        %364 = vmatprep.subr.mxu0 0.0
        %365 = vmatpush1.msra.mxu0 0.0
        %366 = vmatprep.subr.mxu0 0.0
        %367 = vmatpush1.msra.mxu0 0.0
        %368 = vmatprep.subr.mxu0 0.0
        %369 = vmatpush1.msra.mxu0 0.0
        %370 = vmatprep.subr.mxu0 0.0
        %371 = vmatpush1.msra.mxu0 0.0
        %372 = vmatprep.subr.mxu0 0.0
        %373 = vmatpush1.msra.mxu0 0.0
        %374 = vmatprep.subr.mxu0 0.0
        %375 = vmatpush1.msra.mxu0 0.0
        %376 = vmatprep.subr.mxu0 0.0
        %377 = vmatpush1.msra.mxu0 0.0
        %378 = vmatprep.subr.mxu0 0.0
        %379 = vmatpush1.msra.mxu0 0.0
        %380 = vmatprep.mubr.f32.mxu0 0.0
        %381 = vmatmul.mubr.f32.gmra.mrb[0].mxu0 %v311
        %v382 = vpop.f32.mrb[0].mxu0
        %v383 = vadd.f32 0.0, %v382
        %v384 = vpop.f32.mrb[0].mxu0
        %385 = vmatprep.mubr.f32.mxu0 0.0
        %386 = vmatmul.mubr.f32.gmra.mrb[0].mxu0 %v314
        %v387 = vpop.f32.mrb[0].mxu0
        %v388 = vadd.f32 0.0, %v387
        %v389 = vpop.f32.mrb[0].mxu0
        %390 = vdwg.mxu0
        %391 = vmatprep.subr.mxu0 0.0
        %392 = vmatpush1.msra.mxu0 %v277
        %393 = vmatprep.subr.mxu0 0.0
        %394 = vmatpush1.msra.mxu0 0.0
        %395 = vmatprep.subr.mxu0 0.0
        %396 = vmatpush1.msra.mxu0 0.0
        %397 = vmatprep.subr.mxu0 0.0
        %398 = vmatpush1.msra.mxu0 0.0
        %399 = vmatprep.subr.mxu0 0.0
        %400 = vmatpush1.msra.mxu0 0.0
        %401 = vmatprep.subr.mxu0 0.0
        %402 = vmatpush1.msra.mxu0 0.0
        %403 = vmatprep.subr.mxu0 0.0
        %404 = vmatpush1.msra.mxu0 0.0
        %405 = vmatprep.subr.mxu0 0.0
        %406 = vmatpush1.msra.mxu0 0.0
        %407 = vmatprep.subr.mxu0 0.0
        %408 = vmatpush1.msra.mxu0 0.0
        %409 = vmatprep.subr.mxu0 0.0
        %410 = vmatpush1.msra.mxu0 0.0
        %411 = vmatprep.subr.mxu0 0.0
        %412 = vmatpush1.msra.mxu0 0.0
        %413 = vmatprep.subr.mxu0 0.0
        %414 = vmatpush1.msra.mxu0 0.0
        %415 = vmatprep.subr.mxu0 0.0
        %416 = vmatpush1.msra.mxu0 0.0
        %417 = vmatprep.subr.mxu0 0.0
        %418 = vmatpush1.msra.mxu0 0.0
        %419 = vmatprep.subr.mxu0 0.0
        %420 = vmatpush1.msra.mxu0 0.0
        %421 = vmatprep.subr.mxu0 0.0
        %422 = vmatpush1.msra.mxu0 0.0
        %423 = vmatprep.subr.mxu0 0.0
        %424 = vmatpush1.msra.mxu0 0.0
        %425 = vmatprep.subr.mxu0 0.0
        %426 = vmatpush1.msra.mxu0 0.0
        %427 = vmatprep.subr.mxu0 0.0
        %428 = vmatpush1.msra.mxu0 0.0
        %429 = vmatprep.subr.mxu0 0.0
        %430 = vmatpush1.msra.mxu0 0.0
        %431 = vmatprep.subr.mxu0 0.0
        %432 = vmatpush1.msra.mxu0 0.0
        %433 = vmatprep.subr.mxu0 0.0
        %434 = vmatpush1.msra.mxu0 0.0
        %435 = vmatprep.subr.mxu0 0.0
        %436 = vmatpush1.msra.mxu0 0.0
        %437 = vmatprep.subr.mxu0 0.0
        %438 = vmatpush1.msra.mxu0 0.0
        %439 = vmatprep.subr.mxu0 0.0
        %440 = vmatpush1.msra.mxu0 0.0
        %441 = vmatprep.subr.mxu0 0.0
        %442 = vmatpush1.msra.mxu0 0.0
        %443 = vmatprep.subr.mxu0 0.0
        %444 = vmatpush1.msra.mxu0 0.0
        %445 = vmatprep.subr.mxu0 0.0
        %446 = vmatpush1.msra.mxu0 0.0
        %447 = vmatprep.subr.mxu0 0.0
        %448 = vmatpush1.msra.mxu0 0.0
        %449 = vmatprep.subr.mxu0 0.0
        %450 = vmatpush1.msra.mxu0 0.0
        %451 = vmatprep.subr.mxu0 0.0
        %452 = vmatpush1.msra.mxu0 0.0
        %453 = vmatprep.subr.mxu0 0.0
        %454 = vmatpush1.msra.mxu0 0.0
        %455 = vmatprep.mubr.f32.mxu0 0.0
        %456 = vmatmul.mubr.f32.gmra.mrb[0].mxu0 %v311
        %v457 = vpop.f32.mrb[0].mxu0
        %v458 = vadd.f32 0.0, %v457
        %v459 = vpop.f32.mrb[0].mxu0
        %460 = vmatprep.mubr.f32.mxu0 0.0
        %461 = vmatmul.mubr.f32.gmra.mrb[0].mxu0 %v314
        %v462 = vpop.f32.mrb[0].mxu0
        %v463 = vadd.f32 0.0, %v462
        %v464 = vpop.f32.mrb[0].mxu0
        %465 = vdwg.mxu0
        %466 = vmatprep.subr.mxu0 0.0
        %467 = vmatpush1.msra.mxu0 %v282
        %468 = vmatprep.subr.mxu0 0.0
        %469 = vmatpush1.msra.mxu0 0.0
        %470 = vmatprep.subr.mxu0 0.0
        %471 = vmatpush1.msra.mxu0 0.0
        %472 = vmatprep.subr.mxu0 0.0
        %473 = vmatpush1.msra.mxu0 0.0
        %474 = vmatprep.subr.mxu0 0.0
        %475 = vmatpush1.msra.mxu0 0.0
        %476 = vmatprep.subr.mxu0 0.0
        %477 = vmatpush1.msra.mxu0 0.0
        %478 = vmatprep.subr.mxu0 0.0
        %479 = vmatpush1.msra.mxu0 0.0
        %480 = vmatprep.subr.mxu0 0.0
        %481 = vmatpush1.msra.mxu0 0.0
        %482 = vmatprep.subr.mxu0 0.0
        %483 = vmatpush1.msra.mxu0 0.0
        %484 = vmatprep.subr.mxu0 0.0
        %485 = vmatpush1.msra.mxu0 0.0
        %486 = vmatprep.subr.mxu0 0.0
        %487 = vmatpush1.msra.mxu0 0.0
        %488 = vmatprep.subr.mxu0 0.0
        %489 = vmatpush1.msra.mxu0 0.0
        %490 = vmatprep.subr.mxu0 0.0
        %491 = vmatpush1.msra.mxu0 0.0
        %492 = vmatprep.subr.mxu0 0.0
        %493 = vmatpush1.msra.mxu0 0.0
        %494 = vmatprep.subr.mxu0 0.0
        %495 = vmatpush1.msra.mxu0 0.0
        %496 = vmatprep.subr.mxu0 0.0
        %497 = vmatpush1.msra.mxu0 0.0
        %498 = vmatprep.subr.mxu0 0.0
        %499 = vmatpush1.msra.mxu0 0.0
        %500 = vmatprep.subr.mxu0 0.0
        %501 = vmatpush1.msra.mxu0 0.0
        %502 = vmatprep.subr.mxu0 0.0
        %503 = vmatpush1.msra.mxu0 0.0
        %504 = vmatprep.subr.mxu0 0.0
        %505 = vmatpush1.msra.mxu0 0.0
        %506 = vmatprep.subr.mxu0 0.0
        %507 = vmatpush1.msra.mxu0 0.0
        %508 = vmatprep.subr.mxu0 0.0
        %509 = vmatpush1.msra.mxu0 0.0
        %510 = vmatprep.subr.mxu0 0.0
        %511 = vmatpush1.msra.mxu0 0.0
        %512 = vmatprep.subr.mxu0 0.0
        %513 = vmatpush1.msra.mxu0 0.0
        %514 = vmatprep.subr.mxu0 0.0
        %515 = vmatpush1.msra.mxu0 0.0
        %516 = vmatprep.subr.mxu0 0.0
        %517 = vmatpush1.msra.mxu0 0.0
        %518 = vmatprep.subr.mxu0 0.0
        %519 = vmatpush1.msra.mxu0 0.0
        %520 = vmatprep.subr.mxu0 0.0
        %521 = vmatpush1.msra.mxu0 0.0
        %522 = vmatprep.subr.mxu0 0.0
        %523 = vmatpush1.msra.mxu0 0.0
        %524 = vmatprep.subr.mxu0 0.0
        %525 = vmatpush1.msra.mxu0 0.0
        %526 = vmatprep.subr.mxu0 0.0
        %527 = vmatpush1.msra.mxu0 0.0
        %528 = vmatprep.subr.mxu0 0.0
        %529 = vmatpush1.msra.mxu0 0.0
        %530 = vmatprep.mubr.f32.mxu0 0.0
        %531 = vmatmul.mubr.f32.gmra.mrb[0].mxu0 %v311
        %v532 = vpop.f32.mrb[0].mxu0
        %v533 = vadd.f32 0.0, %v532
        %v534 = vpop.f32.mrb[0].mxu0
        %535 = vmatprep.mubr.f32.mxu0 0.0
        %536 = vmatmul.mubr.f32.gmra.mrb[0].mxu0 %v314
        %v537 = vpop.f32.mrb[0].mxu0
        %v538 = vadd.f32 0.0, %v537
        %v539 = vpop.f32.mrb[0].mxu0
        %540 = vdwg.mxu0
        %541 = vmatprep.subr.mxu0 0.0
        %542 = vmatpush1.msra.mxu0 %v287
        %543 = vmatprep.subr.mxu0 0.0
        %544 = vmatpush1.msra.mxu0 0.0
        %545 = vmatprep.subr.mxu0 0.0
        %546 = vmatpush1.msra.mxu0 0.0
        %547 = vmatprep.subr.mxu0 0.0
        %548 = vmatpush1.msra.mxu0 0.0
        %549 = vmatprep.subr.mxu0 0.0
        %550 = vmatpush1.msra.mxu0 0.0
        %551 = vmatprep.subr.mxu0 0.0
        %552 = vmatpush1.msra.mxu0 0.0
        %553 = vmatprep.subr.mxu0 0.0
        %554 = vmatpush1.msra.mxu0 0.0
        %555 = vmatprep.subr.mxu0 0.0
        %556 = vmatpush1.msra.mxu0 0.0
        %557 = vmatprep.subr.mxu0 0.0
        %558 = vmatpush1.msra.mxu0 0.0
        %559 = vmatprep.subr.mxu0 0.0
        %560 = vmatpush1.msra.mxu0 0.0
        %561 = vmatprep.subr.mxu0 0.0
        %562 = vmatpush1.msra.mxu0 0.0
        %563 = vmatprep.subr.mxu0 0.0
        %564 = vmatpush1.msra.mxu0 0.0
        %565 = vmatprep.subr.mxu0 0.0
        %566 = vmatpush1.msra.mxu0 0.0
        %567 = vmatprep.subr.mxu0 0.0
        %568 = vmatpush1.msra.mxu0 0.0
        %569 = vmatprep.subr.mxu0 0.0
        %570 = vmatpush1.msra.mxu0 0.0
        %571 = vmatprep.subr.mxu0 0.0
        %572 = vmatpush1.msra.mxu0 0.0
        %573 = vmatprep.subr.mxu0 0.0
        %574 = vmatpush1.msra.mxu0 0.0
        %575 = vmatprep.subr.mxu0 0.0
        %576 = vmatpush1.msra.mxu0 0.0
        %577 = vmatprep.subr.mxu0 0.0
        %578 = vmatpush1.msra.mxu0 0.0
        %579 = vmatprep.subr.mxu0 0.0
        %580 = vmatpush1.msra.mxu0 0.0
        %581 = vmatprep.subr.mxu0 0.0
        %582 = vmatpush1.msra.mxu0 0.0
        %583 = vmatprep.subr.mxu0 0.0
        %584 = vmatpush1.msra.mxu0 0.0
        %585 = vmatprep.subr.mxu0 0.0
        %586 = vmatpush1.msra.mxu0 0.0
        %587 = vmatprep.subr.mxu0 0.0
        %588 = vmatpush1.msra.mxu0 0.0
        %589 = vmatprep.subr.mxu0 0.0
        %590 = vmatpush1.msra.mxu0 0.0
        %591 = vmatprep.subr.mxu0 0.0
        %592 = vmatpush1.msra.mxu0 0.0
        %593 = vmatprep.subr.mxu0 0.0
        %594 = vmatpush1.msra.mxu0 0.0
        %595 = vmatprep.subr.mxu0 0.0
        %596 = vmatpush1.msra.mxu0 0.0
        %597 = vmatprep.subr.mxu0 0.0
        %598 = vmatpush1.msra.mxu0 0.0
        %599 = vmatprep.subr.mxu0 0.0
        %600 = vmatpush1.msra.mxu0 0.0
        %601 = vmatprep.subr.mxu0 0.0
        %602 = vmatpush1.msra.mxu0 0.0
        %603 = vmatprep.subr.mxu0 0.0
        %604 = vmatpush1.msra.mxu0 0.0
        %605 = vmatprep.mubr.f32.mxu0 0.0
        %606 = vmatmul.mubr.f32.gmra.mrb[0].mxu0 %v311
        %v607 = vpop.f32.mrb[0].mxu0
        %v608 = vadd.f32 0.0, %v607
        %v609 = vpop.f32.mrb[0].mxu0
        %610 = vmatprep.mubr.f32.mxu0 0.0
        %611 = vmatmul.mubr.f32.gmra.mrb[0].mxu0 %v314
        %v612 = vpop.f32.mrb[0].mxu0
        %v613 = vadd.f32 0.0, %v612
        %v614 = vpop.f32.mrb[0].mxu0
        %615 = vdwg.mxu0
        %616 = vmatprep.subr.mxu0 0.0
        %617 = vmatpush1.msra.mxu0 %v292
        %618 = vmatprep.subr.mxu0 0.0
        %619 = vmatpush1.msra.mxu0 0.0
        %620 = vmatprep.subr.mxu0 0.0
        %621 = vmatpush1.msra.mxu0 0.0
        %622 = vmatprep.subr.mxu0 0.0
        %623 = vmatpush1.msra.mxu0 0.0
        %624 = vmatprep.subr.mxu0 0.0
        %625 = vmatpush1.msra.mxu0 0.0
        %626 = vmatprep.subr.mxu0 0.0
        %627 = vmatpush1.msra.mxu0 0.0
        %628 = vmatprep.subr.mxu0 0.0
        %629 = vmatpush1.msra.mxu0 0.0
        %630 = vmatprep.subr.mxu0 0.0
        %631 = vmatpush1.msra.mxu0 0.0
        %632 = vmatprep.subr.mxu0 0.0
        %633 = vmatpush1.msra.mxu0 0.0
        %634 = vmatprep.subr.mxu0 0.0
        %635 = vmatpush1.msra.mxu0 0.0
        %636 = vmatprep.subr.mxu0 0.0
        %637 = vmatpush1.msra.mxu0 0.0
        %638 = vmatprep.subr.mxu0 0.0
        %639 = vmatpush1.msra.mxu0 0.0
        %640 = vmatprep.subr.mxu0 0.0
        %641 = vmatpush1.msra.mxu0 0.0
        %642 = vmatprep.subr.mxu0 0.0
        %643 = vmatpush1.msra.mxu0 0.0
        %644 = vmatprep.subr.mxu0 0.0
        %645 = vmatpush1.msra.mxu0 0.0
        %646 = vmatprep.subr.mxu0 0.0
        %647 = vmatpush1.msra.mxu0 0.0
        %648 = vmatprep.subr.mxu0 0.0
        %649 = vmatpush1.msra.mxu0 0.0
        %650 = vmatprep.subr.mxu0 0.0
        %651 = vmatpush1.msra.mxu0 0.0
        %652 = vmatprep.subr.mxu0 0.0
        %653 = vmatpush1.msra.mxu0 0.0
        %654 = vmatprep.subr.mxu0 0.0
        %655 = vmatpush1.msra.mxu0 0.0
        %656 = vmatprep.subr.mxu0 0.0
        %657 = vmatpush1.msra.mxu0 0.0
        %658 = vmatprep.subr.mxu0 0.0
        %659 = vmatpush1.msra.mxu0 0.0
        %660 = vmatprep.subr.mxu0 0.0
        %661 = vmatpush1.msra.mxu0 0.0
        %662 = vmatprep.subr.mxu0 0.0
        %663 = vmatpush1.msra.mxu0 0.0
        %664 = vmatprep.subr.mxu0 0.0
        %665 = vmatpush1.msra.mxu0 0.0
        %666 = vmatprep.subr.mxu0 0.0
        %667 = vmatpush1.msra.mxu0 0.0
        %668 = vmatprep.subr.mxu0 0.0
        %669 = vmatpush1.msra.mxu0 0.0
        %670 = vmatprep.subr.mxu0 0.0
        %671 = vmatpush1.msra.mxu0 0.0
        %672 = vmatprep.subr.mxu0 0.0
        %673 = vmatpush1.msra.mxu0 0.0
        %674 = vmatprep.subr.mxu0 0.0
        %675 = vmatpush1.msra.mxu0 0.0
        %676 = vmatprep.subr.mxu0 0.0
        %677 = vmatpush1.msra.mxu0 0.0
        %678 = vmatprep.subr.mxu0 0.0
        %679 = vmatpush1.msra.mxu0 0.0
        %680 = vmatprep.mubr.f32.mxu0 0.0
        %681 = vmatmul.mubr.f32.gmra.mrb[0].mxu0 %v311
        %v682 = vpop.f32.mrb[0].mxu0
        %v683 = vadd.f32 0.0, %v682
        %v684 = vpop.f32.mrb[0].mxu0
        %685 = vmatprep.mubr.f32.mxu0 0.0
        %686 = vmatmul.mubr.f32.gmra.mrb[0].mxu0 %v314
        %v687 = vpop.f32.mrb[0].mxu0
        %v688 = vadd.f32 0.0, %v687
        %v689 = vpop.f32.mrb[0].mxu0
        %690 = vdwg.mxu0
        %691 = vmatprep.subr.mxu0 0.0
        %692 = vmatpush1.msra.mxu0 %v297
        %693 = vmatprep.subr.mxu0 0.0
        %694 = vmatpush1.msra.mxu0 0.0
        %695 = vmatprep.subr.mxu0 0.0
        %696 = vmatpush1.msra.mxu0 0.0
        %697 = vmatprep.subr.mxu0 0.0
        %698 = vmatpush1.msra.mxu0 0.0
        %699 = vmatprep.subr.mxu0 0.0
        %700 = vmatpush1.msra.mxu0 0.0
        %701 = vmatprep.subr.mxu0 0.0
        %702 = vmatpush1.msra.mxu0 0.0
        %703 = vmatprep.subr.mxu0 0.0
        %704 = vmatpush1.msra.mxu0 0.0
        %705 = vmatprep.subr.mxu0 0.0
        %706 = vmatpush1.msra.mxu0 0.0
        %707 = vmatprep.subr.mxu0 0.0
        %708 = vmatpush1.msra.mxu0 0.0
        %709 = vmatprep.subr.mxu0 0.0
        %710 = vmatpush1.msra.mxu0 0.0
        %711 = vmatprep.subr.mxu0 0.0
        %712 = vmatpush1.msra.mxu0 0.0
        %713 = vmatprep.subr.mxu0 0.0
        %714 = vmatpush1.msra.mxu0 0.0
        %715 = vmatprep.subr.mxu0 0.0
        %716 = vmatpush1.msra.mxu0 0.0
        %717 = vmatprep.subr.mxu0 0.0
        %718 = vmatpush1.msra.mxu0 0.0
        %719 = vmatprep.subr.mxu0 0.0
        %720 = vmatpush1.msra.mxu0 0.0
        %721 = vmatprep.subr.mxu0 0.0
        %722 = vmatpush1.msra.mxu0 0.0
        %723 = vmatprep.subr.mxu0 0.0
        %724 = vmatpush1.msra.mxu0 0.0
        %725 = vmatprep.subr.mxu0 0.0
        %726 = vmatpush1.msra.mxu0 0.0
        %727 = vmatprep.subr.mxu0 0.0
        %728 = vmatpush1.msra.mxu0 0.0
        %729 = vmatprep.subr.mxu0 0.0
        %730 = vmatpush1.msra.mxu0 0.0
        %731 = vmatprep.subr.mxu0 0.0
        %732 = vmatpush1.msra.mxu0 0.0
        %733 = vmatprep.subr.mxu0 0.0
        %734 = vmatpush1.msra.mxu0 0.0
        %735 = vmatprep.subr.mxu0 0.0
        %736 = vmatpush1.msra.mxu0 0.0
        %737 = vmatprep.subr.mxu0 0.0
        %738 = vmatpush1.msra.mxu0 0.0
        %739 = vmatprep.subr.mxu0 0.0
        %740 = vmatpush1.msra.mxu0 0.0
        %741 = vmatprep.subr.mxu0 0.0
        %742 = vmatpush1.msra.mxu0 0.0
        %743 = vmatprep.subr.mxu0 0.0
        %744 = vmatpush1.msra.mxu0 0.0
        %745 = vmatprep.subr.mxu0 0.0
        %746 = vmatpush1.msra.mxu0 0.0
        %747 = vmatprep.subr.mxu0 0.0
        %748 = vmatpush1.msra.mxu0 0.0
        %749 = vmatprep.subr.mxu0 0.0
        %750 = vmatpush1.msra.mxu0 0.0
        %751 = vmatprep.subr.mxu0 0.0
        %752 = vmatpush1.msra.mxu0 0.0
        %753 = vmatprep.subr.mxu0 0.0
        %754 = vmatpush1.msra.mxu0 0.0
        %755 = vmatprep.mubr.f32.mxu0 0.0
        %756 = vmatmul.mubr.f32.gmra.mrb[0].mxu0 %v311
        %v757 = vpop.f32.mrb[0].mxu0
        %v758 = vadd.f32 0.0, %v757
        %v759 = vpop.f32.mrb[0].mxu0
        %760 = vmatprep.mubr.f32.mxu0 0.0
        %761 = vmatmul.mubr.f32.gmra.mrb[0].mxu0 %v314
        %v762 = vpop.f32.mrb[0].mxu0
        %v763 = vadd.f32 0.0, %v762
        %v764 = vpop.f32.mrb[0].mxu0
        %765 = vdwg.mxu0
        %766 = vmatprep.subr.mxu0 0.0
        %767 = vmatpush1.msra.mxu0 %v302
        %768 = vmatprep.subr.mxu0 0.0
        %769 = vmatpush1.msra.mxu0 0.0
        %770 = vmatprep.subr.mxu0 0.0
        %771 = vmatpush1.msra.mxu0 0.0
        %772 = vmatprep.subr.mxu0 0.0
        %773 = vmatpush1.msra.mxu0 0.0
        %774 = vmatprep.subr.mxu0 0.0
        %775 = vmatpush1.msra.mxu0 0.0
        %776 = vmatprep.subr.mxu0 0.0
        %777 = vmatpush1.msra.mxu0 0.0
        %778 = vmatprep.subr.mxu0 0.0
        %779 = vmatpush1.msra.mxu0 0.0
        %780 = vmatprep.subr.mxu0 0.0
        %781 = vmatpush1.msra.mxu0 0.0
        %782 = vmatprep.subr.mxu0 0.0
        %783 = vmatpush1.msra.mxu0 0.0
        %784 = vmatprep.subr.mxu0 0.0
        %785 = vmatpush1.msra.mxu0 0.0
        %786 = vmatprep.subr.mxu0 0.0
        %787 = vmatpush1.msra.mxu0 0.0
        %788 = vmatprep.subr.mxu0 0.0
        %789 = vmatpush1.msra.mxu0 0.0
        %790 = vmatprep.subr.mxu0 0.0
        %791 = vmatpush1.msra.mxu0 0.0
        %792 = vmatprep.subr.mxu0 0.0
        %793 = vmatpush1.msra.mxu0 0.0
        %794 = vmatprep.subr.mxu0 0.0
        %795 = vmatpush1.msra.mxu0 0.0
        %796 = vmatprep.subr.mxu0 0.0
        %797 = vmatpush1.msra.mxu0 0.0
        %798 = vmatprep.subr.mxu0 0.0
        %799 = vmatpush1.msra.mxu0 0.0
        %800 = vmatprep.subr.mxu0 0.0
        %801 = vmatpush1.msra.mxu0 0.0
        %802 = vmatprep.subr.mxu0 0.0
        %803 = vmatpush1.msra.mxu0 0.0
        %804 = vmatprep.subr.mxu0 0.0
        %805 = vmatpush1.msra.mxu0 0.0
        %806 = vmatprep.subr.mxu0 0.0
        %807 = vmatpush1.msra.mxu0 0.0
        %808 = vmatprep.subr.mxu0 0.0
        %809 = vmatpush1.msra.mxu0 0.0
        %810 = vmatprep.subr.mxu0 0.0
        %811 = vmatpush1.msra.mxu0 0.0
        %812 = vmatprep.subr.mxu0 0.0
        %813 = vmatpush1.msra.mxu0 0.0
        %814 = vmatprep.subr.mxu0 0.0
        %815 = vmatpush1.msra.mxu0 0.0
        %816 = vmatprep.subr.mxu0 0.0
        %817 = vmatpush1.msra.mxu0 0.0
        %818 = vmatprep.subr.mxu0 0.0
        %819 = vmatpush1.msra.mxu0 0.0
        %820 = vmatprep.subr.mxu0 0.0
        %821 = vmatpush1.msra.mxu0 0.0
        %822 = vmatprep.subr.mxu0 0.0
        %823 = vmatpush1.msra.mxu0 0.0
        %824 = vmatprep.subr.mxu0 0.0
        %825 = vmatpush1.msra.mxu0 0.0
        %826 = vmatprep.subr.mxu0 0.0
        %827 = vmatpush1.msra.mxu0 0.0
        %828 = vmatprep.subr.mxu0 0.0
        %829 = vmatpush1.msra.mxu0 0.0
        %830 = vmatprep.mubr.f32.mxu0 0.0
        %831 = vmatmul.mubr.f32.gmra.mrb[0].mxu0 %v311
        %v832 = vpop.f32.mrb[0].mxu0
        %v833 = vadd.f32 0.0, %v832
        %v834 = vpop.f32.mrb[0].mxu0
        %835 = vmatprep.mubr.f32.mxu0 0.0
        %836 = vmatmul.mubr.f32.gmra.mrb[0].mxu0 %v314
        %v837 = vpop.f32.mrb[0].mxu0
        %v838 = vadd.f32 0.0, %v837
        %v839 = vpop.f32.mrb[0].mxu0
        %840 = vdwg.mxu0
        %841 = vmatprep.subr.mxu0 0.0
        %842 = vmatpush1.msra.mxu0 %v307
        %843 = vmatprep.subr.mxu0 0.0
        %844 = vmatpush1.msra.mxu0 0.0
        %845 = vmatprep.subr.mxu0 0.0
        %846 = vmatpush1.msra.mxu0 0.0
        %847 = vmatprep.subr.mxu0 0.0
        %848 = vmatpush1.msra.mxu0 0.0
        %849 = vmatprep.subr.mxu0 0.0
        %850 = vmatpush1.msra.mxu0 0.0
        %851 = vmatprep.subr.mxu0 0.0
        %852 = vmatpush1.msra.mxu0 0.0
        %853 = vmatprep.subr.mxu0 0.0
        %854 = vmatpush1.msra.mxu0 0.0
        %855 = vmatprep.subr.mxu0 0.0
        %856 = vmatpush1.msra.mxu0 0.0
        %857 = vmatprep.subr.mxu0 0.0
        %858 = vmatpush1.msra.mxu0 0.0
        %859 = vmatprep.subr.mxu0 0.0
        %860 = vmatpush1.msra.mxu0 0.0
        %861 = vmatprep.subr.mxu0 0.0
        %862 = vmatpush1.msra.mxu0 0.0
        %863 = vmatprep.subr.mxu0 0.0
        %864 = vmatpush1.msra.mxu0 0.0
        %865 = vmatprep.subr.mxu0 0.0
        %866 = vmatpush1.msra.mxu0 0.0
        %867 = vmatprep.subr.mxu0 0.0
        %868 = vmatpush1.msra.mxu0 0.0
        %869 = vmatprep.subr.mxu0 0.0
        %870 = vmatpush1.msra.mxu0 0.0
        %871 = vmatprep.subr.mxu0 0.0
        %872 = vmatpush1.msra.mxu0 0.0
        %873 = vmatprep.subr.mxu0 0.0
        %874 = vmatpush1.msra.mxu0 0.0
        %875 = vmatprep.subr.mxu0 0.0
        %876 = vmatpush1.msra.mxu0 0.0
        %877 = vmatprep.subr.mxu0 0.0
        %878 = vmatpush1.msra.mxu0 0.0
        %879 = vmatprep.subr.mxu0 0.0
        %880 = vmatpush1.msra.mxu0 0.0
        %881 = vmatprep.subr.mxu0 0.0
        %882 = vmatpush1.msra.mxu0 0.0
        %883 = vmatprep.subr.mxu0 0.0
        %884 = vmatpush1.msra.mxu0 0.0
        %885 = vmatprep.subr.mxu0 0.0
        %886 = vmatpush1.msra.mxu0 0.0
        %887 = vmatprep.subr.mxu0 0.0
        %888 = vmatpush1.msra.mxu0 0.0
        %889 = vmatprep.subr.mxu0 0.0
        %890 = vmatpush1.msra.mxu0 0.0
        %891 = vmatprep.subr.mxu0 0.0
        %892 = vmatpush1.msra.mxu0 0.0
        %893 = vmatprep.subr.mxu0 0.0
        %894 = vmatpush1.msra.mxu0 0.0
        %895 = vmatprep.subr.mxu0 0.0
        %896 = vmatpush1.msra.mxu0 0.0
        %897 = vmatprep.subr.mxu0 0.0
        %898 = vmatpush1.msra.mxu0 0.0
        %899 = vmatprep.subr.mxu0 0.0
        %900 = vmatpush1.msra.mxu0 0.0
        %901 = vmatprep.subr.mxu0 0.0
        %902 = vmatpush1.msra.mxu0 0.0
        %903 = vmatprep.subr.mxu0 0.0
        %904 = vmatpush1.msra.mxu0 0.0
        %905 = vmatprep.mubr.f32.mxu0 0.0
        %906 = vmatmul.mubr.f32.gmra.mrb[0].mxu0 %v311
        %v907 = vpop.f32.mrb[0].mxu0
        %v908 = vadd.f32 0.0, %v907
        %v909 = vpop.f32.mrb[0].mxu0
        %910 = vmatprep.mubr.f32.mxu0 0.0
        %911 = vmatmul.mubr.f32.gmra.mrb[0].mxu0 %v314
        %v912 = vpop.f32.mrb[0].mxu0
        %v913 = vadd.f32 0.0, %v912
        %v914 = vpop.f32.mrb[0].mxu0
        %915 = vdwg.mxu0
        %vm916 = vcmask 130048
        %917 = vst.msk [vmem:[%s163] sm:$0xff] %vm916, %v383
        %918 = vst.msk [vmem:[%s163 + $0x8] sm:$0xff] %vm916, %v388
        %919 = vst.msk [vmem:[%s163 + $0x10] sm:$0xff] %vm916, %v458
        %920 = vst.msk [vmem:[%s163 + $0x18] sm:$0xff] %vm916, %v463
        %921 = vst.msk [vmem:[%s163 + $0x20] sm:$0xff] %vm916, %v533
        %922 = vst.msk [vmem:[%s163 + $0x28] sm:$0xff] %vm916, %v538
        %923 = vst.msk [vmem:[%s163 + $0x30] sm:$0xff] %vm916, %v608
        %924 = vst.msk [vmem:[%s163 + $0x38] sm:$0xff] %vm916, %v613
        %925 = vst.msk [vmem:[%s163 + $0x40] sm:$0xff] %vm916, %v683
        %926 = vst.msk [vmem:[%s163 + $0x48] sm:$0xff] %vm916, %v688
        %927 = vst.msk [vmem:[%s163 + $0x50] sm:$0xff] %vm916, %v758
        %928 = vst.msk [vmem:[%s163 + $0x58] sm:$0xff] %vm916, %v763
        %929 = vst.msk [vmem:[%s163 + $0x60] sm:$0xff] %vm916, %v833
        %930 = vst.msk [vmem:[%s163 + $0x68] sm:$0xff] %vm916, %v838
        %931 = vst.msk [vmem:[%s163 + $0x70] sm:$0xff] %vm916, %v908
        %932 = vst.msk [vmem:[%s163 + $0x78] sm:$0xff] %vm916, %v913
        %s933 = sand.u32 %s93, 1
        %s934 = scalar_lea.sflag [#allocation3], %s933
        %s935 = sand.u32 %s93, 1
        %s936 = smul.addr %s935, 128
        %s937 = scalar_lea.vmem [#allocation2], %s936
        // Predicated region
        $region33: #{ensemble_forward.9} parent=31 // pred_check
          %p938 = pneg %p103
        $region34: #{ensemble_forward.9} parent=31 // pred_check_branch
          %940 = sbr.rel (%p938) target = $region36
        $region35: #{ensemble_forward.9} parent=31 // pred_region
          %s942 = ssub.s32 2048, 2048
          %943 = vsyncadd %s934, %s942
          %s944 = smul.addr %s17, 16
          %s945 = smul.addr %s944, 128
          %s946 = scalar_lea.hbm %s3, %s945
          %s947 = sshll.u32 %s937, 4
          %s948 = int_to_ptr.vmem [resolvable:$true] %s947
          %953 = dma.vmem_to_hbm [thread:$0]  %s948, 2048, %s946, %s934, 128, 128, 8
        $region36: #{ensemble_forward.9} parent=31 // pred_fallthru
          _
      $region32: #{ensemble_forward.9} parent=5 // pred_fallthru
        _
      %p954 = scmp.le.s32.totalorder 2, %s12
      // Predicated region
      $region37: #{ensemble_forward.9} parent=5 // pred_check
        %p955 = pneg %p954
      $region38: #{ensemble_forward.9} parent=5 // pred_check_branch
        %957 = sbr.rel (%p955) target = $region40
      $region39: #{ensemble_forward.9} parent=5 // pred_region
        %s958 = ssub.s32 %s12, 2
        // Predicated region
        $region41: #{ensemble_forward.9} parent=39 // pred_check
          %p959 = pneg %p109
        $region42: #{ensemble_forward.9} parent=39 // pred_check_branch
          %961 = sbr.rel (%p959) target = $region44
        $region43: #{ensemble_forward.9} parent=39 // pred_region
          %s962 = sand.u32 %s94, 1
          %s963 = scalar_lea.sflag [#allocation3], %s962
          %s964 = sand.u32 %s94, 1
          %s965 = smul.addr %s964, 128
          %s966 = scalar_lea.vmem [#allocation2], %s965
          %967 = dma.done %s963, 2048
        $region44: #{ensemble_forward.9} parent=39 // pred_fallthru
          _
      $region40: #{ensemble_forward.9} parent=5 // pred_fallthru
        _
    $region6: #{ensemble_forward.9} parent=1 // loop_footer
      %s16 = sadd.s32 1, %s12
    $region7: #{ensemble_forward.9} parent=1 // loop_footer_branch
      %11 = sbr.rel target = $region3
    $region8: #{ensemble_forward.9} parent=1 // loop_exit
      _
    %968 = vsyncpa [#allocation3], 1
    %s969 = scalar_lea.sflag [#allocation3], 1
    %970 = vsyncpa %s969, 1

// kernel: ensemble_forward.5
$region0: #{ensemble_forward.5}
  #allocation0 [shape = 'u32[]', space=smem, size = 0x4, offset = 0x4, fixed_abs, tag = 'smem constant byte address 0x4 - core index']
  #allocation1 [shape = 'u32[144,128]{1,0:T(1,128)}', space=vmem, size = 0x12000, scoped, tag = 'internal scratch']
  %s0 = inlined_call_operand.vmem [shape: bf16[2,16,36], index: 0, kind: input, shape index: {}]
  %s1 = inlined_call_operand.vmem [shape: bf16[36,8], index: 1, kind: input, shape index: {}]
  %s2 = inlined_call_operand.vmem [shape: f32[1,8], index: 2, kind: input, shape index: {}]
  %s3 = inlined_call_operand.vmem [shape: bf16[8,8], index: 3, kind: input, shape index: {}]
  %s4 = inlined_call_operand.vmem [shape: f32[8,1], index: 4, kind: input, shape index: {}]
  %s5 = inlined_call_operand.vmem [shape: f32[2,8,16], index: 5, kind: output, shape index: {}]
  %s6 = sld [smem:[#allocation0]]
  $region53: #{ensemble_forward.5} parent=0
    _
  %s8 = ssub.s32 1, %s6
  %s9 = scalar_select 0, %s8, %s6
  loop: start=0, step=1, limit=4
  $region2: #{ensemble_forward.5} parent=0 // loop_pre_header
    _
  $region3: #{ensemble_forward.5} parent=0 // loop_header
    %s11 = sphi 0, %s15
    %p12 = scmp.ge.s32.totalorder %s11, 4
    %s18 = sphi 0, %s30
    %s19 = sphi 0, %s26
    %s20 = sphi 0, %s18
    %s21 = sphi 0, %s19
    %s22 = sphi 0, %s20
    %s23 = sphi 0, %s21
    %s35 = sphi 0, %s37
    %s38 = sphi 0, %s35
    %s39 = sphi 0, %s38
    %s55 = sphi 0, %s39
    %s59 = sphi 0, %s59
    %s61 = sphi 0, %s59
    %s62 = sphi 0, %s61
    %s76 = sphi 0, %s62
    %s80 = sphi 0, %s80
    %s82 = sphi 0, %s80
    %s83 = sphi 0, %s82
    %s97 = sphi 0, %s83
    %s101 = sphi 0, %s101
    %s103 = sphi 0, %s101
    %s104 = sphi 0, %s103
    %s118 = sphi 0, %s104
    %s122 = sphi 0, %s122
    %s124 = sphi 0, %s122
    %s125 = sphi 0, %s124
    %s139 = sphi 0, %s125
    %s147 = sphi 0, %s149
    %s150 = sphi 0, %s147
    %s151 = sphi 0, %s150
    %s167 = sphi 0, %s151
  $region4: #{ensemble_forward.5} parent=0 // loop_header_branch
    %14 = sbr.rel (%p12) target = $region8
  $region5: #{ensemble_forward.5} parent=0 // loop_body
    %s16 = ssub.s32 %s11, 1
    %s17 = ssub.s32 %s11, 2
    %s24 = sadd.s32 1, %s19
    %p25 = scmp.ge.s32.totalorder %s24, 1
    %s26 = scalar_select %p25, 0, %s24
    %s27 = sadd.s32 1, %s18
    %s28 = scalar_select %p25, %s27, %s18
    %p29 = scmp.ge.s32.totalorder %s28, 2
    %s30 = scalar_select %p29, 0, %s28
    %s31 = ssub.s32 %s18, %s30
    %s32 = ssub.s32 %s19, %s26
    %s33 = sor.u32 %s31, %s32
    %p34 = scmp.eq.s32.totalorder %s33, 0
    %s36 = sadd.s32 %s35, 1
    %s37 = scalar_select %p34, %s35, %s36
    %p40 = pneg %p34
    %p41 = scmp.eq.s32.totalorder %s11, 1
    %p42 = por %p40, %p41
    %p43 = scmp.ne.s32.totalorder %s35, %s38
    %p44 = scmp.eq.s32.totalorder %s11, 0
    %p45 = por %p43, %p44
    %p46 = scmp.ne.s32.totalorder %s35, %s38
    %p47 = scmp.eq.s32.totalorder %s16, 1
    %p48 = por %p46, %p47
    %p49 = scmp.ne.s32.totalorder %s38, %s39
    %p50 = scmp.eq.s32.totalorder %s16, 0
    %p51 = por %p49, %p50
    %p52 = scmp.ne.s32.totalorder %s38, %s39
    %p53 = scmp.eq.s32.totalorder %s17, 1
    %p54 = por %p52, %p53
    %p56 = scmp.ne.s32.totalorder %s39, %s55
    %p57 = scmp.eq.s32.totalorder %s17, 0
    %p58 = por %p56, %p57
    %s60 = sadd.s32 %s59, 1
    %p63 = scmp.eq.s32.totalorder %s11, 1
    %p64 = scmp.ne.s32.totalorder %s59, %s61
    %p65 = scmp.eq.s32.totalorder %s11, 0
    %p66 = por %p64, %p65
    %p67 = scmp.ne.s32.totalorder %s59, %s61
    %p68 = scmp.eq.s32.totalorder %s16, 1
    %p69 = por %p67, %p68
    %p70 = scmp.ne.s32.totalorder %s61, %s62
    %p71 = scmp.eq.s32.totalorder %s16, 0
    %p72 = por %p70, %p71
    %p73 = scmp.ne.s32.totalorder %s61, %s62
    %p74 = scmp.eq.s32.totalorder %s17, 1
    %p75 = por %p73, %p74
    %p77 = scmp.ne.s32.totalorder %s62, %s76
    %p78 = scmp.eq.s32.totalorder %s17, 0
    %p79 = por %p77, %p78
    %s81 = sadd.s32 %s80, 1
    %p84 = scmp.eq.s32.totalorder %s11, 1
    %p85 = scmp.ne.s32.totalorder %s80, %s82
    %p86 = scmp.eq.s32.totalorder %s11, 0
    %p87 = por %p85, %p86
    %p88 = scmp.ne.s32.totalorder %s80, %s82
    %p89 = scmp.eq.s32.totalorder %s16, 1
    %p90 = por %p88, %p89
    %p91 = scmp.ne.s32.totalorder %s82, %s83
    %p92 = scmp.eq.s32.totalorder %s16, 0
    %p93 = por %p91, %p92
    %p94 = scmp.ne.s32.totalorder %s82, %s83
    %p95 = scmp.eq.s32.totalorder %s17, 1
    %p96 = por %p94, %p95
    %p98 = scmp.ne.s32.totalorder %s83, %s97
    %p99 = scmp.eq.s32.totalorder %s17, 0
    %p100 = por %p98, %p99
    %s102 = sadd.s32 %s101, 1
    %p105 = scmp.eq.s32.totalorder %s11, 1
    %p106 = scmp.ne.s32.totalorder %s101, %s103
    %p107 = scmp.eq.s32.totalorder %s11, 0
    %p108 = por %p106, %p107
    %p109 = scmp.ne.s32.totalorder %s101, %s103
    %p110 = scmp.eq.s32.totalorder %s16, 1
    %p111 = por %p109, %p110
    %p112 = scmp.ne.s32.totalorder %s103, %s104
    %p113 = scmp.eq.s32.totalorder %s16, 0
    %p114 = por %p112, %p113
    %p115 = scmp.ne.s32.totalorder %s103, %s104
    %p116 = scmp.eq.s32.totalorder %s17, 1
    %p117 = por %p115, %p116
    %p119 = scmp.ne.s32.totalorder %s104, %s118
    %p120 = scmp.eq.s32.totalorder %s17, 0
    %p121 = por %p119, %p120
    %s123 = sadd.s32 %s122, 1
    %p126 = scmp.eq.s32.totalorder %s11, 1
    %p127 = scmp.ne.s32.totalorder %s122, %s124
    %p128 = scmp.eq.s32.totalorder %s11, 0
    %p129 = por %p127, %p128
    %p130 = scmp.ne.s32.totalorder %s122, %s124
    %p131 = scmp.eq.s32.totalorder %s16, 1
    %p132 = por %p130, %p131
    %p133 = scmp.ne.s32.totalorder %s124, %s125
    %p134 = scmp.eq.s32.totalorder %s16, 0
    %p135 = por %p133, %p134
    %p136 = scmp.ne.s32.totalorder %s124, %s125
    %p137 = scmp.eq.s32.totalorder %s17, 1
    %p138 = por %p136, %p137
    %p140 = scmp.ne.s32.totalorder %s125, %s139
    %p141 = scmp.eq.s32.totalorder %s17, 0
    %p142 = por %p140, %p141
    %s143 = ssub.s32 %s18, %s30
    %s144 = ssub.s32 %s19, %s26
    %s145 = sor.u32 %s143, %s144
    %p146 = scmp.eq.s32.totalorder %s145, 0
    %s148 = sadd.s32 %s147, 1
    %s149 = scalar_select %p146, %s147, %s148
    %p152 = pneg %p146
    %p153 = scmp.eq.s32.totalorder %s11, 1
    %p154 = por %p152, %p153
    %p155 = scmp.ne.s32.totalorder %s147, %s150
    %p156 = scmp.eq.s32.totalorder %s11, 0
    %p157 = por %p155, %p156
    %p158 = scmp.ne.s32.totalorder %s147, %s150
    %p159 = scmp.eq.s32.totalorder %s16, 1
    %p160 = por %p158, %p159
    %p161 = scmp.ne.s32.totalorder %s150, %s151
    %p162 = scmp.eq.s32.totalorder %s16, 0
    %p163 = por %p161, %p162
    %p164 = scmp.ne.s32.totalorder %s150, %s151
    %p165 = scmp.eq.s32.totalorder %s17, 1
    %p166 = por %p164, %p165
    %p168 = scmp.ne.s32.totalorder %s151, %s167
    %p169 = scmp.eq.s32.totalorder %s17, 0
    %p170 = por %p168, %p169
    %p171 = scmp.le.s32.totalorder 1, %s11
    %p172 = scmp.lt.s32.totalorder %s11, 3
    %p173 = pnand %p171, %p172
    %p174 = pneg %p173
    // Predicated region
    $region9: #{ensemble_forward.5} parent=5 // pred_check
      _
    $region10: #{ensemble_forward.5} parent=5 // pred_check_branch
      %176 = sbr.rel (%p173) target = $region12
    $region11: #{ensemble_forward.5} parent=5 // pred_region
      %s177 = ssub.s32 %s11, 1
      // Predicated region
      $region13: #{ensemble_forward.5} parent=11 // pred_check
        %p178 = pneg %p72
      $region14: #{ensemble_forward.5} parent=11 // pred_check_branch
        %180 = sbr.rel (%p178) target = $region16
      $region15: #{ensemble_forward.5} parent=11 // pred_region
        _
      $region16: #{ensemble_forward.5} parent=11 // pred_fallthru
        _
      // Predicated region
      $region17: #{ensemble_forward.5} parent=11 // pred_check
        %p181 = pneg %p93
      $region18: #{ensemble_forward.5} parent=11 // pred_check_branch
        %183 = sbr.rel (%p181) target = $region20
      $region19: #{ensemble_forward.5} parent=11 // pred_region
        _
      $region20: #{ensemble_forward.5} parent=11 // pred_fallthru
        _
      // Predicated region
      $region21: #{ensemble_forward.5} parent=11 // pred_check
        %p184 = pneg %p114
      $region22: #{ensemble_forward.5} parent=11 // pred_check_branch
        %186 = sbr.rel (%p184) target = $region24
      $region23: #{ensemble_forward.5} parent=11 // pred_region
        _
      $region24: #{ensemble_forward.5} parent=11 // pred_fallthru
        _
      // Predicated region
      $region25: #{ensemble_forward.5} parent=11 // pred_check
        %p187 = pneg %p135
      $region26: #{ensemble_forward.5} parent=11 // pred_check_branch
        %189 = sbr.rel (%p187) target = $region28
      $region27: #{ensemble_forward.5} parent=11 // pred_region
        _
      $region28: #{ensemble_forward.5} parent=11 // pred_fallthru
        _
    $region12: #{ensemble_forward.5} parent=5 // pred_fallthru
      _
    %p190 = scmp.lt.s32.totalorder %s11, 2
    // Predicated region
    $region29: #{ensemble_forward.5} parent=5 // pred_check
      %p191 = pneg %p190
    $region30: #{ensemble_forward.5} parent=5 // pred_check_branch
      %193 = sbr.rel (%p191) target = $region32
    $region31: #{ensemble_forward.5} parent=5 // pred_region
      // Predicated region
      $region33: #{ensemble_forward.5} parent=31 // pred_check
        %p194 = pneg %p45
      $region34: #{ensemble_forward.5} parent=31 // pred_check_branch
        %196 = sbr.rel (%p194) target = $region36
      $region35: #{ensemble_forward.5} parent=31 // pred_region
        %s197 = smul.u32 2, %s19
        %p198 = scmp.lt.s32.totalorder %s18, 1
        %s199 = scalar_select %p198, %s18, 1
        %p200 = scmp.lt.s32.totalorder %s197, 1
        %s201 = scalar_select %p200, %s197, 1
        %s202 = smul.addr %s199, 2
        %s203 = sadd.s32 %s201, %s202
        %s204 = smul.addr %s203, 4
        %s205 = scalar_lea.vmem %s0, %s204
        %s206 = smul.u32 2, %s19
      $region36: #{ensemble_forward.5} parent=31 // pred_fallthru
        _
    $region32: #{ensemble_forward.5} parent=5 // pred_fallthru
      _
    %p207 = scmp.le.s32.totalorder 1, %s11
    %p208 = scmp.lt.s32.totalorder %s11, 3
    %p209 = pnand %p207, %p208
    %p210 = pneg %p209
    // Predicated region
    $region37: #{ensemble_forward.5} parent=5 // pred_check
      _
    $region38: #{ensemble_forward.5} parent=5 // pred_check_branch
      %212 = sbr.rel (%p209) target = $region40
    $region39: #{ensemble_forward.5} parent=5 // pred_region
      %s213 = ssub.s32 %s11, 1
      %s214 = smul.u32 2, %s21
      %p215 = scmp.lt.s32.totalorder %s20, 1
      %s216 = scalar_select %p215, %s20, 1
      %p217 = scmp.lt.s32.totalorder %s214, 1
      %s218 = scalar_select %p217, %s214, 1
      %s219 = smul.addr %s216, 2
      %s220 = sadd.s32 %s218, %s219
      %s221 = smul.addr %s220, 4
      %s222 = scalar_lea.vmem %s0, %s221
      %p223 = pneg %p51
      %p224 = pneg %p48
      %p225 = pneg %p72
      %p226 = pneg %p69
      %p227 = pneg %p93
      %p228 = pneg %p90
      %p229 = pneg %p114
      %p230 = pneg %p111
      %p231 = pneg %p135
      %p232 = pneg %p132
      %p233 = pneg %p163
      %p234 = pneg %p160
      %p235 = scmp.lt.s32.totalorder %s20, 1
      %s236 = scalar_select %p235, %s20, 1
      %p237 = scmp.lt.s32.totalorder %s21, 0
      %s238 = scalar_select %p237, %s21, 0
      %s239 = sadd.s32 %s238, %s236
      %s240 = smul.addr %s239, 8
      %s241 = scalar_lea.vmem %s5, %s240
      %s242 = smul.u32 2, %s21
      %p243 = scmp.lt.s32.totalorder %s20, 1
      %s244 = scalar_select %p243, %s20, 1
      %p245 = scmp.lt.s32.totalorder %s242, 1
      %s246 = scalar_select %p245, %s242, 1
      %s247 = smul.addr %s244, 2
      %s248 = sadd.s32 %s246, %s247
      %s249 = smul.addr %s248, 4
      %s250 = scalar_lea.vmem %s0, %s249
      %s251 = smul.u32 2, %s21
      %p252 = scmp.lt.s32.totalorder %s20, 1
      %s253 = scalar_select %p252, %s20, 1
      %p254 = scmp.lt.s32.totalorder %s21, 0
      %s255 = scalar_select %p254, %s21, 0
      %s256 = sadd.s32 %s255, %s253
      %s257 = smul.addr %s256, 8
      %s258 = scalar_lea.vmem %s5, %s257
      %v260 = vld [vmem:[%s250] sm:$0xf]
      %v261 = vld [vmem:[%s250 + $0x4] sm:$0xf]
      %v262 = vld [vmem:[%s1] sm:$0xf]
      %v263 = vld [vmem:[%s1 + $0x4] sm:$0xf]
      %v264 = vld [vmem:[%s1 + $0x8] sm:$0xf]
      %v265 = vld [vmem:[%s1 + $0xc] sm:$0xf]
      %v266 = vld [vmem:[%s1 + $0x10] sm:$0x3]
      %v267 = vld [vmem:[%s2] sm:$0x1]
      %v269 = vlaneseq
      %v270 = vshrl.u32 %v269, 7
      %v271 = vsub.s32 0, %v270
      %v272 = vrot.slane %v267, %v271
      %v276 = vunpack.c.l.b16 %v260
      %v277 = vunpack.c.l.b16 %v261
      %v278 = vpack.c.b16 %v277, %v276
      %v284 = vunpack.c.l.b16 %v262
      %v285 = vunpack.c.l.b16 %v263
      %v286 = vunpack.c.l.b16 %v264
      %v287 = vunpack.c.l.b16 %v265
      %v288 = vunpack.c.l.b16 %v266
      %v289 = vpack.c.b16 %v285, %v284
      %v290 = vpack.c.b16 %v287, %v286
      %v291 = vpack.c.b16 %v288, %v288
      %vm294 = vcmask 293888
      %v296 = vsel %vm294, %v278, 0
      %vm298 = vcmask 1041408
      %v300 = vsel %vm298, %v291, 0
      %302 = vmatprep.subr.bf16.mxu0 0
      %303 = vmatpush1.bf16.msra.mxu0 %v289
      %304 = vmatprep.subr.bf16.mxu0 0
      %305 = vmatpush1.bf16.msra.mxu0 %v290
      %306 = vmatprep.subr.bf16.mxu0 0
      %307 = vmatpush1.bf16.msra.mxu0 %v300
      %308 = vmatprep.subr.bf16.mxu0 0
      %309 = vmatpush1.bf16.msra.mxu0 0
      %310 = vmatprep.subr.bf16.mxu0 0
      %311 = vmatpush1.bf16.msra.mxu0 0
      %312 = vmatprep.subr.bf16.mxu0 0
      %313 = vmatpush1.bf16.msra.mxu0 0
      %314 = vmatprep.subr.bf16.mxu0 0
      %315 = vmatpush1.bf16.msra.mxu0 0
      %316 = vmatprep.subr.bf16.mxu0 0
      %317 = vmatpush1.bf16.msra.mxu0 0
      %318 = vmatprep.subr.bf16.mxu0 0
      %319 = vmatpush1.bf16.msra.mxu0 0
      %320 = vmatprep.subr.bf16.mxu0 0
      %321 = vmatpush1.bf16.msra.mxu0 0
      %322 = vmatprep.subr.bf16.mxu0 0
      %323 = vmatpush1.bf16.msra.mxu0 0
      %324 = vmatprep.subr.bf16.mxu0 0
      %325 = vmatpush1.bf16.msra.mxu0 0
      %326 = vmatprep.subr.bf16.mxu0 0
      %327 = vmatpush1.bf16.msra.mxu0 0
      %328 = vmatprep.subr.bf16.mxu0 0
      %329 = vmatpush1.bf16.msra.mxu0 0
      %330 = vmatprep.subr.bf16.mxu0 0
      %331 = vmatpush1.bf16.msra.mxu0 0
      %332 = vmatprep.subr.bf16.mxu0 0
      %333 = vmatpush1.bf16.msra.mxu0 0
      %334 = vmatprep.mubr.bf16.mxu0 0
      %335 = vmatmul.mubr.bf16.gmra.mrb[0].mxu0 %v296
      %v336 = vpop.f32.mrb[0].mxu0
      %v337 = vadd.f32 %v272, %v336
      %v338 = vpop.f32.mrb[0].mxu0
      %v339 = vpop.f32.mrb[0].mxu0
      %v340 = vadd.f32 %v272, %v339
      %v341 = vpop.f32.mrb[0].mxu0
      %342 = vdwg.mxu0
      %v343 = vmax.f32 %v337, 0.0
      %v344 = vmax.f32 %v340, 0.0
      %v345 = vpack.c.bf16 %v344, %v343
      %v346 = vld [vmem:[%s3] sm:$0xf]
      %v347 = vld [vmem:[%s4] sm:$0xff]
      %349 = vset.pattern.permute.xlu0 0
      %350 = vperm.xlu0 %349, %v347
      %v351 = vpop.permute.xlu0 %350
      %vm353 = vcmask 64512
      %v355 = vsel %vm353, %v346, 0
      %v358 = vsel %vm353, %v345, 0
      %360 = vmatprep.subr.bf16.mxu0 0
      %361 = vmatpush1.bf16.xpose.msra.mxu0 %v358
      %362 = vmatprep.subr.bf16.mxu0 0
      %363 = vmatpush1.bf16.xpose.msra.mxu0 0
      %364 = vmatprep.subr.bf16.mxu0 0
      %365 = vmatpush1.bf16.xpose.msra.mxu0 0
      %366 = vmatprep.subr.bf16.mxu0 0
      %367 = vmatpush1.bf16.xpose.msra.mxu0 0
      %368 = vmatprep.subr.bf16.mxu0 0
      %369 = vmatpush1.bf16.xpose.msra.mxu0 0
      %370 = vmatprep.subr.bf16.mxu0 0
      %371 = vmatpush1.bf16.xpose.msra.mxu0 0
      %372 = vmatprep.subr.bf16.mxu0 0
      %373 = vmatpush1.bf16.xpose.msra.mxu0 0
      %374 = vmatprep.subr.bf16.mxu0 0
      %375 = vmatpush1.bf16.xpose.msra.mxu0 0
      %376 = vmatprep.subr.bf16.mxu0 0
      %377 = vmatpush1.bf16.xpose.msra.mxu0 0
      %378 = vmatprep.subr.bf16.mxu0 0
      %379 = vmatpush1.bf16.xpose.msra.mxu0 0
      %380 = vmatprep.subr.bf16.mxu0 0
      %381 = vmatpush1.bf16.xpose.msra.mxu0 0
      %382 = vmatprep.subr.bf16.mxu0 0
      %383 = vmatpush1.bf16.xpose.msra.mxu0 0
      %384 = vmatprep.subr.bf16.mxu0 0
      %385 = vmatpush1.bf16.xpose.msra.mxu0 0
      %386 = vmatprep.subr.bf16.mxu0 0
      %387 = vmatpush1.bf16.xpose.msra.mxu0 0
      %388 = vmatprep.subr.bf16.mxu0 0
      %389 = vmatpush1.bf16.xpose.msra.mxu0 0
      %390 = vmatprep.subr.bf16.mxu0 0
      %391 = vmatpush1.bf16.xpose.msra.mxu0 0
      %392 = vmatprep.mubr.bf16.mxu0 0
      %393 = vmatmul.mubr.bf16.gmra.mrb[0].mxu0 %v355
      %v394 = vpop.f32.mrb[0].mxu0
      %v395 = vadd.f32 %v351, %v394
      %v396 = vpop.f32.mrb[0].mxu0
      %v397 = vpop.f32.mrb[0].mxu0
      %v398 = vpop.f32.mrb[0].mxu0
      %399 = vdwg.mxu0
      %vm400 = vcmask 130048
      %401 = vst.msk [vmem:[%s258] sm:$0xff] %vm400, %v395
      %p402 = scmp.lt.s32.totalorder %s20, 1
      %s403 = scalar_select %p402, %s20, 1
      %p404 = scmp.lt.s32.totalorder %s21, 0
      %s405 = scalar_select %p404, %s21, 0
      %s406 = sadd.s32 %s405, %s403
      %s407 = smul.addr %s406, 8
      %s408 = scalar_lea.vmem %s5, %s407
      // Predicated region
      $region41: #{ensemble_forward.5} parent=39 // pred_check
        %p409 = pneg %p160
      $region42: #{ensemble_forward.5} parent=39 // pred_check_branch
        %411 = sbr.rel (%p409) target = $region44
      $region43: #{ensemble_forward.5} parent=39 // pred_region
        _
      $region44: #{ensemble_forward.5} parent=39 // pred_fallthru
        _
    $region40: #{ensemble_forward.5} parent=5 // pred_fallthru
      _
    %p412 = scmp.le.s32.totalorder 2, %s11
    // Predicated region
    $region45: #{ensemble_forward.5} parent=5 // pred_check
      %p413 = pneg %p412
    $region46: #{ensemble_forward.5} parent=5 // pred_check_branch
      %415 = sbr.rel (%p413) target = $region48
    $region47: #{ensemble_forward.5} parent=5 // pred_region
      %s416 = ssub.s32 %s11, 2
      // Predicated region
      $region49: #{ensemble_forward.5} parent=47 // pred_check
        %p417 = pneg %p166
      $region50: #{ensemble_forward.5} parent=47 // pred_check_branch
        %419 = sbr.rel (%p417) target = $region52
      $region51: #{ensemble_forward.5} parent=47 // pred_region
        %p420 = scmp.lt.s32.totalorder %s22, 1
        %s421 = scalar_select %p420, %s22, 1
        %p422 = scmp.lt.s32.totalorder %s23, 0
        %s423 = scalar_select %p422, %s23, 0
        %s424 = sadd.s32 %s423, %s421
        %s425 = smul.addr %s424, 8
        %s426 = scalar_lea.vmem %s5, %s425
      $region52: #{ensemble_forward.5} parent=47 // pred_fallthru
        _
    $region48: #{ensemble_forward.5} parent=5 // pred_fallthru
      _
  $region6: #{ensemble_forward.5} parent=0 // loop_footer
    %s15 = sadd.s32 1, %s11
  $region7: #{ensemble_forward.5} parent=0 // loop_footer_branch
    %10 = sbr.rel target = $region3
  $region8: #{ensemble_forward.5} parent=0 // loop_exit
    _

// kernel: ensemble_forward.8
$region0: #{ensemble_forward.8}
  #allocation0 [shape = 'u32[]', space=smem, size = 0x4, offset = 0x4, fixed_abs, tag = 'smem constant byte address 0x4 - core index']
  #allocation1 [shape = 'u32[144,128]{1,0:T(1,128)}', space=vmem, size = 0x12000, scoped, tag = 'internal scratch']
  %s0 = inlined_call_operand.vmem [shape: f32[2,8,4,4], index: 0, kind: input, shape index: {}]
  %s1 = inlined_call_operand.vmem [shape: f32[16,4], index: 1, kind: input, shape index: {}]
  %s2 = inlined_call_operand.vmem [shape: f32[4,16], index: 2, kind: input, shape index: {}]
  %s3 = inlined_call_operand.hbm [shape: f32[2,8,16,16], index: 3, kind: output, shape index: {}]
  %s4 = sld [smem:[#allocation0]]
  $region45: #{ensemble_forward.8} parent=0
    _
  %s6 = ssub.s32 1, %s4
  %s7 = scalar_select 0, %s6, %s4
  $region1: #{ensemble_forward.8} parent=0
    #allocation2 [shape = 'u8[131072]{0}', space=vmem, size = 0x20000, scoped, tag = 'output window, operand 0']
    #allocation3 [shape = 's32[2]{0}', space=sflag, size = 0x8, scoped, tag = 'scoped memory for ensemble_forward.8']
    %8 = vsyncpa [#allocation3], 0
    %s9 = scalar_lea.sflag [#allocation3], 1
    %10 = vsyncpa %s9, 0
    loop: start=0, step=1, limit=4
    $region2: #{ensemble_forward.8} parent=1 // loop_pre_header
      _
    $region3: #{ensemble_forward.8} parent=1 // loop_header
      %s12 = sphi 0, %s16
      %p13 = scmp.ge.s32.totalorder %s12, 4
      %s22 = sphi 0, %s24
      %s25 = sphi 0, %s22
      %s26 = sphi 0, %s25
      %s42 = sphi 0, %s26
      %s46 = sphi 0, %s46
      %s48 = sphi 0, %s46
      %s49 = sphi 0, %s48
      %s63 = sphi 0, %s49
      %s67 = sphi 0, %s67
      %s69 = sphi 0, %s67
      %s70 = sphi 0, %s69
      %s84 = sphi 0, %s70
      %s90 = sphi 0, %s92
      %s93 = sphi 0, %s90
      %s94 = sphi 0, %s93
      %s110 = sphi 0, %s94
    $region4: #{ensemble_forward.8} parent=1 // loop_header_branch
      %15 = sbr.rel (%p13) target = $region8
    $region5: #{ensemble_forward.8} parent=1 // loop_body
      %s17 = ssub.s32 %s12, 1
      %s18 = ssub.s32 %s12, 2
      %s19 = sadd.s32 %s12, 1
      %s20 = ssub.s32 %s12, %s19
      %p21 = scmp.eq.s32.totalorder %s20, 0
      %s23 = sadd.s32 %s22, 1
      %s24 = scalar_select %p21, %s22, %s23
      %p27 = pneg %p21
      %p28 = scmp.eq.s32.totalorder %s12, 1
      %p29 = por %p27, %p28
      %p30 = scmp.ne.s32.totalorder %s22, %s25
      %p31 = scmp.eq.s32.totalorder %s12, 0
      %p32 = por %p30, %p31
      %p33 = scmp.ne.s32.totalorder %s22, %s25
      %p34 = scmp.eq.s32.totalorder %s17, 1
      %p35 = por %p33, %p34
      %p36 = scmp.ne.s32.totalorder %s25, %s26
      %p37 = scmp.eq.s32.totalorder %s17, 0
      %p38 = por %p36, %p37
      %p39 = scmp.ne.s32.totalorder %s25, %s26
      %p40 = scmp.eq.s32.totalorder %s18, 1
      %p41 = por %p39, %p40
      %p43 = scmp.ne.s32.totalorder %s26, %s42
      %p44 = scmp.eq.s32.totalorder %s18, 0
      %p45 = por %p43, %p44
      %s47 = sadd.s32 %s46, 1
      %p50 = scmp.eq.s32.totalorder %s12, 1
      %p51 = scmp.ne.s32.totalorder %s46, %s48
      %p52 = scmp.eq.s32.totalorder %s12, 0
      %p53 = por %p51, %p52
      %p54 = scmp.ne.s32.totalorder %s46, %s48
      %p55 = scmp.eq.s32.totalorder %s17, 1
      %p56 = por %p54, %p55
      %p57 = scmp.ne.s32.totalorder %s48, %s49
      %p58 = scmp.eq.s32.totalorder %s17, 0
      %p59 = por %p57, %p58
      %p60 = scmp.ne.s32.totalorder %s48, %s49
      %p61 = scmp.eq.s32.totalorder %s18, 1
      %p62 = por %p60, %p61
      %p64 = scmp.ne.s32.totalorder %s49, %s63
      %p65 = scmp.eq.s32.totalorder %s18, 0
      %p66 = por %p64, %p65
      %s68 = sadd.s32 %s67, 1
      %p71 = scmp.eq.s32.totalorder %s12, 1
      %p72 = scmp.ne.s32.totalorder %s67, %s69
      %p73 = scmp.eq.s32.totalorder %s12, 0
      %p74 = por %p72, %p73
      %p75 = scmp.ne.s32.totalorder %s67, %s69
      %p76 = scmp.eq.s32.totalorder %s17, 1
      %p77 = por %p75, %p76
      %p78 = scmp.ne.s32.totalorder %s69, %s70
      %p79 = scmp.eq.s32.totalorder %s17, 0
      %p80 = por %p78, %p79
      %p81 = scmp.ne.s32.totalorder %s69, %s70
      %p82 = scmp.eq.s32.totalorder %s18, 1
      %p83 = por %p81, %p82
      %p85 = scmp.ne.s32.totalorder %s70, %s84
      %p86 = scmp.eq.s32.totalorder %s18, 0
      %p87 = por %p85, %p86
      %s88 = ssub.s32 %s12, %s19
      %p89 = scmp.eq.s32.totalorder %s88, 0
      %s91 = sadd.s32 %s90, 1
      %s92 = scalar_select %p89, %s90, %s91
      %p95 = pneg %p89
      %p96 = scmp.eq.s32.totalorder %s12, 1
      %p97 = por %p95, %p96
      %p98 = scmp.ne.s32.totalorder %s90, %s93
      %p99 = scmp.eq.s32.totalorder %s12, 0
      %p100 = por %p98, %p99
      %p101 = scmp.ne.s32.totalorder %s90, %s93
      %p102 = scmp.eq.s32.totalorder %s17, 1
      %p103 = por %p101, %p102
      %p104 = scmp.ne.s32.totalorder %s93, %s94
      %p105 = scmp.eq.s32.totalorder %s17, 0
      %p106 = por %p104, %p105
      %p107 = scmp.ne.s32.totalorder %s93, %s94
      %p108 = scmp.eq.s32.totalorder %s18, 1
      %p109 = por %p107, %p108
      %p111 = scmp.ne.s32.totalorder %s94, %s110
      %p112 = scmp.eq.s32.totalorder %s18, 0
      %p113 = por %p111, %p112
      %p114 = scmp.le.s32.totalorder 1, %s12
      %p115 = scmp.lt.s32.totalorder %s12, 3
      %p116 = pnand %p114, %p115
      %p117 = pneg %p116
      // Predicated region
      $region9: #{ensemble_forward.8} parent=5 // pred_check
        _
      $region10: #{ensemble_forward.8} parent=5 // pred_check_branch
        %119 = sbr.rel (%p116) target = $region12
      $region11: #{ensemble_forward.8} parent=5 // pred_region
        %s120 = ssub.s32 %s12, 1
        // Predicated region
        $region13: #{ensemble_forward.8} parent=11 // pred_check
          %p121 = pneg %p59
        $region14: #{ensemble_forward.8} parent=11 // pred_check_branch
          %123 = sbr.rel (%p121) target = $region16
        $region15: #{ensemble_forward.8} parent=11 // pred_region
          _
        $region16: #{ensemble_forward.8} parent=11 // pred_fallthru
          _
        // Predicated region
        $region17: #{ensemble_forward.8} parent=11 // pred_check
          %p124 = pneg %p80
        $region18: #{ensemble_forward.8} parent=11 // pred_check_branch
          %126 = sbr.rel (%p124) target = $region20
        $region19: #{ensemble_forward.8} parent=11 // pred_region
          _
        $region20: #{ensemble_forward.8} parent=11 // pred_fallthru
          _
      $region12: #{ensemble_forward.8} parent=5 // pred_fallthru
        _
      %p127 = scmp.lt.s32.totalorder %s12, 2
      // Predicated region
      $region21: #{ensemble_forward.8} parent=5 // pred_check
        %p128 = pneg %p127
      $region22: #{ensemble_forward.8} parent=5 // pred_check_branch
        %130 = sbr.rel (%p128) target = $region24
      $region23: #{ensemble_forward.8} parent=5 // pred_region
        // Predicated region
        $region25: #{ensemble_forward.8} parent=23 // pred_check
          %p131 = pneg %p32
        $region26: #{ensemble_forward.8} parent=23 // pred_check_branch
          %133 = sbr.rel (%p131) target = $region28
        $region27: #{ensemble_forward.8} parent=23 // pred_region
          %p134 = scmp.lt.s32.totalorder %s12, 1
          %s135 = scalar_select %p134, %s12, 1
          %s136 = smul.addr %s135, 8
          %s137 = smul.addr %s136, 4
          %s138 = scalar_lea.vmem %s0, %s137
        $region28: #{ensemble_forward.8} parent=23 // pred_fallthru
          _
      $region24: #{ensemble_forward.8} parent=5 // pred_fallthru
        _
      %p139 = scmp.le.s32.totalorder 1, %s12
      %p140 = scmp.lt.s32.totalorder %s12, 3
      %p141 = pnand %p139, %p140
      %p142 = pneg %p141
      // Predicated region
      $region29: #{ensemble_forward.8} parent=5 // pred_check
        _
      $region30: #{ensemble_forward.8} parent=5 // pred_check_branch
        %144 = sbr.rel (%p141) target = $region32
      $region31: #{ensemble_forward.8} parent=5 // pred_region
        %s145 = ssub.s32 %s12, 1
        %p146 = scmp.lt.s32.totalorder %s17, 1
        %s147 = scalar_select %p146, %s17, 1
        %s148 = smul.addr %s147, 8
        %s149 = smul.addr %s148, 4
        %s150 = scalar_lea.vmem %s0, %s149
        %p151 = pneg %p38
        %p152 = pneg %p35
        %p153 = pneg %p59
        %p154 = pneg %p56
        %p155 = pneg %p80
        %p156 = pneg %p77
        %p157 = pneg %p106
        %p158 = pneg %p103
        %s159 = sand.u32 %s93, 1
        %s160 = scalar_lea.sflag [#allocation3], %s159
        %s161 = sand.u32 %s93, 1
        %s162 = smul.addr %s161, 128
        %s163 = scalar_lea.vmem [#allocation2], %s162
        %p164 = scmp.lt.s32.totalorder %s17, 1
        %s165 = scalar_select %p164, %s17, 1
        %s166 = smul.addr %s165, 8
        %s167 = smul.addr %s166, 4
        %s168 = scalar_lea.vmem %s0, %s167
        %v169 = vld [vmem:[%s168] sm:$0xf]
        %v170 = vld [vmem:[%s168 + $0x4] sm:$0xf]
        %v171 = vld [vmem:[%s168 + $0x8] sm:$0xf]
        %v172 = vld [vmem:[%s168 + $0xc] sm:$0xf]
        %v173 = vld [vmem:[%s168 + $0x10] sm:$0xf]
        %v174 = vld [vmem:[%s168 + $0x14] sm:$0xf]
        %v175 = vld [vmem:[%s168 + $0x18] sm:$0xf]
        %v176 = vld [vmem:[%s168 + $0x1c] sm:$0xf]
        %v177 = vld [vmem:[%s1] sm:$0xff]
        %v178 = vld [vmem:[%s1 + $0x8] sm:$0xff]
        %v179 = vld [vmem:[%s2] sm:$0xf]
        %v188 = vcombine.low %v169, %v170
        %v189 = vcombine.low %v171, %v172
        %v190 = vcombine.low %v173, %v174
        %v191 = vcombine.low %v175, %v176
        %vm192 = vcmask 31744
        %v193 = vsel %vm192, %v188, 0
        %v195 = vsel %vm192, %v189, 0
        %v197 = vsel %vm192, %v190, 0
        %v199 = vsel %vm192, %v191, 0
        %vm201 = vcmask 1043456
        %v203 = vsel %vm201, %v179, 0
        %205 = vmatprep.subr.mxu0 0.0
        %206 = vmatpush1.msra.mxu0 %v203
        %207 = vmatprep.subr.mxu0 0.0
        %208 = vmatpush1.msra.mxu0 0.0
        %209 = vmatprep.subr.mxu0 0.0
        %210 = vmatpush1.msra.mxu0 0.0
        %211 = vmatprep.subr.mxu0 0.0
        %212 = vmatpush1.msra.mxu0 0.0
        %213 = vmatprep.subr.mxu0 0.0
        %214 = vmatpush1.msra.mxu0 0.0
        %215 = vmatprep.subr.mxu0 0.0
        %216 = vmatpush1.msra.mxu0 0.0
        %217 = vmatprep.subr.mxu0 0.0
        %218 = vmatpush1.msra.mxu0 0.0
        %219 = vmatprep.subr.mxu0 0.0
        %220 = vmatpush1.msra.mxu0 0.0
        %221 = vmatprep.subr.mxu0 0.0
        %222 = vmatpush1.msra.mxu0 0.0
        %223 = vmatprep.subr.mxu0 0.0
        %224 = vmatpush1.msra.mxu0 0.0
        %225 = vmatprep.subr.mxu0 0.0
        %226 = vmatpush1.msra.mxu0 0.0
        %227 = vmatprep.subr.mxu0 0.0
        %228 = vmatpush1.msra.mxu0 0.0
        %229 = vmatprep.subr.mxu0 0.0
        %230 = vmatpush1.msra.mxu0 0.0
        %231 = vmatprep.subr.mxu0 0.0
        %232 = vmatpush1.msra.mxu0 0.0
        %233 = vmatprep.subr.mxu0 0.0
        %234 = vmatpush1.msra.mxu0 0.0
        %235 = vmatprep.subr.mxu0 0.0
        %236 = vmatpush1.msra.mxu0 0.0
        %237 = vmatprep.subr.mxu0 0.0
        %238 = vmatpush1.msra.mxu0 0.0
        %239 = vmatprep.subr.mxu0 0.0
        %240 = vmatpush1.msra.mxu0 0.0
        %241 = vmatprep.subr.mxu0 0.0
        %242 = vmatpush1.msra.mxu0 0.0
        %243 = vmatprep.subr.mxu0 0.0
        %244 = vmatpush1.msra.mxu0 0.0
        %245 = vmatprep.subr.mxu0 0.0
        %246 = vmatpush1.msra.mxu0 0.0
        %247 = vmatprep.subr.mxu0 0.0
        %248 = vmatpush1.msra.mxu0 0.0
        %249 = vmatprep.subr.mxu0 0.0
        %250 = vmatpush1.msra.mxu0 0.0
        %251 = vmatprep.subr.mxu0 0.0
        %252 = vmatpush1.msra.mxu0 0.0
        %253 = vmatprep.subr.mxu0 0.0
        %254 = vmatpush1.msra.mxu0 0.0
        %255 = vmatprep.subr.mxu0 0.0
        %256 = vmatpush1.msra.mxu0 0.0
        %257 = vmatprep.subr.mxu0 0.0
        %258 = vmatpush1.msra.mxu0 0.0
        %259 = vmatprep.subr.mxu0 0.0
        %260 = vmatpush1.msra.mxu0 0.0
        %261 = vmatprep.subr.mxu0 0.0
        %262 = vmatpush1.msra.mxu0 0.0
        %263 = vmatprep.subr.mxu0 0.0
        %264 = vmatpush1.msra.mxu0 0.0
        %265 = vmatprep.subr.mxu0 0.0
        %266 = vmatpush1.msra.mxu0 0.0
        %267 = vmatprep.subr.mxu0 0.0
        %268 = vmatpush1.msra.mxu0 0.0
        %269 = vmatprep.mubr.f32.mxu0 0.0
        %270 = vmatmul.mubr.f32.gmra.mrb[0].mxu0 %v193
        %v271 = vpop.f32.mrb[0].mxu0
        %v272 = vadd.f32 0.0, %v271
        %v273 = vpop.f32.mrb[0].mxu0
        %274 = vmatprep.mubr.f32.mxu0 0.0
        %275 = vmatmul.mubr.f32.gmra.mrb[0].mxu0 %v195
        %v276 = vpop.f32.mrb[0].mxu0
        %v277 = vadd.f32 0.0, %v276
        %v278 = vpop.f32.mrb[0].mxu0
        %279 = vmatprep.mubr.f32.mxu0 0.0
        %280 = vmatmul.mubr.f32.gmra.mrb[0].mxu0 %v197
        %v281 = vpop.f32.mrb[0].mxu0
        %v282 = vadd.f32 0.0, %v281
        %v283 = vpop.f32.mrb[0].mxu0
        %284 = vmatprep.mubr.f32.mxu0 0.0
        %285 = vmatmul.mubr.f32.gmra.mrb[0].mxu0 %v199
        %v286 = vpop.f32.mrb[0].mxu0
        %v287 = vadd.f32 0.0, %v286
        %v288 = vpop.f32.mrb[0].mxu0
        %289 = vdwg.mxu0
        %v294 = vcombine.high %v272, %v272
        %v295 = vcombine.high %v277, %v277
        %v296 = vcombine.high %v282, %v282
        %v297 = vcombine.high %v287, %v287
        %v299 = vsel %vm192, %v177, 0
        %v302 = vsel %vm192, %v178, 0
        %v304 = vsel %vm201, %v272, 0
        %306 = vmatprep.subr.mxu0 0.0
        %307 = vmatpush1.msra.mxu0 %v304
        %308 = vmatprep.subr.mxu0 0.0
        %309 = vmatpush1.msra.mxu0 0.0
        %310 = vmatprep.subr.mxu0 0.0
        %311 = vmatpush1.msra.mxu0 0.0
        %312 = vmatprep.subr.mxu0 0.0
        %313 = vmatpush1.msra.mxu0 0.0
        %314 = vmatprep.subr.mxu0 0.0
        %315 = vmatpush1.msra.mxu0 0.0
        %316 = vmatprep.subr.mxu0 0.0
        %317 = vmatpush1.msra.mxu0 0.0
        %318 = vmatprep.subr.mxu0 0.0
        %319 = vmatpush1.msra.mxu0 0.0
        %320 = vmatprep.subr.mxu0 0.0
        %321 = vmatpush1.msra.mxu0 0.0
        %322 = vmatprep.subr.mxu0 0.0
        %323 = vmatpush1.msra.mxu0 0.0
        %324 = vmatprep.subr.mxu0 0.0
        %325 = vmatpush1.msra.mxu0 0.0
        %326 = vmatprep.subr.mxu0 0.0
        %327 = vmatpush1.msra.mxu0 0.0
        %328 = vmatprep.subr.mxu0 0.0
        %329 = vmatpush1.msra.mxu0 0.0
        %330 = vmatprep.subr.mxu0 0.0
        %331 = vmatpush1.msra.mxu0 0.0
        %332 = vmatprep.subr.mxu0 0.0
        %333 = vmatpush1.msra.mxu0 0.0
        %334 = vmatprep.subr.mxu0 0.0
        %335 = vmatpush1.msra.mxu0 0.0
        %336 = vmatprep.subr.mxu0 0.0
        %337 = vmatpush1.msra.mxu0 0.0
        %338 = vmatprep.subr.mxu0 0.0
        %339 = vmatpush1.msra.mxu0 0.0
        %340 = vmatprep.subr.mxu0 0.0
        %341 = vmatpush1.msra.mxu0 0.0
        %342 = vmatprep.subr.mxu0 0.0
        %343 = vmatpush1.msra.mxu0 0.0
        %344 = vmatprep.subr.mxu0 0.0
        %345 = vmatpush1.msra.mxu0 0.0
        %346 = vmatprep.subr.mxu0 0.0
        %347 = vmatpush1.msra.mxu0 0.0
        %348 = vmatprep.subr.mxu0 0.0
        %349 = vmatpush1.msra.mxu0 0.0
        %350 = vmatprep.subr.mxu0 0.0
        %351 = vmatpush1.msra.mxu0 0.0
        %352 = vmatprep.subr.mxu0 0.0
        %353 = vmatpush1.msra.mxu0 0.0
        %354 = vmatprep.subr.mxu0 0.0
        %355 = vmatpush1.msra.mxu0 0.0
        %356 = vmatprep.subr.mxu0 0.0
        %357 = vmatpush1.msra.mxu0 0.0
        %358 = vmatprep.subr.mxu0 0.0
        %359 = vmatpush1.msra.mxu0 0.0
        %360 = vmatprep.subr.mxu0 0.0
        %361 = vmatpush1.msra.mxu0 0.0
        %362 = vmatprep.subr.mxu0 0.0
        %363 = vmatpush1.msra.mxu0 0.0
        %364 = vmatprep.subr.mxu0 0.0
        %365 = vmatpush1.msra.mxu0 0.0
        %366 = vmatprep.subr.mxu0 0.0
        %367 = vmatpush1.msra.mxu0 0.0
        %368 = vmatprep.subr.mxu0 0.0
        %369 = vmatpush1.msra.mxu0 0.0
        %370 = vmatprep.mubr.f32.mxu0 0.0
        %371 = vmatmul.mubr.f32.gmra.mrb[0].mxu0 %v299
        %v372 = vpop.f32.mrb[0].mxu0
        %v373 = vadd.f32 0.0, %v372
        %v374 = vpop.f32.mrb[0].mxu0
        %375 = vmatprep.mubr.f32.mxu0 0.0
        %376 = vmatmul.mubr.f32.gmra.mrb[0].mxu0 %v302
        %v377 = vpop.f32.mrb[0].mxu0
        %v378 = vadd.f32 0.0, %v377
        %v379 = vpop.f32.mrb[0].mxu0
        %380 = vdwg.mxu0
        %v381 = vsel %vm201, %v294, 0
        %383 = vmatprep.subr.mxu0 0.0
        %384 = vmatpush1.msra.mxu0 %v381
        %385 = vmatprep.subr.mxu0 0.0
        %386 = vmatpush1.msra.mxu0 0.0
        %387 = vmatprep.subr.mxu0 0.0
        %388 = vmatpush1.msra.mxu0 0.0
        %389 = vmatprep.subr.mxu0 0.0
        %390 = vmatpush1.msra.mxu0 0.0
        %391 = vmatprep.subr.mxu0 0.0
        %392 = vmatpush1.msra.mxu0 0.0
        %393 = vmatprep.subr.mxu0 0.0
        %394 = vmatpush1.msra.mxu0 0.0
        %395 = vmatprep.subr.mxu0 0.0
        %396 = vmatpush1.msra.mxu0 0.0
        %397 = vmatprep.subr.mxu0 0.0
        %398 = vmatpush1.msra.mxu0 0.0
        %399 = vmatprep.subr.mxu0 0.0
        %400 = vmatpush1.msra.mxu0 0.0
        %401 = vmatprep.subr.mxu0 0.0
        %402 = vmatpush1.msra.mxu0 0.0
        %403 = vmatprep.subr.mxu0 0.0
        %404 = vmatpush1.msra.mxu0 0.0
        %405 = vmatprep.subr.mxu0 0.0
        %406 = vmatpush1.msra.mxu0 0.0
        %407 = vmatprep.subr.mxu0 0.0
        %408 = vmatpush1.msra.mxu0 0.0
        %409 = vmatprep.subr.mxu0 0.0
        %410 = vmatpush1.msra.mxu0 0.0
        %411 = vmatprep.subr.mxu0 0.0
        %412 = vmatpush1.msra.mxu0 0.0
        %413 = vmatprep.subr.mxu0 0.0
        %414 = vmatpush1.msra.mxu0 0.0
        %415 = vmatprep.subr.mxu0 0.0
        %416 = vmatpush1.msra.mxu0 0.0
        %417 = vmatprep.subr.mxu0 0.0
        %418 = vmatpush1.msra.mxu0 0.0
        %419 = vmatprep.subr.mxu0 0.0
        %420 = vmatpush1.msra.mxu0 0.0
        %421 = vmatprep.subr.mxu0 0.0
        %422 = vmatpush1.msra.mxu0 0.0
        %423 = vmatprep.subr.mxu0 0.0
        %424 = vmatpush1.msra.mxu0 0.0
        %425 = vmatprep.subr.mxu0 0.0
        %426 = vmatpush1.msra.mxu0 0.0
        %427 = vmatprep.subr.mxu0 0.0
        %428 = vmatpush1.msra.mxu0 0.0
        %429 = vmatprep.subr.mxu0 0.0
        %430 = vmatpush1.msra.mxu0 0.0
        %431 = vmatprep.subr.mxu0 0.0
        %432 = vmatpush1.msra.mxu0 0.0
        %433 = vmatprep.subr.mxu0 0.0
        %434 = vmatpush1.msra.mxu0 0.0
        %435 = vmatprep.subr.mxu0 0.0
        %436 = vmatpush1.msra.mxu0 0.0
        %437 = vmatprep.subr.mxu0 0.0
        %438 = vmatpush1.msra.mxu0 0.0
        %439 = vmatprep.subr.mxu0 0.0
        %440 = vmatpush1.msra.mxu0 0.0
        %441 = vmatprep.subr.mxu0 0.0
        %442 = vmatpush1.msra.mxu0 0.0
        %443 = vmatprep.subr.mxu0 0.0
        %444 = vmatpush1.msra.mxu0 0.0
        %445 = vmatprep.subr.mxu0 0.0
        %446 = vmatpush1.msra.mxu0 0.0
        %447 = vmatprep.mubr.f32.mxu0 0.0
        %448 = vmatmul.mubr.f32.gmra.mrb[0].mxu0 %v299
        %v449 = vpop.f32.mrb[0].mxu0
        %v450 = vadd.f32 0.0, %v449
        %v451 = vpop.f32.mrb[0].mxu0
        %452 = vmatprep.mubr.f32.mxu0 0.0
        %453 = vmatmul.mubr.f32.gmra.mrb[0].mxu0 %v302
        %v454 = vpop.f32.mrb[0].mxu0
        %v455 = vadd.f32 0.0, %v454
        %v456 = vpop.f32.mrb[0].mxu0
        %457 = vdwg.mxu0
        %v458 = vsel %vm201, %v277, 0
        %460 = vmatprep.subr.mxu0 0.0
        %461 = vmatpush1.msra.mxu0 %v458
        %462 = vmatprep.subr.mxu0 0.0
        %463 = vmatpush1.msra.mxu0 0.0
        %464 = vmatprep.subr.mxu0 0.0
        %465 = vmatpush1.msra.mxu0 0.0
        %466 = vmatprep.subr.mxu0 0.0
        %467 = vmatpush1.msra.mxu0 0.0
        %468 = vmatprep.subr.mxu0 0.0
        %469 = vmatpush1.msra.mxu0 0.0
        %470 = vmatprep.subr.mxu0 0.0
        %471 = vmatpush1.msra.mxu0 0.0
        %472 = vmatprep.subr.mxu0 0.0
        %473 = vmatpush1.msra.mxu0 0.0
        %474 = vmatprep.subr.mxu0 0.0
        %475 = vmatpush1.msra.mxu0 0.0
        %476 = vmatprep.subr.mxu0 0.0
        %477 = vmatpush1.msra.mxu0 0.0
        %478 = vmatprep.subr.mxu0 0.0
        %479 = vmatpush1.msra.mxu0 0.0
        %480 = vmatprep.subr.mxu0 0.0
        %481 = vmatpush1.msra.mxu0 0.0
        %482 = vmatprep.subr.mxu0 0.0
        %483 = vmatpush1.msra.mxu0 0.0
        %484 = vmatprep.subr.mxu0 0.0
        %485 = vmatpush1.msra.mxu0 0.0
        %486 = vmatprep.subr.mxu0 0.0
        %487 = vmatpush1.msra.mxu0 0.0
        %488 = vmatprep.subr.mxu0 0.0
        %489 = vmatpush1.msra.mxu0 0.0
        %490 = vmatprep.subr.mxu0 0.0
        %491 = vmatpush1.msra.mxu0 0.0
        %492 = vmatprep.subr.mxu0 0.0
        %493 = vmatpush1.msra.mxu0 0.0
        %494 = vmatprep.subr.mxu0 0.0
        %495 = vmatpush1.msra.mxu0 0.0
        %496 = vmatprep.subr.mxu0 0.0
        %497 = vmatpush1.msra.mxu0 0.0
        %498 = vmatprep.subr.mxu0 0.0
        %499 = vmatpush1.msra.mxu0 0.0
        %500 = vmatprep.subr.mxu0 0.0
        %501 = vmatpush1.msra.mxu0 0.0
        %502 = vmatprep.subr.mxu0 0.0
        %503 = vmatpush1.msra.mxu0 0.0
        %504 = vmatprep.subr.mxu0 0.0
        %505 = vmatpush1.msra.mxu0 0.0
        %506 = vmatprep.subr.mxu0 0.0
        %507 = vmatpush1.msra.mxu0 0.0
        %508 = vmatprep.subr.mxu0 0.0
        %509 = vmatpush1.msra.mxu0 0.0
        %510 = vmatprep.subr.mxu0 0.0
        %511 = vmatpush1.msra.mxu0 0.0
        %512 = vmatprep.subr.mxu0 0.0
        %513 = vmatpush1.msra.mxu0 0.0
        %514 = vmatprep.subr.mxu0 0.0
        %515 = vmatpush1.msra.mxu0 0.0
        %516 = vmatprep.subr.mxu0 0.0
        %517 = vmatpush1.msra.mxu0 0.0
        %518 = vmatprep.subr.mxu0 0.0
        %519 = vmatpush1.msra.mxu0 0.0
        %520 = vmatprep.subr.mxu0 0.0
        %521 = vmatpush1.msra.mxu0 0.0
        %522 = vmatprep.subr.mxu0 0.0
        %523 = vmatpush1.msra.mxu0 0.0
        %524 = vmatprep.mubr.f32.mxu0 0.0
        %525 = vmatmul.mubr.f32.gmra.mrb[0].mxu0 %v299
        %v526 = vpop.f32.mrb[0].mxu0
        %v527 = vadd.f32 0.0, %v526
        %v528 = vpop.f32.mrb[0].mxu0
        %529 = vmatprep.mubr.f32.mxu0 0.0
        %530 = vmatmul.mubr.f32.gmra.mrb[0].mxu0 %v302
        %v531 = vpop.f32.mrb[0].mxu0
        %v532 = vadd.f32 0.0, %v531
        %v533 = vpop.f32.mrb[0].mxu0
        %534 = vdwg.mxu0
        %v535 = vsel %vm201, %v295, 0
        %537 = vmatprep.subr.mxu0 0.0
        %538 = vmatpush1.msra.mxu0 %v535
        %539 = vmatprep.subr.mxu0 0.0
        %540 = vmatpush1.msra.mxu0 0.0
        %541 = vmatprep.subr.mxu0 0.0
        %542 = vmatpush1.msra.mxu0 0.0
        %543 = vmatprep.subr.mxu0 0.0
        %544 = vmatpush1.msra.mxu0 0.0
        %545 = vmatprep.subr.mxu0 0.0
        %546 = vmatpush1.msra.mxu0 0.0
        %547 = vmatprep.subr.mxu0 0.0
        %548 = vmatpush1.msra.mxu0 0.0
        %549 = vmatprep.subr.mxu0 0.0
        %550 = vmatpush1.msra.mxu0 0.0
        %551 = vmatprep.subr.mxu0 0.0
        %552 = vmatpush1.msra.mxu0 0.0
        %553 = vmatprep.subr.mxu0 0.0
        %554 = vmatpush1.msra.mxu0 0.0
        %555 = vmatprep.subr.mxu0 0.0
        %556 = vmatpush1.msra.mxu0 0.0
        %557 = vmatprep.subr.mxu0 0.0
        %558 = vmatpush1.msra.mxu0 0.0
        %559 = vmatprep.subr.mxu0 0.0
        %560 = vmatpush1.msra.mxu0 0.0
        %561 = vmatprep.subr.mxu0 0.0
        %562 = vmatpush1.msra.mxu0 0.0
        %563 = vmatprep.subr.mxu0 0.0
        %564 = vmatpush1.msra.mxu0 0.0
        %565 = vmatprep.subr.mxu0 0.0
        %566 = vmatpush1.msra.mxu0 0.0
        %567 = vmatprep.subr.mxu0 0.0
        %568 = vmatpush1.msra.mxu0 0.0
        %569 = vmatprep.subr.mxu0 0.0
        %570 = vmatpush1.msra.mxu0 0.0
        %571 = vmatprep.subr.mxu0 0.0
        %572 = vmatpush1.msra.mxu0 0.0
        %573 = vmatprep.subr.mxu0 0.0
        %574 = vmatpush1.msra.mxu0 0.0
        %575 = vmatprep.subr.mxu0 0.0
        %576 = vmatpush1.msra.mxu0 0.0
        %577 = vmatprep.subr.mxu0 0.0
        %578 = vmatpush1.msra.mxu0 0.0
        %579 = vmatprep.subr.mxu0 0.0
        %580 = vmatpush1.msra.mxu0 0.0
        %581 = vmatprep.subr.mxu0 0.0
        %582 = vmatpush1.msra.mxu0 0.0
        %583 = vmatprep.subr.mxu0 0.0
        %584 = vmatpush1.msra.mxu0 0.0
        %585 = vmatprep.subr.mxu0 0.0
        %586 = vmatpush1.msra.mxu0 0.0
        %587 = vmatprep.subr.mxu0 0.0
        %588 = vmatpush1.msra.mxu0 0.0
        %589 = vmatprep.subr.mxu0 0.0
        %590 = vmatpush1.msra.mxu0 0.0
        %591 = vmatprep.subr.mxu0 0.0
        %592 = vmatpush1.msra.mxu0 0.0
        %593 = vmatprep.subr.mxu0 0.0
        %594 = vmatpush1.msra.mxu0 0.0
        %595 = vmatprep.subr.mxu0 0.0
        %596 = vmatpush1.msra.mxu0 0.0
        %597 = vmatprep.subr.mxu0 0.0
        %598 = vmatpush1.msra.mxu0 0.0
        %599 = vmatprep.subr.mxu0 0.0
        %600 = vmatpush1.msra.mxu0 0.0
        %601 = vmatprep.mubr.f32.mxu0 0.0
        %602 = vmatmul.mubr.f32.gmra.mrb[0].mxu0 %v299
        %v603 = vpop.f32.mrb[0].mxu0
        %v604 = vadd.f32 0.0, %v603
        %v605 = vpop.f32.mrb[0].mxu0
        %606 = vmatprep.mubr.f32.mxu0 0.0
        %607 = vmatmul.mubr.f32.gmra.mrb[0].mxu0 %v302
        %v608 = vpop.f32.mrb[0].mxu0
        %v609 = vadd.f32 0.0, %v608
        %v610 = vpop.f32.mrb[0].mxu0
        %611 = vdwg.mxu0
        %v612 = vsel %vm201, %v282, 0
        %614 = vmatprep.subr.mxu0 0.0
        %615 = vmatpush1.msra.mxu0 %v612
        %616 = vmatprep.subr.mxu0 0.0
        %617 = vmatpush1.msra.mxu0 0.0
        %618 = vmatprep.subr.mxu0 0.0
        %619 = vmatpush1.msra.mxu0 0.0
        %620 = vmatprep.subr.mxu0 0.0
        %621 = vmatpush1.msra.mxu0 0.0
        %622 = vmatprep.subr.mxu0 0.0
        %623 = vmatpush1.msra.mxu0 0.0
        %624 = vmatprep.subr.mxu0 0.0
        %625 = vmatpush1.msra.mxu0 0.0
        %626 = vmatprep.subr.mxu0 0.0
        %627 = vmatpush1.msra.mxu0 0.0
        %628 = vmatprep.subr.mxu0 0.0
        %629 = vmatpush1.msra.mxu0 0.0
        %630 = vmatprep.subr.mxu0 0.0
        %631 = vmatpush1.msra.mxu0 0.0
        %632 = vmatprep.subr.mxu0 0.0
        %633 = vmatpush1.msra.mxu0 0.0
        %634 = vmatprep.subr.mxu0 0.0
        %635 = vmatpush1.msra.mxu0 0.0
        %636 = vmatprep.subr.mxu0 0.0
        %637 = vmatpush1.msra.mxu0 0.0
        %638 = vmatprep.subr.mxu0 0.0
        %639 = vmatpush1.msra.mxu0 0.0
        %640 = vmatprep.subr.mxu0 0.0
        %641 = vmatpush1.msra.mxu0 0.0
        %642 = vmatprep.subr.mxu0 0.0
        %643 = vmatpush1.msra.mxu0 0.0
        %644 = vmatprep.subr.mxu0 0.0
        %645 = vmatpush1.msra.mxu0 0.0
        %646 = vmatprep.subr.mxu0 0.0
        %647 = vmatpush1.msra.mxu0 0.0
        %648 = vmatprep.subr.mxu0 0.0
        %649 = vmatpush1.msra.mxu0 0.0
        %650 = vmatprep.subr.mxu0 0.0
        %651 = vmatpush1.msra.mxu0 0.0
        %652 = vmatprep.subr.mxu0 0.0
        %653 = vmatpush1.msra.mxu0 0.0
        %654 = vmatprep.subr.mxu0 0.0
        %655 = vmatpush1.msra.mxu0 0.0
        %656 = vmatprep.subr.mxu0 0.0
        %657 = vmatpush1.msra.mxu0 0.0
        %658 = vmatprep.subr.mxu0 0.0
        %659 = vmatpush1.msra.mxu0 0.0
        %660 = vmatprep.subr.mxu0 0.0
        %661 = vmatpush1.msra.mxu0 0.0
        %662 = vmatprep.subr.mxu0 0.0
        %663 = vmatpush1.msra.mxu0 0.0
        %664 = vmatprep.subr.mxu0 0.0
        %665 = vmatpush1.msra.mxu0 0.0
        %666 = vmatprep.subr.mxu0 0.0
        %667 = vmatpush1.msra.mxu0 0.0
        %668 = vmatprep.subr.mxu0 0.0
        %669 = vmatpush1.msra.mxu0 0.0
        %670 = vmatprep.subr.mxu0 0.0
        %671 = vmatpush1.msra.mxu0 0.0
        %672 = vmatprep.subr.mxu0 0.0
        %673 = vmatpush1.msra.mxu0 0.0
        %674 = vmatprep.subr.mxu0 0.0
        %675 = vmatpush1.msra.mxu0 0.0
        %676 = vmatprep.subr.mxu0 0.0
        %677 = vmatpush1.msra.mxu0 0.0
        %678 = vmatprep.mubr.f32.mxu0 0.0
        %679 = vmatmul.mubr.f32.gmra.mrb[0].mxu0 %v299
        %v680 = vpop.f32.mrb[0].mxu0
        %v681 = vadd.f32 0.0, %v680
        %v682 = vpop.f32.mrb[0].mxu0
        %683 = vmatprep.mubr.f32.mxu0 0.0
        %684 = vmatmul.mubr.f32.gmra.mrb[0].mxu0 %v302
        %v685 = vpop.f32.mrb[0].mxu0
        %v686 = vadd.f32 0.0, %v685
        %v687 = vpop.f32.mrb[0].mxu0
        %688 = vdwg.mxu0
        %v689 = vsel %vm201, %v296, 0
        %691 = vmatprep.subr.mxu0 0.0
        %692 = vmatpush1.msra.mxu0 %v689
        %693 = vmatprep.subr.mxu0 0.0
        %694 = vmatpush1.msra.mxu0 0.0
        %695 = vmatprep.subr.mxu0 0.0
        %696 = vmatpush1.msra.mxu0 0.0
        %697 = vmatprep.subr.mxu0 0.0
        %698 = vmatpush1.msra.mxu0 0.0
        %699 = vmatprep.subr.mxu0 0.0
        %700 = vmatpush1.msra.mxu0 0.0
        %701 = vmatprep.subr.mxu0 0.0
        %702 = vmatpush1.msra.mxu0 0.0
        %703 = vmatprep.subr.mxu0 0.0
        %704 = vmatpush1.msra.mxu0 0.0
        %705 = vmatprep.subr.mxu0 0.0
        %706 = vmatpush1.msra.mxu0 0.0
        %707 = vmatprep.subr.mxu0 0.0
        %708 = vmatpush1.msra.mxu0 0.0
        %709 = vmatprep.subr.mxu0 0.0
        %710 = vmatpush1.msra.mxu0 0.0
        %711 = vmatprep.subr.mxu0 0.0
        %712 = vmatpush1.msra.mxu0 0.0
        %713 = vmatprep.subr.mxu0 0.0
        %714 = vmatpush1.msra.mxu0 0.0
        %715 = vmatprep.subr.mxu0 0.0
        %716 = vmatpush1.msra.mxu0 0.0
        %717 = vmatprep.subr.mxu0 0.0
        %718 = vmatpush1.msra.mxu0 0.0
        %719 = vmatprep.subr.mxu0 0.0
        %720 = vmatpush1.msra.mxu0 0.0
        %721 = vmatprep.subr.mxu0 0.0
        %722 = vmatpush1.msra.mxu0 0.0
        %723 = vmatprep.subr.mxu0 0.0
        %724 = vmatpush1.msra.mxu0 0.0
        %725 = vmatprep.subr.mxu0 0.0
        %726 = vmatpush1.msra.mxu0 0.0
        %727 = vmatprep.subr.mxu0 0.0
        %728 = vmatpush1.msra.mxu0 0.0
        %729 = vmatprep.subr.mxu0 0.0
        %730 = vmatpush1.msra.mxu0 0.0
        %731 = vmatprep.subr.mxu0 0.0
        %732 = vmatpush1.msra.mxu0 0.0
        %733 = vmatprep.subr.mxu0 0.0
        %734 = vmatpush1.msra.mxu0 0.0
        %735 = vmatprep.subr.mxu0 0.0
        %736 = vmatpush1.msra.mxu0 0.0
        %737 = vmatprep.subr.mxu0 0.0
        %738 = vmatpush1.msra.mxu0 0.0
        %739 = vmatprep.subr.mxu0 0.0
        %740 = vmatpush1.msra.mxu0 0.0
        %741 = vmatprep.subr.mxu0 0.0
        %742 = vmatpush1.msra.mxu0 0.0
        %743 = vmatprep.subr.mxu0 0.0
        %744 = vmatpush1.msra.mxu0 0.0
        %745 = vmatprep.subr.mxu0 0.0
        %746 = vmatpush1.msra.mxu0 0.0
        %747 = vmatprep.subr.mxu0 0.0
        %748 = vmatpush1.msra.mxu0 0.0
        %749 = vmatprep.subr.mxu0 0.0
        %750 = vmatpush1.msra.mxu0 0.0
        %751 = vmatprep.subr.mxu0 0.0
        %752 = vmatpush1.msra.mxu0 0.0
        %753 = vmatprep.subr.mxu0 0.0
        %754 = vmatpush1.msra.mxu0 0.0
        %755 = vmatprep.mubr.f32.mxu0 0.0
        %756 = vmatmul.mubr.f32.gmra.mrb[0].mxu0 %v299
        %v757 = vpop.f32.mrb[0].mxu0
        %v758 = vadd.f32 0.0, %v757
        %v759 = vpop.f32.mrb[0].mxu0
        %760 = vmatprep.mubr.f32.mxu0 0.0
        %761 = vmatmul.mubr.f32.gmra.mrb[0].mxu0 %v302
        %v762 = vpop.f32.mrb[0].mxu0
        %v763 = vadd.f32 0.0, %v762
        %v764 = vpop.f32.mrb[0].mxu0
        %765 = vdwg.mxu0
        %v766 = vsel %vm201, %v287, 0
        %768 = vmatprep.subr.mxu0 0.0
        %769 = vmatpush1.msra.mxu0 %v766
        %770 = vmatprep.subr.mxu0 0.0
        %771 = vmatpush1.msra.mxu0 0.0
        %772 = vmatprep.subr.mxu0 0.0
        %773 = vmatpush1.msra.mxu0 0.0
        %774 = vmatprep.subr.mxu0 0.0
        %775 = vmatpush1.msra.mxu0 0.0
        %776 = vmatprep.subr.mxu0 0.0
        %777 = vmatpush1.msra.mxu0 0.0
        %778 = vmatprep.subr.mxu0 0.0
        %779 = vmatpush1.msra.mxu0 0.0
        %780 = vmatprep.subr.mxu0 0.0
        %781 = vmatpush1.msra.mxu0 0.0
        %782 = vmatprep.subr.mxu0 0.0
        %783 = vmatpush1.msra.mxu0 0.0
        %784 = vmatprep.subr.mxu0 0.0
        %785 = vmatpush1.msra.mxu0 0.0
        %786 = vmatprep.subr.mxu0 0.0
        %787 = vmatpush1.msra.mxu0 0.0
        %788 = vmatprep.subr.mxu0 0.0
        %789 = vmatpush1.msra.mxu0 0.0
        %790 = vmatprep.subr.mxu0 0.0
        %791 = vmatpush1.msra.mxu0 0.0
        %792 = vmatprep.subr.mxu0 0.0
        %793 = vmatpush1.msra.mxu0 0.0
        %794 = vmatprep.subr.mxu0 0.0
        %795 = vmatpush1.msra.mxu0 0.0
        %796 = vmatprep.subr.mxu0 0.0
        %797 = vmatpush1.msra.mxu0 0.0
        %798 = vmatprep.subr.mxu0 0.0
        %799 = vmatpush1.msra.mxu0 0.0
        %800 = vmatprep.subr.mxu0 0.0
        %801 = vmatpush1.msra.mxu0 0.0
        %802 = vmatprep.subr.mxu0 0.0
        %803 = vmatpush1.msra.mxu0 0.0
        %804 = vmatprep.subr.mxu0 0.0
        %805 = vmatpush1.msra.mxu0 0.0
        %806 = vmatprep.subr.mxu0 0.0
        %807 = vmatpush1.msra.mxu0 0.0
        %808 = vmatprep.subr.mxu0 0.0
        %809 = vmatpush1.msra.mxu0 0.0
        %810 = vmatprep.subr.mxu0 0.0
        %811 = vmatpush1.msra.mxu0 0.0
        %812 = vmatprep.subr.mxu0 0.0
        %813 = vmatpush1.msra.mxu0 0.0
        %814 = vmatprep.subr.mxu0 0.0
        %815 = vmatpush1.msra.mxu0 0.0
        %816 = vmatprep.subr.mxu0 0.0
        %817 = vmatpush1.msra.mxu0 0.0
        %818 = vmatprep.subr.mxu0 0.0
        %819 = vmatpush1.msra.mxu0 0.0
        %820 = vmatprep.subr.mxu0 0.0
        %821 = vmatpush1.msra.mxu0 0.0
        %822 = vmatprep.subr.mxu0 0.0
        %823 = vmatpush1.msra.mxu0 0.0
        %824 = vmatprep.subr.mxu0 0.0
        %825 = vmatpush1.msra.mxu0 0.0
        %826 = vmatprep.subr.mxu0 0.0
        %827 = vmatpush1.msra.mxu0 0.0
        %828 = vmatprep.subr.mxu0 0.0
        %829 = vmatpush1.msra.mxu0 0.0
        %830 = vmatprep.subr.mxu0 0.0
        %831 = vmatpush1.msra.mxu0 0.0
        %832 = vmatprep.mubr.f32.mxu0 0.0
        %833 = vmatmul.mubr.f32.gmra.mrb[0].mxu0 %v299
        %v834 = vpop.f32.mrb[0].mxu0
        %v835 = vadd.f32 0.0, %v834
        %v836 = vpop.f32.mrb[0].mxu0
        %837 = vmatprep.mubr.f32.mxu0 0.0
        %838 = vmatmul.mubr.f32.gmra.mrb[0].mxu0 %v302
        %v839 = vpop.f32.mrb[0].mxu0
        %v840 = vadd.f32 0.0, %v839
        %v841 = vpop.f32.mrb[0].mxu0
        %842 = vdwg.mxu0
        %v843 = vsel %vm201, %v297, 0
        %845 = vmatprep.subr.mxu0 0.0
        %846 = vmatpush1.msra.mxu0 %v843
        %847 = vmatprep.subr.mxu0 0.0
        %848 = vmatpush1.msra.mxu0 0.0
        %849 = vmatprep.subr.mxu0 0.0
        %850 = vmatpush1.msra.mxu0 0.0
        %851 = vmatprep.subr.mxu0 0.0
        %852 = vmatpush1.msra.mxu0 0.0
        %853 = vmatprep.subr.mxu0 0.0
        %854 = vmatpush1.msra.mxu0 0.0
        %855 = vmatprep.subr.mxu0 0.0
        %856 = vmatpush1.msra.mxu0 0.0
        %857 = vmatprep.subr.mxu0 0.0
        %858 = vmatpush1.msra.mxu0 0.0
        %859 = vmatprep.subr.mxu0 0.0
        %860 = vmatpush1.msra.mxu0 0.0
        %861 = vmatprep.subr.mxu0 0.0
        %862 = vmatpush1.msra.mxu0 0.0
        %863 = vmatprep.subr.mxu0 0.0
        %864 = vmatpush1.msra.mxu0 0.0
        %865 = vmatprep.subr.mxu0 0.0
        %866 = vmatpush1.msra.mxu0 0.0
        %867 = vmatprep.subr.mxu0 0.0
        %868 = vmatpush1.msra.mxu0 0.0
        %869 = vmatprep.subr.mxu0 0.0
        %870 = vmatpush1.msra.mxu0 0.0
        %871 = vmatprep.subr.mxu0 0.0
        %872 = vmatpush1.msra.mxu0 0.0
        %873 = vmatprep.subr.mxu0 0.0
        %874 = vmatpush1.msra.mxu0 0.0
        %875 = vmatprep.subr.mxu0 0.0
        %876 = vmatpush1.msra.mxu0 0.0
        %877 = vmatprep.subr.mxu0 0.0
        %878 = vmatpush1.msra.mxu0 0.0
        %879 = vmatprep.subr.mxu0 0.0
        %880 = vmatpush1.msra.mxu0 0.0
        %881 = vmatprep.subr.mxu0 0.0
        %882 = vmatpush1.msra.mxu0 0.0
        %883 = vmatprep.subr.mxu0 0.0
        %884 = vmatpush1.msra.mxu0 0.0
        %885 = vmatprep.subr.mxu0 0.0
        %886 = vmatpush1.msra.mxu0 0.0
        %887 = vmatprep.subr.mxu0 0.0
        %888 = vmatpush1.msra.mxu0 0.0
        %889 = vmatprep.subr.mxu0 0.0
        %890 = vmatpush1.msra.mxu0 0.0
        %891 = vmatprep.subr.mxu0 0.0
        %892 = vmatpush1.msra.mxu0 0.0
        %893 = vmatprep.subr.mxu0 0.0
        %894 = vmatpush1.msra.mxu0 0.0
        %895 = vmatprep.subr.mxu0 0.0
        %896 = vmatpush1.msra.mxu0 0.0
        %897 = vmatprep.subr.mxu0 0.0
        %898 = vmatpush1.msra.mxu0 0.0
        %899 = vmatprep.subr.mxu0 0.0
        %900 = vmatpush1.msra.mxu0 0.0
        %901 = vmatprep.subr.mxu0 0.0
        %902 = vmatpush1.msra.mxu0 0.0
        %903 = vmatprep.subr.mxu0 0.0
        %904 = vmatpush1.msra.mxu0 0.0
        %905 = vmatprep.subr.mxu0 0.0
        %906 = vmatpush1.msra.mxu0 0.0
        %907 = vmatprep.subr.mxu0 0.0
        %908 = vmatpush1.msra.mxu0 0.0
        %909 = vmatprep.mubr.f32.mxu0 0.0
        %910 = vmatmul.mubr.f32.gmra.mrb[0].mxu0 %v299
        %v911 = vpop.f32.mrb[0].mxu0
        %v912 = vadd.f32 0.0, %v911
        %v913 = vpop.f32.mrb[0].mxu0
        %914 = vmatprep.mubr.f32.mxu0 0.0
        %915 = vmatmul.mubr.f32.gmra.mrb[0].mxu0 %v302
        %v916 = vpop.f32.mrb[0].mxu0
        %v917 = vadd.f32 0.0, %v916
        %v918 = vpop.f32.mrb[0].mxu0
        %919 = vdwg.mxu0
        %vm920 = vcmask 130048
        %921 = vst.msk [vmem:[%s163] sm:$0xff] %vm920, %v373
        %922 = vst.msk [vmem:[%s163 + $0x8] sm:$0xff] %vm920, %v378
        %923 = vst.msk [vmem:[%s163 + $0x10] sm:$0xff] %vm920, %v450
        %924 = vst.msk [vmem:[%s163 + $0x18] sm:$0xff] %vm920, %v455
        %925 = vst.msk [vmem:[%s163 + $0x20] sm:$0xff] %vm920, %v527
        %926 = vst.msk [vmem:[%s163 + $0x28] sm:$0xff] %vm920, %v532
        %927 = vst.msk [vmem:[%s163 + $0x30] sm:$0xff] %vm920, %v604
        %928 = vst.msk [vmem:[%s163 + $0x38] sm:$0xff] %vm920, %v609
        %929 = vst.msk [vmem:[%s163 + $0x40] sm:$0xff] %vm920, %v681
        %930 = vst.msk [vmem:[%s163 + $0x48] sm:$0xff] %vm920, %v686
        %931 = vst.msk [vmem:[%s163 + $0x50] sm:$0xff] %vm920, %v758
        %932 = vst.msk [vmem:[%s163 + $0x58] sm:$0xff] %vm920, %v763
        %933 = vst.msk [vmem:[%s163 + $0x60] sm:$0xff] %vm920, %v835
        %934 = vst.msk [vmem:[%s163 + $0x68] sm:$0xff] %vm920, %v840
        %935 = vst.msk [vmem:[%s163 + $0x70] sm:$0xff] %vm920, %v912
        %936 = vst.msk [vmem:[%s163 + $0x78] sm:$0xff] %vm920, %v917
        %s937 = sand.u32 %s93, 1
        %s938 = scalar_lea.sflag [#allocation3], %s937
        %s939 = sand.u32 %s93, 1
        %s940 = smul.addr %s939, 128
        %s941 = scalar_lea.vmem [#allocation2], %s940
        // Predicated region
        $region33: #{ensemble_forward.8} parent=31 // pred_check
          %p942 = pneg %p103
        $region34: #{ensemble_forward.8} parent=31 // pred_check_branch
          %944 = sbr.rel (%p942) target = $region36
        $region35: #{ensemble_forward.8} parent=31 // pred_region
          %s946 = ssub.s32 2048, 2048
          %947 = vsyncadd %s938, %s946
          %s948 = smul.addr %s17, 16
          %s949 = smul.addr %s948, 128
          %s950 = scalar_lea.hbm %s3, %s949
          %s951 = sshll.u32 %s941, 4
          %s952 = int_to_ptr.vmem [resolvable:$true] %s951
          %957 = dma.vmem_to_hbm [thread:$0]  %s952, 2048, %s950, %s938, 128, 128, 8
        $region36: #{ensemble_forward.8} parent=31 // pred_fallthru
          _
      $region32: #{ensemble_forward.8} parent=5 // pred_fallthru
        _
      %p958 = scmp.le.s32.totalorder 2, %s12
      // Predicated region
      $region37: #{ensemble_forward.8} parent=5 // pred_check
        %p959 = pneg %p958
      $region38: #{ensemble_forward.8} parent=5 // pred_check_branch
        %961 = sbr.rel (%p959) target = $region40
      $region39: #{ensemble_forward.8} parent=5 // pred_region
        %s962 = ssub.s32 %s12, 2
        // Predicated region
        $region41: #{ensemble_forward.8} parent=39 // pred_check
          %p963 = pneg %p109
        $region42: #{ensemble_forward.8} parent=39 // pred_check_branch
          %965 = sbr.rel (%p963) target = $region44
        $region43: #{ensemble_forward.8} parent=39 // pred_region
          %s966 = sand.u32 %s94, 1
          %s967 = scalar_lea.sflag [#allocation3], %s966
          %s968 = sand.u32 %s94, 1
          %s969 = smul.addr %s968, 128
          %s970 = scalar_lea.vmem [#allocation2], %s969
          %971 = dma.done %s967, 2048
        $region44: #{ensemble_forward.8} parent=39 // pred_fallthru
          _
      $region40: #{ensemble_forward.8} parent=5 // pred_fallthru
        _
    $region6: #{ensemble_forward.8} parent=1 // loop_footer
      %s16 = sadd.s32 1, %s12
    $region7: #{ensemble_forward.8} parent=1 // loop_footer_branch
      %11 = sbr.rel target = $region3
    $region8: #{ensemble_forward.8} parent=1 // loop_exit
      _
    %972 = vsyncpa [#allocation3], 1
    %s973 = scalar_lea.sflag [#allocation3], 1
    %974 = vsyncpa %s973, 1

</llo_original>
